<compile_context>
chip_gen: v5e
topology: v5e:2x2
jax: 0.10.0
libtpu: 0.0.40
codegen_flags: <defaults>
</compile_context>

<pallas_src>
import math
import functools

import jax
import jax.numpy as jnp
from jax.experimental import pallas as pl
from jax.experimental.pallas import tpu as pltpu


_PAR1 = pltpu.CompilerParams(dimension_semantics=("parallel",))
_PAR1_BIG = pltpu.CompilerParams(dimension_semantics=("parallel",),
                                 vmem_limit_bytes=64 * 1024 * 1024)


# ----------------------------------------------------------------------------
# Generic linear (nn.Linear / kernel-size-1 Conv1d), bf16 matmul, f32 accum.
# ----------------------------------------------------------------------------

def _linear_kernel(x_ref, w_ref, b_ref, o_ref):
    acc = jnp.dot(x_ref[...].astype(jnp.bfloat16), w_ref[...],
                  preferred_element_type=jnp.float32)
    o_ref[...] = acc + b_ref[...]


def linear(x2d, w_bf16, b, *, tm_cap=512):
    """y = x2d @ w + b, tiled over M so it scales past VMEM at real sizes."""
    M, K = x2d.shape
    N = w_bf16.shape[1]
    tm = M if M <= tm_cap else tm_cap
    return pl.pallas_call(
        _linear_kernel,
        out_shape=jax.ShapeDtypeStruct((M, N), jnp.float32),
        grid=(pl.cdiv(M, tm),),
        in_specs=[pl.BlockSpec((tm, K), lambda i: (i, 0)),
                  pl.BlockSpec((K, N), lambda i: (0, 0)),
                  pl.BlockSpec((1, N), lambda i: (0, 0))],
        out_specs=pl.BlockSpec((tm, N), lambda i: (i, 0)),
        compiler_params=_PAR1_BIG,
    )(x2d, w_bf16, b.reshape(1, N))


# ----------------------------------------------------------------------------
# Fused multi-head-of-projections: one wide matmul, split in-register into
# n_out channel groups (Q/K/V or K/V).  Avoids XLA slice copies of the output.
# ----------------------------------------------------------------------------

def _split_proj_kernel(x_ref, w_ref, b_ref, *out_refs, C):
    acc = jnp.dot(x_ref[...].astype(jnp.bfloat16), w_ref[...],
                  preferred_element_type=jnp.float32) + b_ref[...]
    for i, o_ref in enumerate(out_refs):
        o_ref[...] = acc[:, i * C:(i + 1) * C]


def split_project(x2d, w_bf16, b, n_out, *, tm_cap=512):
    M, K = x2d.shape
    N = w_bf16.shape[1]
    C = N // n_out
    tm = M if M <= tm_cap else tm_cap
    outs = pl.pallas_call(
        functools.partial(_split_proj_kernel, C=C),
        out_shape=tuple(jax.ShapeDtypeStruct((M, C), jnp.float32)
                        for _ in range(n_out)),
        grid=(pl.cdiv(M, tm),),
        in_specs=[pl.BlockSpec((tm, K), lambda i: (i, 0)),
                  pl.BlockSpec((K, N), lambda i: (0, 0)),
                  pl.BlockSpec((1, N), lambda i: (0, 0))],
        out_specs=tuple(pl.BlockSpec((tm, C), lambda i: (i, 0))
                        for _ in range(n_out)),
        compiler_params=_PAR1_BIG,
    )(x2d, w_bf16, b.reshape(1, N))
    return outs


# ----------------------------------------------------------------------------
# Circular Conv1d(kernel=3, padding=1, padding_mode='circular'); padding and
# the optional positional-embedding add fused in-kernel.
# ----------------------------------------------------------------------------

def _conv3_body(x_ref, w_ref, b_ref, o_ref, pe):
    x = x_ref[0]                                            # (L, Cin) f32
    L = x.shape[0]
    xp = jnp.concatenate([x[L - 1:L, :], x, x[0:1, :]], axis=0)   # circular pad
    w = w_ref[...]                                          # (3, Cin, Cout) bf16
    acc = jnp.dot(xp[0:L, :].astype(jnp.bfloat16), w[0],
                  preferred_element_type=jnp.float32)
    acc = acc + jnp.dot(xp[1:L + 1, :].astype(jnp.bfloat16), w[1],
                        preferred_element_type=jnp.float32)
    acc = acc + jnp.dot(xp[2:L + 2, :].astype(jnp.bfloat16), w[2],
                        preferred_element_type=jnp.float32)
    acc = acc + b_ref[...]
    if pe is not None:
        acc = acc + pe
    o_ref[...] = acc[None]


def _conv3_kernel(x_ref, w_ref, b_ref, o_ref):
    _conv3_body(x_ref, w_ref, b_ref, o_ref, pe=None)


def _conv3_pe_kernel(x_ref, w_ref, b_ref, pe_ref, o_ref):
    _conv3_body(x_ref, w_ref, b_ref, o_ref, pe=pe_ref[0])


def circular_conv3(x, w_bf16, b, pe=None):
    B, L, Cin = x.shape
    Cout = w_bf16.shape[-1]
    b2d = b.reshape(1, Cout)
    in_specs = [pl.BlockSpec((1, L, Cin), lambda bi: (bi, 0, 0)),
                pl.BlockSpec((3, Cin, Cout), lambda bi: (0, 0, 0)),
                pl.BlockSpec((1, Cout), lambda bi: (0, 0))]
    inputs = (x, w_bf16, b2d)
    kernel = _conv3_kernel
    if pe is not None:
        in_specs = in_specs + [pl.BlockSpec((1, L, Cout), lambda bi: (0, 0, 0))]
        inputs = inputs + (pe,)
        kernel = _conv3_pe_kernel
    return pl.pallas_call(
        kernel,
        out_shape=jax.ShapeDtypeStruct((B, L, Cout), jnp.float32),
        grid=(B,),
        in_specs=in_specs,
        out_specs=pl.BlockSpec((1, L, Cout), lambda bi: (bi, 0, 0)),
        compiler_params=_PAR1,
    )(*inputs)


# ----------------------------------------------------------------------------
# Standalone series_decomp (used once, on the raw input).  The moving average
# is a single banded-matrix matmul (AvgPool1d, zero pad, count_include_pad).
# ----------------------------------------------------------------------------

def _decomp_kernel(x_ref, avg_ref, res_ref, mean_ref):
    x = x_ref[0]                                            # (L, C)
    mean = jnp.dot(avg_ref[...], x, preferred_element_type=jnp.float32)
    mean_ref[...] = mean[None]
    res_ref[...] = (x - mean)[None]


def series_decomp_input(x, consts):
    B, L, C = x.shape
    res, mean = pl.pallas_call(
        _decomp_kernel,
        out_shape=(jax.ShapeDtypeStruct((B, L, C), jnp.float32),
                   jax.ShapeDtypeStruct((B, L, C), jnp.float32)),
        grid=(B,),
        in_specs=[pl.BlockSpec((1, L, C), lambda bi: (bi, 0, 0)),
                  pl.BlockSpec((L, L), lambda bi: (0, 0))],
        out_specs=(pl.BlockSpec((1, L, C), lambda bi: (bi, 0, 0)),
                   pl.BlockSpec((1, L, C), lambda bi: (bi, 0, 0))),
        compiler_params=_PAR1,
    )(x, consts['avg'])
    return res, mean


# ----------------------------------------------------------------------------
# AutoCorrelation statistics: mean over channels of the per-channel circular
# correlation, via exact real-DFT matmuls.  Forward DFT acts on [q|k] (one
# wide bf16 matmul per trig matrix), channel mean taken on the spectrum, tiny
# f32 inverse matvecs.  Equivalent to mean_c irfft(rfft(q)*conj(rfft(k))).
# ----------------------------------------------------------------------------

def _corr_mean_kernel(q_ref, k_ref, cos_ref, sin_ref, o_ref):
    q = q_ref[0]                                            # (L, C) f32
    k = k_ref[0]
    L, C = q.shape
    cm = cos_ref[...]                                       # (L, L) f32, symmetric
    sm = sin_ref[...]
    qk = jnp.concatenate([q, k], axis=-1).astype(jnp.bfloat16)    # (L, 2C)
    fc = jnp.dot(cm.astype(jnp.bfloat16), qk, preferred_element_type=jnp.float32)
    fs = jnp.dot(sm.astype(jnp.bfloat16), qk, preferred_element_type=jnp.float32)
    qc, kc = fc[:, :C], fc[:, C:]
    qs, ks = fs[:, :C], fs[:, C:]
    pr_m = jnp.mean(qc * kc + qs * ks, axis=-1, keepdims=True)    # Re, (L, 1)
    pi_m = jnp.mean(qc * ks - qs * kc, axis=-1, keepdims=True)    # Im, (L, 1)
    corr = (jnp.dot(cm, pr_m, preferred_element_type=jnp.float32)
            - jnp.dot(sm, pi_m, preferred_element_type=jnp.float32)) * (1.0 / L)
    o_ref[...] = corr[None]                                 # (1, L, 1)


def correlation_mean(q, k, consts):
    B, L, C = q.shape
    out = pl.pallas_call(
        _corr_mean_kernel,
        out_shape=jax.ShapeDtypeStruct((B, L, 1), jnp.float32),
        grid=(B,),
        in_specs=[pl.BlockSpec((1, L, C), lambda bi: (bi, 0, 0)),
                  pl.BlockSpec((1, L, C), lambda bi: (bi, 0, 0)),
                  pl.BlockSpec((L, L), lambda bi: (0, 0)),
                  pl.BlockSpec((L, L), lambda bi: (0, 0))],
        out_specs=pl.BlockSpec((1, L, 1), lambda bi: (bi, 0, 0)),
        compiler_params=_PAR1,
    )(q, k, consts['cos'], consts['sin'])
    return out[:, :, 0]                                     # (B, L)


# ----------------------------------------------------------------------------
# Fused: circulant delay aggregation (A @ v) + output projection + residual
# add + series_decomp, all on the MXU, per batch.
# ----------------------------------------------------------------------------

def _agg_proj_decomp_kernel(a_ref, v_ref, x_ref, wo_ref, bo_ref, avg_ref,
                            res_ref, mean_ref):
    agg = jnp.dot(a_ref[0], v_ref[0].astype(jnp.bfloat16),
                  preferred_element_type=jnp.float32)               # (L, C)
    out = jnp.dot(agg.astype(jnp.bfloat16), wo_ref[...],
                  preferred_element_type=jnp.float32) + bo_ref[...]
    s = x_ref[0] + out                                              # residual
    mean = jnp.dot(avg_ref[...].astype(jnp.bfloat16), s.astype(jnp.bfloat16),
                   preferred_element_type=jnp.float32)              # moving avg
    mean_ref[...] = mean[None]
    res_ref[...] = (s - mean)[None]


def agg_proj_decomp(A_bf16, v, x_res, wo_bf16, bo, consts):
    B, L, C = v.shape
    res, mean = pl.pallas_call(
        _agg_proj_decomp_kernel,
        out_shape=(jax.ShapeDtypeStruct((B, L, C), jnp.float32),
                   jax.ShapeDtypeStruct((B, L, C), jnp.float32)),
        grid=(B,),
        in_specs=[pl.BlockSpec((1, L, L), lambda bi: (bi, 0, 0)),
                  pl.BlockSpec((1, L, C), lambda bi: (bi, 0, 0)),
                  pl.BlockSpec((1, L, C), lambda bi: (bi, 0, 0)),
                  pl.BlockSpec((C, C), lambda bi: (0, 0)),
                  pl.BlockSpec((1, C), lambda bi: (0, 0)),
                  pl.BlockSpec((L, L), lambda bi: (0, 0))],
        out_specs=(pl.BlockSpec((1, L, C), lambda bi: (bi, 0, 0)),
                   pl.BlockSpec((1, L, C), lambda bi: (bi, 0, 0))),
        compiler_params=_PAR1,
    )(A_bf16, v, x_res, wo_bf16, bo.reshape(1, C), consts['avg'])
    return res, mean


# ----------------------------------------------------------------------------
# Fused FFN: s = x + conv2(relu(conv1(x))) followed by series_decomp, per batch
# (d_ff intermediate never leaves VMEM; moving average on the MXU).
# ----------------------------------------------------------------------------

def _ffn_decomp_kernel(x_ref, w1_ref, b1_ref, w2_ref, b2_ref, avg_ref,
                       res_ref, mean_ref):
    x = x_ref[0]                                            # (L, C) f32
    h = jnp.dot(x.astype(jnp.bfloat16), w1_ref[...],
                preferred_element_type=jnp.float32) + b1_ref[...]
    h = jnp.maximum(h, 0.0)
    y = jnp.dot(h.astype(jnp.bfloat16), w2_ref[...],
                preferred_element_type=jnp.float32) + b2_ref[...]
    s = x + y
    mean = jnp.dot(avg_ref[...].astype(jnp.bfloat16), s.astype(jnp.bfloat16),
                   preferred_element_type=jnp.float32)
    mean_ref[...] = mean[None]
    res_ref[...] = (s - mean)[None]


def ffn_decomp(x, w1_bf16, b1, w2_bf16, b2, consts):
    B, L, C = x.shape
    F = w1_bf16.shape[1]
    res, mean = pl.pallas_call(
        _ffn_decomp_kernel,
        out_shape=(jax.ShapeDtypeStruct((B, L, C), jnp.float32),
                   jax.ShapeDtypeStruct((B, L, C), jnp.float32)),
        grid=(B,),
        in_specs=[pl.BlockSpec((1, L, C), lambda bi: (bi, 0, 0)),
                  pl.BlockSpec((C, F), lambda bi: (0, 0)),
                  pl.BlockSpec((1, F), lambda bi: (0, 0)),
                  pl.BlockSpec((F, C), lambda bi: (0, 0)),
                  pl.BlockSpec((1, C), lambda bi: (0, 0)),
                  pl.BlockSpec((L, L), lambda bi: (0, 0))],
        out_specs=(pl.BlockSpec((1, L, C), lambda bi: (bi, 0, 0)),
                   pl.BlockSpec((1, L, C), lambda bi: (bi, 0, 0))),
        compiler_params=_PAR1_BIG,
    )(x, w1_bf16, b1.reshape(1, F), w2_bf16, b2.reshape(1, C), consts['avg'])
    return res, mean


# ----------------------------------------------------------------------------
# Attention glue: data-dependent top-k delay selection + softmax + circulant
# delay-matrix construction stays in plain JAX (tiny, feeds the agg kernel).
# ----------------------------------------------------------------------------

# TODO(synk): data-dependent top-k / softmax / one-hot delay-matrix build has
#             no static-shape Pallas equivalent; it stays in JAX glue.
def _delay_agg_matrix(corr_mean, L, factor=1):
    top_k = max(1, int(factor * math.log(L)))
    _, idx = jax.lax.top_k(jnp.mean(corr_mean, axis=0), top_k)   # shared delays
    weights = jnp.take(corr_mean, idx, axis=1)                   # (B, top_k)
    tmp_corr = jax.nn.softmax(weights, axis=-1)
    t = jnp.arange(L, dtype=jnp.int32)
    src = jnp.mod(t[:, None] + idx[None, :], L)                  # (L, top_k)
    onehot = jax.nn.one_hot(src, L, dtype=jnp.float32)           # (L, top_k, L)
    A = jnp.einsum('bk,tkl->btl', tmp_corr, onehot)              # (B, L, L)
    return A.astype(jnp.bfloat16)


def attn_self_block(p, x, consts):
    B, L, C = x.shape
    q, k, v = split_project(x.reshape(B * L, C), p['wqkv'], p['bqkv'], 3)
    q = q.reshape(B, L, C)
    k = k.reshape(B, L, C)
    v = v.reshape(B, L, C)
    corr = correlation_mean(q, k, consts)
    A = _delay_agg_matrix(corr, L)
    return agg_proj_decomp(A, v, x, p['wo'], p['bo'], consts)


def attn_cross_block(p, x, cross, consts):
    B, L, C = x.shape
    S = cross.shape[1]
    q = linear(x.reshape(B * L, C), p['wq'], p['bq']).reshape(B, L, C)
    k, v = split_project(cross.reshape(B * S, C), p['wkv'], p['bkv'], 2)
    k = k.reshape(B, S, C)
    v = v.reshape(B, S, C)
    if L > S:
        pad = jnp.zeros((B, L - S, C), jnp.float32)
        k = jnp.concatenate([k, pad], axis=1)
        v = jnp.concatenate([v, pad], axis=1)
    elif L < S:
        k, v = k[:, :L], v[:, :L]
    corr = correlation_mean(q, k, consts)
    A = _delay_agg_matrix(corr, L)
    return agg_proj_decomp(A, v, x, p['wo'], p['bo'], consts)


# ----------------------------------------------------------------------------
# Embedding / layers / model
# ----------------------------------------------------------------------------

def positional_embedding(L, d_model):
    position = jnp.arange(L, dtype=jnp.float32)[:, None]
    div_term = jnp.exp(jnp.arange(0, d_model, 2, dtype=jnp.float32)
                       * (-math.log(10000.0) / d_model))
    pe = jnp.zeros((L, d_model), jnp.float32)
    pe = pe.at[:, 0::2].set(jnp.sin(position * div_term))
    pe = pe.at[:, 1::2].set(jnp.cos(position * div_term))
    return pe[None]                                          # (1, L, d_model)


def build_consts(L, d_model, moving_avg):
    assert moving_avg % 2 == 1, "moving_avg must be odd (matches AvgPool1d pad)"
    t = jnp.arange(L, dtype=jnp.float32)
    ang = (2.0 * math.pi / L) * (t[:, None] * t[None, :])
    # Banded averaging matrix == AvgPool1d(k, stride=1, zero pad, /k always).
    p = (moving_avg - 1) // 2
    ti = jnp.arange(L)
    band = (jnp.abs(ti[:, None] - ti[None, :]) <= p).astype(jnp.float32)
    return dict(cos=jnp.cos(ang), sin=jnp.sin(ang),
                avg=band * (1.0 / moving_avg),
                pe=positional_embedding(L, d_model))


def data_embedding(p, x, consts):
    # TokenEmbedding (circular conv3) + PositionalEmbedding, fused in-kernel.
    return circular_conv3(x, p['conv_w'], p['conv_b'],
                          pe=consts['pe'][:, :x.shape[1]])


def encoder_layer(p, x, consts):
    x, _ = attn_self_block(p['attn'], x, consts)             # +residual, decomp1
    res, _ = ffn_decomp(x, p['conv1_w'], p['conv1_b'],
                        p['conv2_w'], p['conv2_b'], consts)  # +residual, decomp2
    return res


def decoder_layer(p, x, cross, consts):
    x, trend1 = attn_self_block(p['self_attn'], x, consts)
    x, trend2 = attn_cross_block(p['cross_attn'], x, cross, consts)
    x, trend3 = ffn_decomp(x, p['conv1_w'], p['conv1_b'],
                           p['conv2_w'], p['conv2_b'], consts)
    residual_trend = trend1 + trend2 + trend3
    proj = circular_conv3(residual_trend, p['proj_w'], p['proj_b'])
    return x, proj


def autoformer_forward(params, consts, x, cfg):
    seasonal_init, _trend_init = series_decomp_input(x, consts)
    enc_out = data_embedding(params['enc_emb'], x, consts)
    for lp in params['enc_layers']:
        enc_out = encoder_layer(lp, enc_out, consts)
    dec_out = data_embedding(params['dec_emb'], seasonal_init, consts)
    trend = jnp.zeros_like(dec_out)
    for lp in params['dec_layers']:
        dec_out, residual_trend = decoder_layer(lp, dec_out, enc_out, consts)
        trend = trend + residual_trend      # reference requires c_out == d_model
    B, Ld, Dd = dec_out.shape
    out = linear((dec_out + trend).reshape(B * Ld, Dd),
                 params['proj_w'], params['proj_b']).reshape(B, Ld, -1)
    return out[:, -cfg['pred_len']:, :]


# ----------------------------------------------------------------------------
# Deterministic parameter initialization (matmul weights stored in bf16).
# ----------------------------------------------------------------------------

def init_params(key, cfg, L):
    d_model, d_ff = cfg['d_model'], cfg['d_ff']
    keys = iter(jax.random.split(key, 256))

    def w(shape, scale=0.1):
        return (scale * jax.random.normal(next(keys), shape,
                                          dtype=jnp.float32)).astype(jnp.bfloat16)

    def b(shape):
        return jnp.zeros(shape, jnp.float32)

    def self_attn():
        # Wq | Wk | Wv concatenated along the output dim (fused QKV matmul).
        return dict(wqkv=w((d_model, 3 * d_model)), bqkv=b((3 * d_model,)),
                    wo=w((d_model, d_model)), bo=b((d_model,)))

    def cross_attn():
        return dict(wq=w((d_model, d_model)), bq=b((d_model,)),
                    wkv=w((d_model, 2 * d_model)), bkv=b((2 * d_model,)),
                    wo=w((d_model, d_model)), bo=b((d_model,)))

    params = dict(
        enc_emb=dict(conv_w=w((3, cfg['enc_in'], d_model)), conv_b=b((d_model,))),
        dec_emb=dict(conv_w=w((3, cfg['dec_in'], d_model)), conv_b=b((d_model,))),
        enc_layers=[dict(attn=self_attn(),
                         conv1_w=w((d_model, d_ff)), conv1_b=b((d_ff,)),
                         conv2_w=w((d_ff, d_model)), conv2_b=b((d_model,)))
                    for _ in range(cfg['e_layers'])],
        dec_layers=[dict(self_attn=self_attn(), cross_attn=cross_attn(),
                         conv1_w=w((d_model, d_ff)), conv1_b=b((d_ff,)),
                         conv2_w=w((d_ff, d_model)), conv2_b=b((d_model,)),
                         proj_w=w((3, d_model, cfg['c_out'])),
                         proj_b=b((cfg['c_out'],)))
                    for _ in range(cfg['d_layers'])],
        proj_w=w((d_model, cfg['c_out'])), proj_b=b((cfg['c_out'],)),
    )
    return params


# ----------------------------------------------------------------------------
# Main
# ----------------------------------------------------------------------------

if __name__ == "__main__":
    # c_out == d_model is required by the reference (`trend += residual_trend`
    # with trend = zeros_like(dec_out) of width d_model).
    cfg = dict(enc_in=4, dec_in=4, d_model=32, n_heads=4, d_ff=64,
               e_layers=1, d_layers=1, moving_avg=5, c_out=32, pred_len=8)
    B, L = 2, 16

    root = jax.random.PRNGKey(0)
    pkey, xkey = jax.random.split(root)
    params = init_params(pkey, cfg, L)
    consts = build_consts(L, cfg['d_model'], cfg['moving_avg'])
    x = jax.random.normal(xkey, (B, L, cfg['enc_in']), dtype=jnp.float32)

    fwd = jax.jit(lambda p, c, xi: autoformer_forward(p, c, xi, cfg))
    out = fwd(params, consts, x)
    out = jax.block_until_ready(out)

    assert out.shape == (B, cfg['pred_len'], cfg['c_out']), out.shape
    assert bool(jnp.all(jnp.isfinite(out)))
    print("KERNEL_OK")
</pallas_src>

<mosaic_0001>
module attributes {stable_mosaic.version = 11 : i64} {
  func.func @_decomp_kernel(%arg0: i32, %arg1: memref<1x16x4xf32, #tpu.memory_space<vmem>>, %arg2: memref<16x16xf32, #tpu.memory_space<vmem>>, %arg3: memref<1x16x4xf32, #tpu.memory_space<vmem>>, %arg4: memref<1x16x4xf32, #tpu.memory_space<vmem>>) attributes {dimension_semantics = [#tpu.dimension_semantics<parallel>], iteration_bounds = array<i64: 2>, scalar_prefetch = 0 : i64, scratch_operands = 0 : i64, tpu.core_type = #tpu.core_type<tc>, window_params = [{transform_indices = @transform_0, window_bounds = array<i64: 1, 16, 4>}, {pipeline_mode = #tpu.pipeline_mode<synchronous>, transform_indices = @transform_1, window_bounds = array<i64: 16, 16>}, {transform_indices = @transform_2, window_bounds = array<i64: 1, 16, 4>}, {transform_indices = @transform_3, window_bounds = array<i64: 1, 16, 4>}]} {
    %c0 = arith.constant 0 : index
    %c0_0 = arith.constant 0 : index
    %c0_1 = arith.constant 0 : index
    %0 = vector.load %arg1[%c0, %c0_0, %c0_1] : memref<1x16x4xf32, #tpu.memory_space<vmem>>, vector<1x16x4xf32>
    %1 = vector.shape_cast %0 : vector<1x16x4xf32> to vector<16x4xf32>
    %c0_2 = arith.constant 0 : index
    %c0_3 = arith.constant 0 : index
    %2 = vector.load %arg2[%c0_2, %c0_3] : memref<16x16xf32, #tpu.memory_space<vmem>>, vector<16x16xf32>
    %cst = arith.constant dense<0.000000e+00> : vector<16x4xf32>
    %3 = tpu.matmul %2, %1, %cst {dimension_numbers = #tpu.dot_dimension_numbers<[1], [0], [0], [1], [0, 0, 1, 1], [], []>} : vector<16x16xf32>, vector<16x4xf32>, vector<16x4xf32> -> vector<16x4xf32>
    %4 = vector.shape_cast %3 : vector<16x4xf32> to vector<1x16x4xf32>
    %c0_4 = arith.constant 0 : index
    %c0_5 = arith.constant 0 : index
    %c0_6 = arith.constant 0 : index
    %5 = vector.load %arg4[%c0_4, %c0_5, %c0_6] : memref<1x16x4xf32, #tpu.memory_space<vmem>>, vector<1x16x4xf32>
    tpu.vector_store %arg4[%c0_4, %c0_5, %c0_6], %4 {strides = array<i32>} : memref<1x16x4xf32, #tpu.memory_space<vmem>>, vector<1x16x4xf32>,
    %6 = arith.subf %1, %3 : vector<16x4xf32>
    %7 = vector.shape_cast %6 : vector<16x4xf32> to vector<1x16x4xf32>
    %c0_7 = arith.constant 0 : index
    %c0_8 = arith.constant 0 : index
    %c0_9 = arith.constant 0 : index
    %8 = vector.load %arg3[%c0_7, %c0_8, %c0_9] : memref<1x16x4xf32, #tpu.memory_space<vmem>>, vector<1x16x4xf32>
    tpu.vector_store %arg3[%c0_7, %c0_8, %c0_9], %7 {strides = array<i32>} : memref<1x16x4xf32, #tpu.memory_space<vmem>>, vector<1x16x4xf32>,
    return
  }
  func.func @transform_0(%arg0: i32) -> (i32, i32, i32) {
    %c0_i32 = arith.constant 0 : i32
    %c0_i32_0 = arith.constant 0 : i32
    %c0_i32_1 = arith.constant 0 : i32
    return %arg0, %c0_i32, %c0_i32_0 : i32, i32, i32
  }
  func.func @transform_1(%arg0: i32) -> (i32, i32) {
    %c0_i32 = arith.constant 0 : i32
    %c0_i32_0 = arith.constant 0 : i32
    %c0_i32_1 = arith.constant 0 : i32
    return %c0_i32, %c0_i32_0 : i32, i32
  }
  func.func @transform_2(%arg0: i32) -> (i32, i32, i32) {
    %c0_i32 = arith.constant 0 : i32
    %c0_i32_0 = arith.constant 0 : i32
    %c0_i32_1 = arith.constant 0 : i32
    return %arg0, %c0_i32, %c0_i32_0 : i32, i32, i32
  }
  func.func @transform_3(%arg0: i32) -> (i32, i32, i32) {
    %c0_i32 = arith.constant 0 : i32
    %c0_i32_0 = arith.constant 0 : i32
    %c0_i32_1 = arith.constant 0 : i32
    return %arg0, %c0_i32, %c0_i32_0 : i32, i32, i32
  }
}

module attributes {stable_mosaic.version = 11 : i64} {
  func.func @_split_proj_kernel(%arg0: i32, %arg1: memref<32x32xf32, #tpu.memory_space<vmem>>, %arg2: memref<32x96xbf16, #tpu.memory_space<vmem>>, %arg3: memref<1x96xf32, #tpu.memory_space<vmem>>, %arg4: memref<32x32xf32, #tpu.memory_space<vmem>>, %arg5: memref<32x32xf32, #tpu.memory_space<vmem>>, %arg6: memref<32x32xf32, #tpu.memory_space<vmem>>) attributes {dimension_semantics = [#tpu.dimension_semantics<parallel>], iteration_bounds = array<i64: 1>, scalar_prefetch = 0 : i64, scratch_operands = 0 : i64, tpu.core_type = #tpu.core_type<tc>, window_params = [{transform_indices = @transform_0, window_bounds = array<i64: 32, 32>}, {pipeline_mode = #tpu.pipeline_mode<synchronous>, transform_indices = @transform_1, window_bounds = array<i64: 32, 96>}, {pipeline_mode = #tpu.pipeline_mode<synchronous>, transform_indices = @transform_2, window_bounds = array<i64: 1, 96>}, {transform_indices = @transform_3, window_bounds = array<i64: 32, 32>}, {transform_indices = @transform_4, window_bounds = array<i64: 32, 32>}, {transform_indices = @transform_5, window_bounds = array<i64: 32, 32>}]} {
    %c0 = arith.constant 0 : index
    %c0_0 = arith.constant 0 : index
    %0 = vector.load %arg1[%c0, %c0_0] : memref<32x32xf32, #tpu.memory_space<vmem>>, vector<32x32xf32>
    %1 = arith.truncf %0 : vector<32x32xf32> to vector<32x32xbf16>
    %c0_1 = arith.constant 0 : index
    %c0_2 = arith.constant 0 : index
    %2 = vector.load %arg2[%c0_1, %c0_2] : memref<32x96xbf16, #tpu.memory_space<vmem>>, vector<32x96xbf16>
    %cst = arith.constant dense<0.000000e+00> : vector<32x96xf32>
    %3 = tpu.matmul %1, %2, %cst {dimension_numbers = #tpu.dot_dimension_numbers<[1], [0], [0], [1], [0, 0, 1, 1], [], []>} : vector<32x32xbf16>, vector<32x96xbf16>, vector<32x96xf32> -> vector<32x96xf32>
    %c0_3 = arith.constant 0 : index
    %c0_4 = arith.constant 0 : index
    %4 = vector.load %arg3[%c0_3, %c0_4] : memref<1x96xf32, #tpu.memory_space<vmem>>, vector<1x96xf32>
    %5 = vector.broadcast %4 : vector<1x96xf32> to vector<32x96xf32>
    %6 = arith.addf %3, %5 : vector<32x96xf32>
    %7 = vector.extract_strided_slice %6 {offsets = [0, 0], sizes = [32, 32], strides = [1, 1]} : vector<32x96xf32> to vector<32x32xf32>
    %c0_5 = arith.constant 0 : index
    %c0_6 = arith.constant 0 : index
    %8 = vector.load %arg4[%c0_5, %c0_6] : memref<32x32xf32, #tpu.memory_space<vmem>>, vector<32x32xf32>
    tpu.vector_store %arg4[%c0_5, %c0_6], %7 {strides = array<i32>} : memref<32x32xf32, #tpu.memory_space<vmem>>, vector<32x32xf32>,
    %9 = vector.extract_strided_slice %6 {offsets = [0, 32], sizes = [32, 32], strides = [1, 1]} : vector<32x96xf32> to vector<32x32xf32>
    %c0_7 = arith.constant 0 : index
    %c0_8 = arith.constant 0 : index
    %10 = vector.load %arg5[%c0_7, %c0_8] : memref<32x32xf32, #tpu.memory_space<vmem>>, vector<32x32xf32>
    tpu.vector_store %arg5[%c0_7, %c0_8], %9 {strides = array<i32>} : memref<32x32xf32, #tpu.memory_space<vmem>>, vector<32x32xf32>,
    %11 = vector.extract_strided_slice %6 {offsets = [0, 64], sizes = [32, 32], strides = [1, 1]} : vector<32x96xf32> to vector<32x32xf32>
    %c0_9 = arith.constant 0 : index
    %c0_10 = arith.constant 0 : index
    %12 = vector.load %arg6[%c0_9, %c0_10] : memref<32x32xf32, #tpu.memory_space<vmem>>, vector<32x32xf32>
    tpu.vector_store %arg6[%c0_9, %c0_10], %11 {strides = array<i32>} : memref<32x32xf32, #tpu.memory_space<vmem>>, vector<32x32xf32>,
    return
  }
  func.func @transform_0(%arg0: i32) -> (i32, i32) {
    %c0_i32 = arith.constant 0 : i32
    %c0_i32_0 = arith.constant 0 : i32
    return %arg0, %c0_i32 : i32, i32
  }
  func.func @transform_1(%arg0: i32) -> (i32, i32) {
    %c0_i32 = arith.constant 0 : i32
    %c0_i32_0 = arith.constant 0 : i32
    %c0_i32_1 = arith.constant 0 : i32
    return %c0_i32, %c0_i32_0 : i32, i32
  }
  func.func @transform_2(%arg0: i32) -> (i32, i32) {
    %c0_i32 = arith.constant 0 : i32
    %c0_i32_0 = arith.constant 0 : i32
    %c0_i32_1 = arith.constant 0 : i32
    return %c0_i32, %c0_i32_0 : i32, i32
  }
  func.func @transform_3(%arg0: i32) -> (i32, i32) {
    %c0_i32 = arith.constant 0 : i32
    %c0_i32_0 = arith.constant 0 : i32
    return %arg0, %c0_i32 : i32, i32
  }
  func.func @transform_4(%arg0: i32) -> (i32, i32) {
    %c0_i32 = arith.constant 0 : i32
    %c0_i32_0 = arith.constant 0 : i32
    return %arg0, %c0_i32 : i32, i32
  }
  func.func @transform_5(%arg0: i32) -> (i32, i32) {
    %c0_i32 = arith.constant 0 : i32
    %c0_i32_0 = arith.constant 0 : i32
    return %arg0, %c0_i32 : i32, i32
  }
}

module attributes {stable_mosaic.version = 11 : i64} {
  func.func @_conv3_pe_kernel(%arg0: i32, %arg1: memref<1x16x4xf32, #tpu.memory_space<vmem>>, %arg2: memref<3x4x32xbf16, #tpu.memory_space<vmem>>, %arg3: memref<1x32xf32, #tpu.memory_space<vmem>>, %arg4: memref<1x16x32xf32, #tpu.memory_space<vmem>>, %arg5: memref<1x16x32xf32, #tpu.memory_space<vmem>>) attributes {dimension_semantics = [#tpu.dimension_semantics<parallel>], iteration_bounds = array<i64: 2>, scalar_prefetch = 0 : i64, scratch_operands = 0 : i64, tpu.core_type = #tpu.core_type<tc>, window_params = [{transform_indices = @transform_0, window_bounds = array<i64: 1, 16, 4>}, {pipeline_mode = #tpu.pipeline_mode<synchronous>, transform_indices = @transform_1, window_bounds = array<i64: 3, 4, 32>}, {pipeline_mode = #tpu.pipeline_mode<synchronous>, transform_indices = @transform_2, window_bounds = array<i64: 1, 32>}, {pipeline_mode = #tpu.pipeline_mode<synchronous>, transform_indices = @transform_3, window_bounds = array<i64: 1, 16, 32>}, {transform_indices = @transform_4, window_bounds = array<i64: 1, 16, 32>}]} {
    %c0 = arith.constant 0 : index
    %c0_0 = arith.constant 0 : index
    %c0_1 = arith.constant 0 : index
    %0 = vector.load %arg4[%c0, %c0_0, %c0_1] : memref<1x16x32xf32, #tpu.memory_space<vmem>>, vector<1x16x32xf32>
    %1 = vector.shape_cast %0 : vector<1x16x32xf32> to vector<16x32xf32>
    %c0_2 = arith.constant 0 : index
    %c0_3 = arith.constant 0 : index
    %c0_4 = arith.constant 0 : index
    %2 = vector.load %arg1[%c0_2, %c0_3, %c0_4] : memref<1x16x4xf32, #tpu.memory_space<vmem>>, vector<1x16x4xf32>
    %3 = vector.shape_cast %2 : vector<1x16x4xf32> to vector<16x4xf32>
    %4 = vector.extract_strided_slice %3 {offsets = [15, 0], sizes = [1, 4], strides = [1, 1]} : vector<16x4xf32> to vector<1x4xf32>
    %5 = vector.extract_strided_slice %3 {offsets = [0, 0], sizes = [1, 4], strides = [1, 1]} : vector<16x4xf32> to vector<1x4xf32>
    %6 = tpu.concatenate %4, %3, %5 in 0 : vector<1x4xf32>, vector<16x4xf32>, vector<1x4xf32> -> vector<18x4xf32>
    %c0_5 = arith.constant 0 : index
    %c0_6 = arith.constant 0 : index
    %c0_7 = arith.constant 0 : index
    %7 = vector.load %arg2[%c0_5, %c0_6, %c0_7] : memref<3x4x32xbf16, #tpu.memory_space<vmem>>, vector<3x4x32xbf16>
    %8 = vector.extract_strided_slice %6 {offsets = [0, 0], sizes = [16, 4], strides = [1, 1]} : vector<18x4xf32> to vector<16x4xf32>
    %9 = arith.truncf %8 : vector<16x4xf32> to vector<16x4xbf16>
    %10 = vector.extract_strided_slice %7 {offsets = [0, 0, 0], sizes = [1, 4, 32], strides = [1, 1, 1]} : vector<3x4x32xbf16> to vector<1x4x32xbf16>
    %11 = vector.shape_cast %10 : vector<1x4x32xbf16> to vector<4x32xbf16>
    %cst = arith.constant dense<0.000000e+00> : vector<16x32xf32>
    %12 = tpu.matmul %9, %11, %cst {dimension_numbers = #tpu.dot_dimension_numbers<[1], [0], [0], [1], [0, 0, 1, 1], [], []>} : vector<16x4xbf16>, vector<4x32xbf16>, vector<16x32xf32> -> vector<16x32xf32>
    %13 = vector.extract_strided_slice %6 {offsets = [1, 0], sizes = [16, 4], strides = [1, 1]} : vector<18x4xf32> to vector<16x4xf32>
    %14 = arith.truncf %13 : vector<16x4xf32> to vector<16x4xbf16>
    %15 = vector.extract_strided_slice %7 {offsets = [1, 0, 0], sizes = [1, 4, 32], strides = [1, 1, 1]} : vector<3x4x32xbf16> to vector<1x4x32xbf16>
    %16 = vector.shape_cast %15 : vector<1x4x32xbf16> to vector<4x32xbf16>
    %cst_8 = arith.constant dense<0.000000e+00> : vector<16x32xf32>
    %17 = tpu.matmul %14, %16, %cst_8 {dimension_numbers = #tpu.dot_dimension_numbers<[1], [0], [0], [1], [0, 0, 1, 1], [], []>} : vector<16x4xbf16>, vector<4x32xbf16>, vector<16x32xf32> -> vector<16x32xf32>
    %18 = arith.addf %12, %17 : vector<16x32xf32>
    %19 = vector.extract_strided_slice %6 {offsets = [2, 0], sizes = [16, 4], strides = [1, 1]} : vector<18x4xf32> to vector<16x4xf32>
    %20 = arith.truncf %19 : vector<16x4xf32> to vector<16x4xbf16>
    %21 = vector.extract_strided_slice %7 {offsets = [2, 0, 0], sizes = [1, 4, 32], strides = [1, 1, 1]} : vector<3x4x32xbf16> to vector<1x4x32xbf16>
    %22 = vector.shape_cast %21 : vector<1x4x32xbf16> to vector<4x32xbf16>
    %cst_9 = arith.constant dense<0.000000e+00> : vector<16x32xf32>
    %23 = tpu.matmul %20, %22, %cst_9 {dimension_numbers = #tpu.dot_dimension_numbers<[1], [0], [0], [1], [0, 0, 1, 1], [], []>} : vector<16x4xbf16>, vector<4x32xbf16>, vector<16x32xf32> -> vector<16x32xf32>
    %24 = arith.addf %18, %23 : vector<16x32xf32>
    %c0_10 = arith.constant 0 : index
    %c0_11 = arith.constant 0 : index
    %25 = vector.load %arg3[%c0_10, %c0_11] : memref<1x32xf32, #tpu.memory_space<vmem>>, vector<1x32xf32>
    %26 = vector.broadcast %25 : vector<1x32xf32> to vector<16x32xf32>
    %27 = arith.addf %24, %26 : vector<16x32xf32>
    %28 = arith.addf %27, %1 : vector<16x32xf32>
    %29 = vector.shape_cast %28 : vector<16x32xf32> to vector<1x16x32xf32>
    %c0_12 = arith.constant 0 : index
    %c0_13 = arith.constant 0 : index
    %c0_14 = arith.constant 0 : index
    %30 = vector.load %arg5[%c0_12, %c0_13, %c0_14] : memref<1x16x32xf32, #tpu.memory_space<vmem>>, vector<1x16x32xf32>
    tpu.vector_store %arg5[%c0_12, %c0_13, %c0_14], %29 {strides = array<i32>} : memref<1x16x32xf32, #tpu.memory_space<vmem>>, vector<1x16x32xf32>,
    return
  }
  func.func @transform_0(%arg0: i32) -> (i32, i32, i32) {
    %c0_i32 = arith.constant 0 : i32
    %c0_i32_0 = arith.constant 0 : i32
    %c0_i32_1 = arith.constant 0 : i32
    return %arg0, %c0_i32, %c0_i32_0 : i32, i32, i32
  }
  func.func @transform_1(%arg0: i32) -> (i32, i32, i32) {
    %c0_i32 = arith.constant 0 : i32
    %c0_i32_0 = arith.constant 0 : i32
    %c0_i32_1 = arith.constant 0 : i32
    %c0_i32_2 = arith.constant 0 : i32
    return %c0_i32, %c0_i32_0, %c0_i32_1 : i32, i32, i32
  }
  func.func @transform_2(%arg0: i32) -> (i32, i32) {
    %c0_i32 = arith.constant 0 : i32
    %c0_i32_0 = arith.constant 0 : i32
    %c0_i32_1 = arith.constant 0 : i32
    return %c0_i32, %c0_i32_0 : i32, i32
  }
  func.func @transform_3(%arg0: i32) -> (i32, i32, i32) {
    %c0_i32 = arith.constant 0 : i32
    %c0_i32_0 = arith.constant 0 : i32
    %c0_i32_1 = arith.constant 0 : i32
    %c0_i32_2 = arith.constant 0 : i32
    return %c0_i32, %c0_i32_0, %c0_i32_1 : i32, i32, i32
  }
  func.func @transform_4(%arg0: i32) -> (i32, i32, i32) {
    %c0_i32 = arith.constant 0 : i32
    %c0_i32_0 = arith.constant 0 : i32
    %c0_i32_1 = arith.constant 0 : i32
    return %arg0, %c0_i32, %c0_i32_0 : i32, i32, i32
  }
}

module attributes {stable_mosaic.version = 11 : i64} {
  func.func @_corr_mean_kernel(%arg0: i32, %arg1: memref<1x16x32xf32, #tpu.memory_space<vmem>>, %arg2: memref<1x16x32xf32, #tpu.memory_space<vmem>>, %arg3: memref<16x16xf32, #tpu.memory_space<vmem>>, %arg4: memref<16x16xf32, #tpu.memory_space<vmem>>, %arg5: memref<1x16x1xf32, #tpu.memory_space<vmem>>) attributes {dimension_semantics = [#tpu.dimension_semantics<parallel>], iteration_bounds = array<i64: 2>, scalar_prefetch = 0 : i64, scratch_operands = 0 : i64, tpu.core_type = #tpu.core_type<tc>, window_params = [{transform_indices = @transform_0, window_bounds = array<i64: 1, 16, 32>}, {transform_indices = @transform_1, window_bounds = array<i64: 1, 16, 32>}, {pipeline_mode = #tpu.pipeline_mode<synchronous>, transform_indices = @transform_2, window_bounds = array<i64: 16, 16>}, {pipeline_mode = #tpu.pipeline_mode<synchronous>, transform_indices = @transform_3, window_bounds = array<i64: 16, 16>}, {transform_indices = @transform_4, window_bounds = array<i64: 1, 16, 1>}]} {
    %c0 = arith.constant 0 : index
    %c0_0 = arith.constant 0 : index
    %c0_1 = arith.constant 0 : index
    %0 = vector.load %arg1[%c0, %c0_0, %c0_1] : memref<1x16x32xf32, #tpu.memory_space<vmem>>, vector<1x16x32xf32>
    %1 = vector.shape_cast %0 : vector<1x16x32xf32> to vector<16x32xf32>
    %c0_2 = arith.constant 0 : index
    %c0_3 = arith.constant 0 : index
    %c0_4 = arith.constant 0 : index
    %2 = vector.load %arg2[%c0_2, %c0_3, %c0_4] : memref<1x16x32xf32, #tpu.memory_space<vmem>>, vector<1x16x32xf32>
    %3 = vector.shape_cast %2 : vector<1x16x32xf32> to vector<16x32xf32>
    %c0_5 = arith.constant 0 : index
    %c0_6 = arith.constant 0 : index
    %4 = vector.load %arg3[%c0_5, %c0_6] : memref<16x16xf32, #tpu.memory_space<vmem>>, vector<16x16xf32>
    %c0_7 = arith.constant 0 : index
    %c0_8 = arith.constant 0 : index
    %5 = vector.load %arg4[%c0_7, %c0_8] : memref<16x16xf32, #tpu.memory_space<vmem>>, vector<16x16xf32>
    %6 = tpu.concatenate %1, %3 in 1 : vector<16x32xf32>, vector<16x32xf32> -> vector<16x64xf32>
    %7 = arith.truncf %6 : vector<16x64xf32> to vector<16x64xbf16>
    %8 = arith.truncf %4 : vector<16x16xf32> to vector<16x16xbf16>
    %cst = arith.constant dense<0.000000e+00> : vector<16x64xf32>
    %9 = tpu.matmul %8, %7, %cst {dimension_numbers = #tpu.dot_dimension_numbers<[1], [0], [0], [1], [0, 0, 1, 1], [], []>} : vector<16x16xbf16>, vector<16x64xbf16>, vector<16x64xf32> -> vector<16x64xf32>
    %10 = arith.truncf %5 : vector<16x16xf32> to vector<16x16xbf16>
    %cst_9 = arith.constant dense<0.000000e+00> : vector<16x64xf32>
    %11 = tpu.matmul %10, %7, %cst_9 {dimension_numbers = #tpu.dot_dimension_numbers<[1], [0], [0], [1], [0, 0, 1, 1], [], []>} : vector<16x16xbf16>, vector<16x64xbf16>, vector<16x64xf32> -> vector<16x64xf32>
    %12 = vector.extract_strided_slice %9 {offsets = [0, 0], sizes = [16, 32], strides = [1, 1]} : vector<16x64xf32> to vector<16x32xf32>
    %13 = vector.extract_strided_slice %9 {offsets = [0, 32], sizes = [16, 32], strides = [1, 1]} : vector<16x64xf32> to vector<16x32xf32>
    %14 = vector.extract_strided_slice %11 {offsets = [0, 0], sizes = [16, 32], strides = [1, 1]} : vector<16x64xf32> to vector<16x32xf32>
    %15 = vector.extract_strided_slice %11 {offsets = [0, 32], sizes = [16, 32], strides = [1, 1]} : vector<16x64xf32> to vector<16x32xf32>
    %16 = arith.mulf %12, %13 : vector<16x32xf32>
    %17 = arith.mulf %14, %15 : vector<16x32xf32>
    %18 = arith.addf %16, %17 : vector<16x32xf32>
    %cst_10 = arith.constant dense<0.000000e+00> : vector<16xf32>
    %19 = vector.multi_reduction <add>, %18, %cst_10 [1] : vector<16x32xf32> to vector<16xf32>
    %20 = vector.shape_cast %19 : vector<16xf32> to vector<16x1xf32>
    %cst_11 = arith.constant 3.200000e+01 : f32
    %21 = vector.broadcast %cst_11 : f32 to vector<16x1xf32>
    %22 = arith.divf %20, %21 : vector<16x1xf32>
    %23 = arith.mulf %12, %15 : vector<16x32xf32>
    %24 = arith.mulf %14, %13 : vector<16x32xf32>
    %25 = arith.subf %23, %24 : vector<16x32xf32>
    %cst_12 = arith.constant dense<0.000000e+00> : vector<16xf32>
    %26 = vector.multi_reduction <add>, %25, %cst_12 [1] : vector<16x32xf32> to vector<16xf32>
    %27 = vector.shape_cast %26 : vector<16xf32> to vector<16x1xf32>
    %cst_13 = arith.constant 3.200000e+01 : f32
    %28 = vector.broadcast %cst_13 : f32 to vector<16x1xf32>
    %29 = arith.divf %27, %28 : vector<16x1xf32>
    %cst_14 = arith.constant dense<0.000000e+00> : vector<16x1xf32>
    %30 = tpu.matmul %4, %22, %cst_14 {dimension_numbers = #tpu.dot_dimension_numbers<[1], [0], [0], [1], [0, 0, 1, 1], [], []>} : vector<16x16xf32>, vector<16x1xf32>, vector<16x1xf32> -> vector<16x1xf32>
    %cst_15 = arith.constant dense<0.000000e+00> : vector<16x1xf32>
    %31 = tpu.matmul %5, %29, %cst_15 {dimension_numbers = #tpu.dot_dimension_numbers<[1], [0], [0], [1], [0, 0, 1, 1], [], []>} : vector<16x16xf32>, vector<16x1xf32>, vector<16x1xf32> -> vector<16x1xf32>
    %32 = arith.subf %30, %31 : vector<16x1xf32>
    %cst_16 = arith.constant 6.250000e-02 : f32
    %33 = vector.broadcast %cst_16 : f32 to vector<16x1xf32>
    %34 = arith.mulf %32, %33 : vector<16x1xf32>
    %35 = vector.shape_cast %34 : vector<16x1xf32> to vector<1x16x1xf32>
    %c0_17 = arith.constant 0 : index
    %c0_18 = arith.constant 0 : index
    %c0_19 = arith.constant 0 : index
    %36 = vector.load %arg5[%c0_17, %c0_18, %c0_19] : memref<1x16x1xf32, #tpu.memory_space<vmem>>, vector<1x16x1xf32>
    tpu.vector_store %arg5[%c0_17, %c0_18, %c0_19], %35 {strides = array<i32>} : memref<1x16x1xf32, #tpu.memory_space<vmem>>, vector<1x16x1xf32>,
    return
  }
  func.func @transform_0(%arg0: i32) -> (i32, i32, i32) {
    %c0_i32 = arith.constant 0 : i32
    %c0_i32_0 = arith.constant 0 : i32
    %c0_i32_1 = arith.constant 0 : i32
    return %arg0, %c0_i32, %c0_i32_0 : i32, i32, i32
  }
  func.func @transform_1(%arg0: i32) -> (i32, i32, i32) {
    %c0_i32 = arith.constant 0 : i32
    %c0_i32_0 = arith.constant 0 : i32
    %c0_i32_1 = arith.constant 0 : i32
    return %arg0, %c0_i32, %c0_i32_0 : i32, i32, i32
  }
  func.func @transform_2(%arg0: i32) -> (i32, i32) {
    %c0_i32 = arith.constant 0 : i32
    %c0_i32_0 = arith.constant 0 : i32
    %c0_i32_1 = arith.constant 0 : i32
    return %c0_i32, %c0_i32_0 : i32, i32
  }
  func.func @transform_3(%arg0: i32) -> (i32, i32) {
    %c0_i32 = arith.constant 0 : i32
    %c0_i32_0 = arith.constant 0 : i32
    %c0_i32_1 = arith.constant 0 : i32
    return %c0_i32, %c0_i32_0 : i32, i32
  }
  func.func @transform_4(%arg0: i32) -> (i32, i32, i32) {
    %c0_i32 = arith.constant 0 : i32
    %c0_i32_0 = arith.constant 0 : i32
    %c0_i32_1 = arith.constant 0 : i32
    return %arg0, %c0_i32, %c0_i32_0 : i32, i32, i32
  }
}

module attributes {stable_mosaic.version = 11 : i64} {
  func.func @_agg_proj_decomp_kernel(%arg0: i32, %arg1: memref<1x16x16xbf16, #tpu.memory_space<vmem>>, %arg2: memref<1x16x32xf32, #tpu.memory_space<vmem>>, %arg3: memref<1x16x32xf32, #tpu.memory_space<vmem>>, %arg4: memref<32x32xbf16, #tpu.memory_space<vmem>>, %arg5: memref<1x32xf32, #tpu.memory_space<vmem>>, %arg6: memref<16x16xf32, #tpu.memory_space<vmem>>, %arg7: memref<1x16x32xf32, #tpu.memory_space<vmem>>, %arg8: memref<1x16x32xf32, #tpu.memory_space<vmem>>) attributes {dimension_semantics = [#tpu.dimension_semantics<parallel>], iteration_bounds = array<i64: 2>, scalar_prefetch = 0 : i64, scratch_operands = 0 : i64, tpu.core_type = #tpu.core_type<tc>, window_params = [{transform_indices = @transform_0, window_bounds = array<i64: 1, 16, 16>}, {transform_indices = @transform_1, window_bounds = array<i64: 1, 16, 32>}, {transform_indices = @transform_2, window_bounds = array<i64: 1, 16, 32>}, {pipeline_mode = #tpu.pipeline_mode<synchronous>, transform_indices = @transform_3, window_bounds = array<i64: 32, 32>}, {pipeline_mode = #tpu.pipeline_mode<synchronous>, transform_indices = @transform_4, window_bounds = array<i64: 1, 32>}, {pipeline_mode = #tpu.pipeline_mode<synchronous>, transform_indices = @transform_5, window_bounds = array<i64: 16, 16>}, {transform_indices = @transform_6, window_bounds = array<i64: 1, 16, 32>}, {transform_indices = @transform_7, window_bounds = array<i64: 1, 16, 32>}]} {
    %c0 = arith.constant 0 : index
    %c0_0 = arith.constant 0 : index
    %c0_1 = arith.constant 0 : index
    %0 = vector.load %arg1[%c0, %c0_0, %c0_1] : memref<1x16x16xbf16, #tpu.memory_space<vmem>>, vector<1x16x16xbf16>
    %1 = vector.shape_cast %0 : vector<1x16x16xbf16> to vector<16x16xbf16>
    %c0_2 = arith.constant 0 : index
    %c0_3 = arith.constant 0 : index
    %c0_4 = arith.constant 0 : index
    %2 = vector.load %arg2[%c0_2, %c0_3, %c0_4] : memref<1x16x32xf32, #tpu.memory_space<vmem>>, vector<1x16x32xf32>
    %3 = vector.shape_cast %2 : vector<1x16x32xf32> to vector<16x32xf32>
    %4 = arith.truncf %3 : vector<16x32xf32> to vector<16x32xbf16>
    %cst = arith.constant dense<0.000000e+00> : vector<16x32xf32>
    %5 = tpu.matmul %1, %4, %cst {dimension_numbers = #tpu.dot_dimension_numbers<[1], [0], [0], [1], [0, 0, 1, 1], [], []>} : vector<16x16xbf16>, vector<16x32xbf16>, vector<16x32xf32> -> vector<16x32xf32>
    %6 = arith.truncf %5 : vector<16x32xf32> to vector<16x32xbf16>
    %c0_5 = arith.constant 0 : index
    %c0_6 = arith.constant 0 : index
    %7 = vector.load %arg4[%c0_5, %c0_6] : memref<32x32xbf16, #tpu.memory_space<vmem>>, vector<32x32xbf16>
    %cst_7 = arith.constant dense<0.000000e+00> : vector<16x32xf32>
    %8 = tpu.matmul %6, %7, %cst_7 {dimension_numbers = #tpu.dot_dimension_numbers<[1], [0], [0], [1], [0, 0, 1, 1], [], []>} : vector<16x32xbf16>, vector<32x32xbf16>, vector<16x32xf32> -> vector<16x32xf32>
    %c0_8 = arith.constant 0 : index
    %c0_9 = arith.constant 0 : index
    %9 = vector.load %arg5[%c0_8, %c0_9] : memref<1x32xf32, #tpu.memory_space<vmem>>, vector<1x32xf32>
    %10 = vector.broadcast %9 : vector<1x32xf32> to vector<16x32xf32>
    %11 = arith.addf %8, %10 : vector<16x32xf32>
    %c0_10 = arith.constant 0 : index
    %c0_11 = arith.constant 0 : index
    %c0_12 = arith.constant 0 : index
    %12 = vector.load %arg3[%c0_10, %c0_11, %c0_12] : memref<1x16x32xf32, #tpu.memory_space<vmem>>, vector<1x16x32xf32>
    %13 = vector.shape_cast %12 : vector<1x16x32xf32> to vector<16x32xf32>
    %14 = arith.addf %13, %11 : vector<16x32xf32>
    %c0_13 = arith.constant 0 : index
    %c0_14 = arith.constant 0 : index
    %15 = vector.load %arg6[%c0_13, %c0_14] : memref<16x16xf32, #tpu.memory_space<vmem>>, vector<16x16xf32>
    %16 = arith.truncf %15 : vector<16x16xf32> to vector<16x16xbf16>
    %17 = arith.truncf %14 : vector<16x32xf32> to vector<16x32xbf16>
    %cst_15 = arith.constant dense<0.000000e+00> : vector<16x32xf32>
    %18 = tpu.matmul %16, %17, %cst_15 {dimension_numbers = #tpu.dot_dimension_numbers<[1], [0], [0], [1], [0, 0, 1, 1], [], []>} : vector<16x16xbf16>, vector<16x32xbf16>, vector<16x32xf32> -> vector<16x32xf32>
    %19 = vector.shape_cast %18 : vector<16x32xf32> to vector<1x16x32xf32>
    %c0_16 = arith.constant 0 : index
    %c0_17 = arith.constant 0 : index
    %c0_18 = arith.constant 0 : index
    %20 = vector.load %arg8[%c0_16, %c0_17, %c0_18] : memref<1x16x32xf32, #tpu.memory_space<vmem>>, vector<1x16x32xf32>
    tpu.vector_store %arg8[%c0_16, %c0_17, %c0_18], %19 {strides = array<i32>} : memref<1x16x32xf32, #tpu.memory_space<vmem>>, vector<1x16x32xf32>,
    %21 = arith.subf %14, %18 : vector<16x32xf32>
    %22 = vector.shape_cast %21 : vector<16x32xf32> to vector<1x16x32xf32>
    %c0_19 = arith.constant 0 : index
    %c0_20 = arith.constant 0 : index
    %c0_21 = arith.constant 0 : index
    %23 = vector.load %arg7[%c0_19, %c0_20, %c0_21] : memref<1x16x32xf32, #tpu.memory_space<vmem>>, vector<1x16x32xf32>
    tpu.vector_store %arg7[%c0_19, %c0_20, %c0_21], %22 {strides = array<i32>} : memref<1x16x32xf32, #tpu.memory_space<vmem>>, vector<1x16x32xf32>,
    return
  }
  func.func @transform_0(%arg0: i32) -> (i32, i32, i32) {
    %c0_i32 = arith.constant 0 : i32
    %c0_i32_0 = arith.constant 0 : i32
    %c0_i32_1 = arith.constant 0 : i32
    return %arg0, %c0_i32, %c0_i32_0 : i32, i32, i32
  }
  func.func @transform_1(%arg0: i32) -> (i32, i32, i32) {
    %c0_i32 = arith.constant 0 : i32
    %c0_i32_0 = arith.constant 0 : i32
    %c0_i32_1 = arith.constant 0 : i32
    return %arg0, %c0_i32, %c0_i32_0 : i32, i32, i32
  }
  func.func @transform_2(%arg0: i32) -> (i32, i32, i32) {
    %c0_i32 = arith.constant 0 : i32
    %c0_i32_0 = arith.constant 0 : i32
    %c0_i32_1 = arith.constant 0 : i32
    return %arg0, %c0_i32, %c0_i32_0 : i32, i32, i32
  }
  func.func @transform_3(%arg0: i32) -> (i32, i32) {
    %c0_i32 = arith.constant 0 : i32
    %c0_i32_0 = arith.constant 0 : i32
    %c0_i32_1 = arith.constant 0 : i32
    return %c0_i32, %c0_i32_0 : i32, i32
  }
  func.func @transform_4(%arg0: i32) -> (i32, i32) {
    %c0_i32 = arith.constant 0 : i32
    %c0_i32_0 = arith.constant 0 : i32
    %c0_i32_1 = arith.constant 0 : i32
    return %c0_i32, %c0_i32_0 : i32, i32
  }
  func.func @transform_5(%arg0: i32) -> (i32, i32) {
    %c0_i32 = arith.constant 0 : i32
    %c0_i32_0 = arith.constant 0 : i32
    %c0_i32_1 = arith.constant 0 : i32
    return %c0_i32, %c0_i32_0 : i32, i32
  }
  func.func @transform_6(%arg0: i32) -> (i32, i32, i32) {
    %c0_i32 = arith.constant 0 : i32
    %c0_i32_0 = arith.constant 0 : i32
    %c0_i32_1 = arith.constant 0 : i32
    return %arg0, %c0_i32, %c0_i32_0 : i32, i32, i32
  }
  func.func @transform_7(%arg0: i32) -> (i32, i32, i32) {
    %c0_i32 = arith.constant 0 : i32
    %c0_i32_0 = arith.constant 0 : i32
    %c0_i32_1 = arith.constant 0 : i32
    return %arg0, %c0_i32, %c0_i32_0 : i32, i32, i32
  }
}

module attributes {stable_mosaic.version = 11 : i64} {
  func.func @_linear_kernel(%arg0: i32, %arg1: memref<32x32xf32, #tpu.memory_space<vmem>>, %arg2: memref<32x32xbf16, #tpu.memory_space<vmem>>, %arg3: memref<1x32xf32, #tpu.memory_space<vmem>>, %arg4: memref<32x32xf32, #tpu.memory_space<vmem>>) attributes {dimension_semantics = [#tpu.dimension_semantics<parallel>], iteration_bounds = array<i64: 1>, scalar_prefetch = 0 : i64, scratch_operands = 0 : i64, tpu.core_type = #tpu.core_type<tc>, window_params = [{transform_indices = @transform_0, window_bounds = array<i64: 32, 32>}, {pipeline_mode = #tpu.pipeline_mode<synchronous>, transform_indices = @transform_1, window_bounds = array<i64: 32, 32>}, {pipeline_mode = #tpu.pipeline_mode<synchronous>, transform_indices = @transform_2, window_bounds = array<i64: 1, 32>}, {transform_indices = @transform_3, window_bounds = array<i64: 32, 32>}]} {
    %c0 = arith.constant 0 : index
    %c0_0 = arith.constant 0 : index
    %0 = vector.load %arg1[%c0, %c0_0] : memref<32x32xf32, #tpu.memory_space<vmem>>, vector<32x32xf32>
    %1 = arith.truncf %0 : vector<32x32xf32> to vector<32x32xbf16>
    %c0_1 = arith.constant 0 : index
    %c0_2 = arith.constant 0 : index
    %2 = vector.load %arg2[%c0_1, %c0_2] : memref<32x32xbf16, #tpu.memory_space<vmem>>, vector<32x32xbf16>
    %cst = arith.constant dense<0.000000e+00> : vector<32x32xf32>
    %3 = tpu.matmul %1, %2, %cst {dimension_numbers = #tpu.dot_dimension_numbers<[1], [0], [0], [1], [0, 0, 1, 1], [], []>} : vector<32x32xbf16>, vector<32x32xbf16>, vector<32x32xf32> -> vector<32x32xf32>
    %c0_3 = arith.constant 0 : index
    %c0_4 = arith.constant 0 : index
    %4 = vector.load %arg3[%c0_3, %c0_4] : memref<1x32xf32, #tpu.memory_space<vmem>>, vector<1x32xf32>
    %5 = vector.broadcast %4 : vector<1x32xf32> to vector<32x32xf32>
    %6 = arith.addf %3, %5 : vector<32x32xf32>
    %c0_5 = arith.constant 0 : index
    %c0_6 = arith.constant 0 : index
    %7 = vector.load %arg4[%c0_5, %c0_6] : memref<32x32xf32, #tpu.memory_space<vmem>>, vector<32x32xf32>
    tpu.vector_store %arg4[%c0_5, %c0_6], %6 {strides = array<i32>} : memref<32x32xf32, #tpu.memory_space<vmem>>, vector<32x32xf32>,
    return
  }
  func.func @transform_0(%arg0: i32) -> (i32, i32) {
    %c0_i32 = arith.constant 0 : i32
    %c0_i32_0 = arith.constant 0 : i32
    return %arg0, %c0_i32 : i32, i32
  }
  func.func @transform_1(%arg0: i32) -> (i32, i32) {
    %c0_i32 = arith.constant 0 : i32
    %c0_i32_0 = arith.constant 0 : i32
    %c0_i32_1 = arith.constant 0 : i32
    return %c0_i32, %c0_i32_0 : i32, i32
  }
  func.func @transform_2(%arg0: i32) -> (i32, i32) {
    %c0_i32 = arith.constant 0 : i32
    %c0_i32_0 = arith.constant 0 : i32
    %c0_i32_1 = arith.constant 0 : i32
    return %c0_i32, %c0_i32_0 : i32, i32
  }
  func.func @transform_3(%arg0: i32) -> (i32, i32) {
    %c0_i32 = arith.constant 0 : i32
    %c0_i32_0 = arith.constant 0 : i32
    return %arg0, %c0_i32 : i32, i32
  }
}

module attributes {stable_mosaic.version = 11 : i64} {
  func.func @_conv3_pe_kernel(%arg0: i32, %arg1: memref<1x16x4xf32, #tpu.memory_space<vmem>>, %arg2: memref<3x4x32xbf16, #tpu.memory_space<vmem>>, %arg3: memref<1x32xf32, #tpu.memory_space<vmem>>, %arg4: memref<1x16x32xf32, #tpu.memory_space<vmem>>, %arg5: memref<1x16x32xf32, #tpu.memory_space<vmem>>) attributes {dimension_semantics = [#tpu.dimension_semantics<parallel>], iteration_bounds = array<i64: 2>, scalar_prefetch = 0 : i64, scratch_operands = 0 : i64, tpu.core_type = #tpu.core_type<tc>, window_params = [{transform_indices = @transform_0, window_bounds = array<i64: 1, 16, 4>}, {pipeline_mode = #tpu.pipeline_mode<synchronous>, transform_indices = @transform_1, window_bounds = array<i64: 3, 4, 32>}, {pipeline_mode = #tpu.pipeline_mode<synchronous>, transform_indices = @transform_2, window_bounds = array<i64: 1, 32>}, {pipeline_mode = #tpu.pipeline_mode<synchronous>, transform_indices = @transform_3, window_bounds = array<i64: 1, 16, 32>}, {transform_indices = @transform_4, window_bounds = array<i64: 1, 16, 32>}]} {
    %c0 = arith.constant 0 : index
    %c0_0 = arith.constant 0 : index
    %c0_1 = arith.constant 0 : index
    %0 = vector.load %arg4[%c0, %c0_0, %c0_1] : memref<1x16x32xf32, #tpu.memory_space<vmem>>, vector<1x16x32xf32>
    %1 = vector.shape_cast %0 : vector<1x16x32xf32> to vector<16x32xf32>
    %c0_2 = arith.constant 0 : index
    %c0_3 = arith.constant 0 : index
    %c0_4 = arith.constant 0 : index
    %2 = vector.load %arg1[%c0_2, %c0_3, %c0_4] : memref<1x16x4xf32, #tpu.memory_space<vmem>>, vector<1x16x4xf32>
    %3 = vector.shape_cast %2 : vector<1x16x4xf32> to vector<16x4xf32>
    %4 = vector.extract_strided_slice %3 {offsets = [15, 0], sizes = [1, 4], strides = [1, 1]} : vector<16x4xf32> to vector<1x4xf32>
    %5 = vector.extract_strided_slice %3 {offsets = [0, 0], sizes = [1, 4], strides = [1, 1]} : vector<16x4xf32> to vector<1x4xf32>
    %6 = tpu.concatenate %4, %3, %5 in 0 : vector<1x4xf32>, vector<16x4xf32>, vector<1x4xf32> -> vector<18x4xf32>
    %c0_5 = arith.constant 0 : index
    %c0_6 = arith.constant 0 : index
    %c0_7 = arith.constant 0 : index
    %7 = vector.load %arg2[%c0_5, %c0_6, %c0_7] : memref<3x4x32xbf16, #tpu.memory_space<vmem>>, vector<3x4x32xbf16>
    %8 = vector.extract_strided_slice %6 {offsets = [0, 0], sizes = [16, 4], strides = [1, 1]} : vector<18x4xf32> to vector<16x4xf32>
    %9 = arith.truncf %8 : vector<16x4xf32> to vector<16x4xbf16>
    %10 = vector.extract_strided_slice %7 {offsets = [0, 0, 0], sizes = [1, 4, 32], strides = [1, 1, 1]} : vector<3x4x32xbf16> to vector<1x4x32xbf16>
    %11 = vector.shape_cast %10 : vector<1x4x32xbf16> to vector<4x32xbf16>
    %cst = arith.constant dense<0.000000e+00> : vector<16x32xf32>
    %12 = tpu.matmul %9, %11, %cst {dimension_numbers = #tpu.dot_dimension_numbers<[1], [0], [0], [1], [0, 0, 1, 1], [], []>} : vector<16x4xbf16>, vector<4x32xbf16>, vector<16x32xf32> -> vector<16x32xf32>
    %13 = vector.extract_strided_slice %6 {offsets = [1, 0], sizes = [16, 4], strides = [1, 1]} : vector<18x4xf32> to vector<16x4xf32>
    %14 = arith.truncf %13 : vector<16x4xf32> to vector<16x4xbf16>
    %15 = vector.extract_strided_slice %7 {offsets = [1, 0, 0], sizes = [1, 4, 32], strides = [1, 1, 1]} : vector<3x4x32xbf16> to vector<1x4x32xbf16>
    %16 = vector.shape_cast %15 : vector<1x4x32xbf16> to vector<4x32xbf16>
    %cst_8 = arith.constant dense<0.000000e+00> : vector<16x32xf32>
    %17 = tpu.matmul %14, %16, %cst_8 {dimension_numbers = #tpu.dot_dimension_numbers<[1], [0], [0], [1], [0, 0, 1, 1], [], []>} : vector<16x4xbf16>, vector<4x32xbf16>, vector<16x32xf32> -> vector<16x32xf32>
    %18 = arith.addf %12, %17 : vector<16x32xf32>
    %19 = vector.extract_strided_slice %6 {offsets = [2, 0], sizes = [16, 4], strides = [1, 1]} : vector<18x4xf32> to vector<16x4xf32>
    %20 = arith.truncf %19 : vector<16x4xf32> to vector<16x4xbf16>
    %21 = vector.extract_strided_slice %7 {offsets = [2, 0, 0], sizes = [1, 4, 32], strides = [1, 1, 1]} : vector<3x4x32xbf16> to vector<1x4x32xbf16>
    %22 = vector.shape_cast %21 : vector<1x4x32xbf16> to vector<4x32xbf16>
    %cst_9 = arith.constant dense<0.000000e+00> : vector<16x32xf32>
    %23 = tpu.matmul %20, %22, %cst_9 {dimension_numbers = #tpu.dot_dimension_numbers<[1], [0], [0], [1], [0, 0, 1, 1], [], []>} : vector<16x4xbf16>, vector<4x32xbf16>, vector<16x32xf32> -> vector<16x32xf32>
    %24 = arith.addf %18, %23 : vector<16x32xf32>
    %c0_10 = arith.constant 0 : index
    %c0_11 = arith.constant 0 : index
    %25 = vector.load %arg3[%c0_10, %c0_11] : memref<1x32xf32, #tpu.memory_space<vmem>>, vector<1x32xf32>
    %26 = vector.broadcast %25 : vector<1x32xf32> to vector<16x32xf32>
    %27 = arith.addf %24, %26 : vector<16x32xf32>
    %28 = arith.addf %27, %1 : vector<16x32xf32>
    %29 = vector.shape_cast %28 : vector<16x32xf32> to vector<1x16x32xf32>
    %c0_12 = arith.constant 0 : index
    %c0_13 = arith.constant 0 : index
    %c0_14 = arith.constant 0 : index
    %30 = vector.load %arg5[%c0_12, %c0_13, %c0_14] : memref<1x16x32xf32, #tpu.memory_space<vmem>>, vector<1x16x32xf32>
    tpu.vector_store %arg5[%c0_12, %c0_13, %c0_14], %29 {strides = array<i32>} : memref<1x16x32xf32, #tpu.memory_space<vmem>>, vector<1x16x32xf32>,
    return
  }
  func.func @transform_0(%arg0: i32) -> (i32, i32, i32) {
    %c0_i32 = arith.constant 0 : i32
    %c0_i32_0 = arith.constant 0 : i32
    %c0_i32_1 = arith.constant 0 : i32
    return %arg0, %c0_i32, %c0_i32_0 : i32, i32, i32
  }
  func.func @transform_1(%arg0: i32) -> (i32, i32, i32) {
    %c0_i32 = arith.constant 0 : i32
    %c0_i32_0 = arith.constant 0 : i32
    %c0_i32_1 = arith.constant 0 : i32
    %c0_i32_2 = arith.constant 0 : i32
    return %c0_i32, %c0_i32_0, %c0_i32_1 : i32, i32, i32
  }
  func.func @transform_2(%arg0: i32) -> (i32, i32) {
    %c0_i32 = arith.constant 0 : i32
    %c0_i32_0 = arith.constant 0 : i32
    %c0_i32_1 = arith.constant 0 : i32
    return %c0_i32, %c0_i32_0 : i32, i32
  }
  func.func @transform_3(%arg0: i32) -> (i32, i32, i32) {
    %c0_i32 = arith.constant 0 : i32
    %c0_i32_0 = arith.constant 0 : i32
    %c0_i32_1 = arith.constant 0 : i32
    %c0_i32_2 = arith.constant 0 : i32
    return %c0_i32, %c0_i32_0, %c0_i32_1 : i32, i32, i32
  }
  func.func @transform_4(%arg0: i32) -> (i32, i32, i32) {
    %c0_i32 = arith.constant 0 : i32
    %c0_i32_0 = arith.constant 0 : i32
    %c0_i32_1 = arith.constant 0 : i32
    return %arg0, %c0_i32, %c0_i32_0 : i32, i32, i32
  }
}

module attributes {stable_mosaic.version = 11 : i64} {
  func.func @_agg_proj_decomp_kernel(%arg0: i32, %arg1: memref<1x16x16xbf16, #tpu.memory_space<vmem>>, %arg2: memref<1x16x32xf32, #tpu.memory_space<vmem>>, %arg3: memref<1x16x32xf32, #tpu.memory_space<vmem>>, %arg4: memref<32x32xbf16, #tpu.memory_space<vmem>>, %arg5: memref<1x32xf32, #tpu.memory_space<vmem>>, %arg6: memref<16x16xf32, #tpu.memory_space<vmem>>, %arg7: memref<1x16x32xf32, #tpu.memory_space<vmem>>, %arg8: memref<1x16x32xf32, #tpu.memory_space<vmem>>) attributes {dimension_semantics = [#tpu.dimension_semantics<parallel>], iteration_bounds = array<i64: 2>, scalar_prefetch = 0 : i64, scratch_operands = 0 : i64, tpu.core_type = #tpu.core_type<tc>, window_params = [{transform_indices = @transform_0, window_bounds = array<i64: 1, 16, 16>}, {transform_indices = @transform_1, window_bounds = array<i64: 1, 16, 32>}, {transform_indices = @transform_2, window_bounds = array<i64: 1, 16, 32>}, {pipeline_mode = #tpu.pipeline_mode<synchronous>, transform_indices = @transform_3, window_bounds = array<i64: 32, 32>}, {pipeline_mode = #tpu.pipeline_mode<synchronous>, transform_indices = @transform_4, window_bounds = array<i64: 1, 32>}, {pipeline_mode = #tpu.pipeline_mode<synchronous>, transform_indices = @transform_5, window_bounds = array<i64: 16, 16>}, {transform_indices = @transform_6, window_bounds = array<i64: 1, 16, 32>}, {transform_indices = @transform_7, window_bounds = array<i64: 1, 16, 32>}]} {
    %c0 = arith.constant 0 : index
    %c0_0 = arith.constant 0 : index
    %c0_1 = arith.constant 0 : index
    %0 = vector.load %arg1[%c0, %c0_0, %c0_1] : memref<1x16x16xbf16, #tpu.memory_space<vmem>>, vector<1x16x16xbf16>
    %1 = vector.shape_cast %0 : vector<1x16x16xbf16> to vector<16x16xbf16>
    %c0_2 = arith.constant 0 : index
    %c0_3 = arith.constant 0 : index
    %c0_4 = arith.constant 0 : index
    %2 = vector.load %arg2[%c0_2, %c0_3, %c0_4] : memref<1x16x32xf32, #tpu.memory_space<vmem>>, vector<1x16x32xf32>
    %3 = vector.shape_cast %2 : vector<1x16x32xf32> to vector<16x32xf32>
    %4 = arith.truncf %3 : vector<16x32xf32> to vector<16x32xbf16>
    %cst = arith.constant dense<0.000000e+00> : vector<16x32xf32>
    %5 = tpu.matmul %1, %4, %cst {dimension_numbers = #tpu.dot_dimension_numbers<[1], [0], [0], [1], [0, 0, 1, 1], [], []>} : vector<16x16xbf16>, vector<16x32xbf16>, vector<16x32xf32> -> vector<16x32xf32>
    %6 = arith.truncf %5 : vector<16x32xf32> to vector<16x32xbf16>
    %c0_5 = arith.constant 0 : index
    %c0_6 = arith.constant 0 : index
    %7 = vector.load %arg4[%c0_5, %c0_6] : memref<32x32xbf16, #tpu.memory_space<vmem>>, vector<32x32xbf16>
    %cst_7 = arith.constant dense<0.000000e+00> : vector<16x32xf32>
    %8 = tpu.matmul %6, %7, %cst_7 {dimension_numbers = #tpu.dot_dimension_numbers<[1], [0], [0], [1], [0, 0, 1, 1], [], []>} : vector<16x32xbf16>, vector<32x32xbf16>, vector<16x32xf32> -> vector<16x32xf32>
    %c0_8 = arith.constant 0 : index
    %c0_9 = arith.constant 0 : index
    %9 = vector.load %arg5[%c0_8, %c0_9] : memref<1x32xf32, #tpu.memory_space<vmem>>, vector<1x32xf32>
    %10 = vector.broadcast %9 : vector<1x32xf32> to vector<16x32xf32>
    %11 = arith.addf %8, %10 : vector<16x32xf32>
    %c0_10 = arith.constant 0 : index
    %c0_11 = arith.constant 0 : index
    %c0_12 = arith.constant 0 : index
    %12 = vector.load %arg3[%c0_10, %c0_11, %c0_12] : memref<1x16x32xf32, #tpu.memory_space<vmem>>, vector<1x16x32xf32>
    %13 = vector.shape_cast %12 : vector<1x16x32xf32> to vector<16x32xf32>
    %14 = arith.addf %13, %11 : vector<16x32xf32>
    %c0_13 = arith.constant 0 : index
    %c0_14 = arith.constant 0 : index
    %15 = vector.load %arg6[%c0_13, %c0_14] : memref<16x16xf32, #tpu.memory_space<vmem>>, vector<16x16xf32>
    %16 = arith.truncf %15 : vector<16x16xf32> to vector<16x16xbf16>
    %17 = arith.truncf %14 : vector<16x32xf32> to vector<16x32xbf16>
    %cst_15 = arith.constant dense<0.000000e+00> : vector<16x32xf32>
    %18 = tpu.matmul %16, %17, %cst_15 {dimension_numbers = #tpu.dot_dimension_numbers<[1], [0], [0], [1], [0, 0, 1, 1], [], []>} : vector<16x16xbf16>, vector<16x32xbf16>, vector<16x32xf32> -> vector<16x32xf32>
    %19 = vector.shape_cast %18 : vector<16x32xf32> to vector<1x16x32xf32>
    %c0_16 = arith.constant 0 : index
    %c0_17 = arith.constant 0 : index
    %c0_18 = arith.constant 0 : index
    %20 = vector.load %arg8[%c0_16, %c0_17, %c0_18] : memref<1x16x32xf32, #tpu.memory_space<vmem>>, vector<1x16x32xf32>
    tpu.vector_store %arg8[%c0_16, %c0_17, %c0_18], %19 {strides = array<i32>} : memref<1x16x32xf32, #tpu.memory_space<vmem>>, vector<1x16x32xf32>,
    %21 = arith.subf %14, %18 : vector<16x32xf32>
    %22 = vector.shape_cast %21 : vector<16x32xf32> to vector<1x16x32xf32>
    %c0_19 = arith.constant 0 : index
    %c0_20 = arith.constant 0 : index
    %c0_21 = arith.constant 0 : index
    %23 = vector.load %arg7[%c0_19, %c0_20, %c0_21] : memref<1x16x32xf32, #tpu.memory_space<vmem>>, vector<1x16x32xf32>
    tpu.vector_store %arg7[%c0_19, %c0_20, %c0_21], %22 {strides = array<i32>} : memref<1x16x32xf32, #tpu.memory_space<vmem>>, vector<1x16x32xf32>,
    return
  }
  func.func @transform_0(%arg0: i32) -> (i32, i32, i32) {
    %c0_i32 = arith.constant 0 : i32
    %c0_i32_0 = arith.constant 0 : i32
    %c0_i32_1 = arith.constant 0 : i32
    return %arg0, %c0_i32, %c0_i32_0 : i32, i32, i32
  }
  func.func @transform_1(%arg0: i32) -> (i32, i32, i32) {
    %c0_i32 = arith.constant 0 : i32
    %c0_i32_0 = arith.constant 0 : i32
    %c0_i32_1 = arith.constant 0 : i32
    return %arg0, %c0_i32, %c0_i32_0 : i32, i32, i32
  }
  func.func @transform_2(%arg0: i32) -> (i32, i32, i32) {
    %c0_i32 = arith.constant 0 : i32
    %c0_i32_0 = arith.constant 0 : i32
    %c0_i32_1 = arith.constant 0 : i32
    return %arg0, %c0_i32, %c0_i32_0 : i32, i32, i32
  }
  func.func @transform_3(%arg0: i32) -> (i32, i32) {
    %c0_i32 = arith.constant 0 : i32
    %c0_i32_0 = arith.constant 0 : i32
    %c0_i32_1 = arith.constant 0 : i32
    return %c0_i32, %c0_i32_0 : i32, i32
  }
  func.func @transform_4(%arg0: i32) -> (i32, i32) {
    %c0_i32 = arith.constant 0 : i32
    %c0_i32_0 = arith.constant 0 : i32
    %c0_i32_1 = arith.constant 0 : i32
    return %c0_i32, %c0_i32_0 : i32, i32
  }
  func.func @transform_5(%arg0: i32) -> (i32, i32) {
    %c0_i32 = arith.constant 0 : i32
    %c0_i32_0 = arith.constant 0 : i32
    %c0_i32_1 = arith.constant 0 : i32
    return %c0_i32, %c0_i32_0 : i32, i32
  }
  func.func @transform_6(%arg0: i32) -> (i32, i32, i32) {
    %c0_i32 = arith.constant 0 : i32
    %c0_i32_0 = arith.constant 0 : i32
    %c0_i32_1 = arith.constant 0 : i32
    return %arg0, %c0_i32, %c0_i32_0 : i32, i32, i32
  }
  func.func @transform_7(%arg0: i32) -> (i32, i32, i32) {
    %c0_i32 = arith.constant 0 : i32
    %c0_i32_0 = arith.constant 0 : i32
    %c0_i32_1 = arith.constant 0 : i32
    return %arg0, %c0_i32, %c0_i32_0 : i32, i32, i32
  }
}

module attributes {stable_mosaic.version = 11 : i64} {
  func.func @_ffn_decomp_kernel(%arg0: i32, %arg1: memref<1x16x32xf32, #tpu.memory_space<vmem>>, %arg2: memref<32x64xbf16, #tpu.memory_space<vmem>>, %arg3: memref<1x64xf32, #tpu.memory_space<vmem>>, %arg4: memref<64x32xbf16, #tpu.memory_space<vmem>>, %arg5: memref<1x32xf32, #tpu.memory_space<vmem>>, %arg6: memref<16x16xf32, #tpu.memory_space<vmem>>, %arg7: memref<1x16x32xf32, #tpu.memory_space<vmem>>, %arg8: memref<1x16x32xf32, #tpu.memory_space<vmem>>) attributes {dimension_semantics = [#tpu.dimension_semantics<parallel>], iteration_bounds = array<i64: 2>, scalar_prefetch = 0 : i64, scratch_operands = 0 : i64, tpu.core_type = #tpu.core_type<tc>, window_params = [{transform_indices = @transform_0, window_bounds = array<i64: 1, 16, 32>}, {pipeline_mode = #tpu.pipeline_mode<synchronous>, transform_indices = @transform_1, window_bounds = array<i64: 32, 64>}, {pipeline_mode = #tpu.pipeline_mode<synchronous>, transform_indices = @transform_2, window_bounds = array<i64: 1, 64>}, {pipeline_mode = #tpu.pipeline_mode<synchronous>, transform_indices = @transform_3, window_bounds = array<i64: 64, 32>}, {pipeline_mode = #tpu.pipeline_mode<synchronous>, transform_indices = @transform_4, window_bounds = array<i64: 1, 32>}, {pipeline_mode = #tpu.pipeline_mode<synchronous>, transform_indices = @transform_5, window_bounds = array<i64: 16, 16>}, {transform_indices = @transform_6, window_bounds = array<i64: 1, 16, 32>}, {transform_indices = @transform_7, window_bounds = array<i64: 1, 16, 32>}]} {
    %c0 = arith.constant 0 : index
    %c0_0 = arith.constant 0 : index
    %c0_1 = arith.constant 0 : index
    %0 = vector.load %arg1[%c0, %c0_0, %c0_1] : memref<1x16x32xf32, #tpu.memory_space<vmem>>, vector<1x16x32xf32>
    %1 = vector.shape_cast %0 : vector<1x16x32xf32> to vector<16x32xf32>
    %2 = arith.truncf %1 : vector<16x32xf32> to vector<16x32xbf16>
    %c0_2 = arith.constant 0 : index
    %c0_3 = arith.constant 0 : index
    %3 = vector.load %arg2[%c0_2, %c0_3] : memref<32x64xbf16, #tpu.memory_space<vmem>>, vector<32x64xbf16>
    %cst = arith.constant dense<0.000000e+00> : vector<16x64xf32>
    %4 = tpu.matmul %2, %3, %cst {dimension_numbers = #tpu.dot_dimension_numbers<[1], [0], [0], [1], [0, 0, 1, 1], [], []>} : vector<16x32xbf16>, vector<32x64xbf16>, vector<16x64xf32> -> vector<16x64xf32>
    %c0_4 = arith.constant 0 : index
    %c0_5 = arith.constant 0 : index
    %5 = vector.load %arg3[%c0_4, %c0_5] : memref<1x64xf32, #tpu.memory_space<vmem>>, vector<1x64xf32>
    %6 = vector.broadcast %5 : vector<1x64xf32> to vector<16x64xf32>
    %7 = arith.addf %4, %6 : vector<16x64xf32>
    %cst_6 = arith.constant 0.000000e+00 : f32
    %8 = vector.broadcast %cst_6 : f32 to vector<16x64xf32>
    %9 = arith.maximumf %7, %8 : vector<16x64xf32>
    %10 = arith.truncf %9 : vector<16x64xf32> to vector<16x64xbf16>
    %c0_7 = arith.constant 0 : index
    %c0_8 = arith.constant 0 : index
    %11 = vector.load %arg4[%c0_7, %c0_8] : memref<64x32xbf16, #tpu.memory_space<vmem>>, vector<64x32xbf16>
    %cst_9 = arith.constant dense<0.000000e+00> : vector<16x32xf32>
    %12 = tpu.matmul %10, %11, %cst_9 {dimension_numbers = #tpu.dot_dimension_numbers<[1], [0], [0], [1], [0, 0, 1, 1], [], []>} : vector<16x64xbf16>, vector<64x32xbf16>, vector<16x32xf32> -> vector<16x32xf32>
    %c0_10 = arith.constant 0 : index
    %c0_11 = arith.constant 0 : index
    %13 = vector.load %arg5[%c0_10, %c0_11] : memref<1x32xf32, #tpu.memory_space<vmem>>, vector<1x32xf32>
    %14 = vector.broadcast %13 : vector<1x32xf32> to vector<16x32xf32>
    %15 = arith.addf %12, %14 : vector<16x32xf32>
    %16 = arith.addf %1, %15 : vector<16x32xf32>
    %c0_12 = arith.constant 0 : index
    %c0_13 = arith.constant 0 : index
    %17 = vector.load %arg6[%c0_12, %c0_13] : memref<16x16xf32, #tpu.memory_space<vmem>>, vector<16x16xf32>
    %18 = arith.truncf %17 : vector<16x16xf32> to vector<16x16xbf16>
    %19 = arith.truncf %16 : vector<16x32xf32> to vector<16x32xbf16>
    %cst_14 = arith.constant dense<0.000000e+00> : vector<16x32xf32>
    %20 = tpu.matmul %18, %19, %cst_14 {dimension_numbers = #tpu.dot_dimension_numbers<[1], [0], [0], [1], [0, 0, 1, 1], [], []>} : vector<16x16xbf16>, vector<16x32xbf16>, vector<16x32xf32> -> vector<16x32xf32>
    %21 = vector.shape_cast %20 : vector<16x32xf32> to vector<1x16x32xf32>
    %c0_15 = arith.constant 0 : index
    %c0_16 = arith.constant 0 : index
    %c0_17 = arith.constant 0 : index
    %22 = vector.load %arg8[%c0_15, %c0_16, %c0_17] : memref<1x16x32xf32, #tpu.memory_space<vmem>>, vector<1x16x32xf32>
    tpu.vector_store %arg8[%c0_15, %c0_16, %c0_17], %21 {strides = array<i32>} : memref<1x16x32xf32, #tpu.memory_space<vmem>>, vector<1x16x32xf32>,
    %23 = arith.subf %16, %20 : vector<16x32xf32>
    %24 = vector.shape_cast %23 : vector<16x32xf32> to vector<1x16x32xf32>
    %c0_18 = arith.constant 0 : index
    %c0_19 = arith.constant 0 : index
    %c0_20 = arith.constant 0 : index
    %25 = vector.load %arg7[%c0_18, %c0_19, %c0_20] : memref<1x16x32xf32, #tpu.memory_space<vmem>>, vector<1x16x32xf32>
    tpu.vector_store %arg7[%c0_18, %c0_19, %c0_20], %24 {strides = array<i32>} : memref<1x16x32xf32, #tpu.memory_space<vmem>>, vector<1x16x32xf32>,
    return
  }
  func.func @transform_0(%arg0: i32) -> (i32, i32, i32) {
    %c0_i32 = arith.constant 0 : i32
    %c0_i32_0 = arith.constant 0 : i32
    %c0_i32_1 = arith.constant 0 : i32
    return %arg0, %c0_i32, %c0_i32_0 : i32, i32, i32
  }
  func.func @transform_1(%arg0: i32) -> (i32, i32) {
    %c0_i32 = arith.constant 0 : i32
    %c0_i32_0 = arith.constant 0 : i32
    %c0_i32_1 = arith.constant 0 : i32
    return %c0_i32, %c0_i32_0 : i32, i32
  }
  func.func @transform_2(%arg0: i32) -> (i32, i32) {
    %c0_i32 = arith.constant 0 : i32
    %c0_i32_0 = arith.constant 0 : i32
    %c0_i32_1 = arith.constant 0 : i32
    return %c0_i32, %c0_i32_0 : i32, i32
  }
  func.func @transform_3(%arg0: i32) -> (i32, i32) {
    %c0_i32 = arith.constant 0 : i32
    %c0_i32_0 = arith.constant 0 : i32
    %c0_i32_1 = arith.constant 0 : i32
    return %c0_i32, %c0_i32_0 : i32, i32
  }
  func.func @transform_4(%arg0: i32) -> (i32, i32) {
    %c0_i32 = arith.constant 0 : i32
    %c0_i32_0 = arith.constant 0 : i32
    %c0_i32_1 = arith.constant 0 : i32
    return %c0_i32, %c0_i32_0 : i32, i32
  }
  func.func @transform_5(%arg0: i32) -> (i32, i32) {
    %c0_i32 = arith.constant 0 : i32
    %c0_i32_0 = arith.constant 0 : i32
    %c0_i32_1 = arith.constant 0 : i32
    return %c0_i32, %c0_i32_0 : i32, i32
  }
  func.func @transform_6(%arg0: i32) -> (i32, i32, i32) {
    %c0_i32 = arith.constant 0 : i32
    %c0_i32_0 = arith.constant 0 : i32
    %c0_i32_1 = arith.constant 0 : i32
    return %arg0, %c0_i32, %c0_i32_0 : i32, i32, i32
  }
  func.func @transform_7(%arg0: i32) -> (i32, i32, i32) {
    %c0_i32 = arith.constant 0 : i32
    %c0_i32_0 = arith.constant 0 : i32
    %c0_i32_1 = arith.constant 0 : i32
    return %arg0, %c0_i32, %c0_i32_0 : i32, i32, i32
  }
}

module attributes {stable_mosaic.version = 11 : i64} {
  func.func @_split_proj_kernel(%arg0: i32, %arg1: memref<32x32xf32, #tpu.memory_space<vmem>>, %arg2: memref<32x64xbf16, #tpu.memory_space<vmem>>, %arg3: memref<1x64xf32, #tpu.memory_space<vmem>>, %arg4: memref<32x32xf32, #tpu.memory_space<vmem>>, %arg5: memref<32x32xf32, #tpu.memory_space<vmem>>) attributes {dimension_semantics = [#tpu.dimension_semantics<parallel>], iteration_bounds = array<i64: 1>, scalar_prefetch = 0 : i64, scratch_operands = 0 : i64, tpu.core_type = #tpu.core_type<tc>, window_params = [{transform_indices = @transform_0, window_bounds = array<i64: 32, 32>}, {pipeline_mode = #tpu.pipeline_mode<synchronous>, transform_indices = @transform_1, window_bounds = array<i64: 32, 64>}, {pipeline_mode = #tpu.pipeline_mode<synchronous>, transform_indices = @transform_2, window_bounds = array<i64: 1, 64>}, {transform_indices = @transform_3, window_bounds = array<i64: 32, 32>}, {transform_indices = @transform_4, window_bounds = array<i64: 32, 32>}]} {
    %c0 = arith.constant 0 : index
    %c0_0 = arith.constant 0 : index
    %0 = vector.load %arg1[%c0, %c0_0] : memref<32x32xf32, #tpu.memory_space<vmem>>, vector<32x32xf32>
    %1 = arith.truncf %0 : vector<32x32xf32> to vector<32x32xbf16>
    %c0_1 = arith.constant 0 : index
    %c0_2 = arith.constant 0 : index
    %2 = vector.load %arg2[%c0_1, %c0_2] : memref<32x64xbf16, #tpu.memory_space<vmem>>, vector<32x64xbf16>
    %cst = arith.constant dense<0.000000e+00> : vector<32x64xf32>
    %3 = tpu.matmul %1, %2, %cst {dimension_numbers = #tpu.dot_dimension_numbers<[1], [0], [0], [1], [0, 0, 1, 1], [], []>} : vector<32x32xbf16>, vector<32x64xbf16>, vector<32x64xf32> -> vector<32x64xf32>
    %c0_3 = arith.constant 0 : index
    %c0_4 = arith.constant 0 : index
    %4 = vector.load %arg3[%c0_3, %c0_4] : memref<1x64xf32, #tpu.memory_space<vmem>>, vector<1x64xf32>
    %5 = vector.broadcast %4 : vector<1x64xf32> to vector<32x64xf32>
    %6 = arith.addf %3, %5 : vector<32x64xf32>
    %7 = vector.extract_strided_slice %6 {offsets = [0, 0], sizes = [32, 32], strides = [1, 1]} : vector<32x64xf32> to vector<32x32xf32>
    %c0_5 = arith.constant 0 : index
    %c0_6 = arith.constant 0 : index
    %8 = vector.load %arg4[%c0_5, %c0_6] : memref<32x32xf32, #tpu.memory_space<vmem>>, vector<32x32xf32>
    tpu.vector_store %arg4[%c0_5, %c0_6], %7 {strides = array<i32>} : memref<32x32xf32, #tpu.memory_space<vmem>>, vector<32x32xf32>,
    %9 = vector.extract_strided_slice %6 {offsets = [0, 32], sizes = [32, 32], strides = [1, 1]} : vector<32x64xf32> to vector<32x32xf32>
    %c0_7 = arith.constant 0 : index
    %c0_8 = arith.constant 0 : index
    %10 = vector.load %arg5[%c0_7, %c0_8] : memref<32x32xf32, #tpu.memory_space<vmem>>, vector<32x32xf32>
    tpu.vector_store %arg5[%c0_7, %c0_8], %9 {strides = array<i32>} : memref<32x32xf32, #tpu.memory_space<vmem>>, vector<32x32xf32>,
    return
  }
  func.func @transform_0(%arg0: i32) -> (i32, i32) {
    %c0_i32 = arith.constant 0 : i32
    %c0_i32_0 = arith.constant 0 : i32
    return %arg0, %c0_i32 : i32, i32
  }
  func.func @transform_1(%arg0: i32) -> (i32, i32) {
    %c0_i32 = arith.constant 0 : i32
    %c0_i32_0 = arith.constant 0 : i32
    %c0_i32_1 = arith.constant 0 : i32
    return %c0_i32, %c0_i32_0 : i32, i32
  }
  func.func @transform_2(%arg0: i32) -> (i32, i32) {
    %c0_i32 = arith.constant 0 : i32
    %c0_i32_0 = arith.constant 0 : i32
    %c0_i32_1 = arith.constant 0 : i32
    return %c0_i32, %c0_i32_0 : i32, i32
  }
  func.func @transform_3(%arg0: i32) -> (i32, i32) {
    %c0_i32 = arith.constant 0 : i32
    %c0_i32_0 = arith.constant 0 : i32
    return %arg0, %c0_i32 : i32, i32
  }
  func.func @transform_4(%arg0: i32) -> (i32, i32) {
    %c0_i32 = arith.constant 0 : i32
    %c0_i32_0 = arith.constant 0 : i32
    return %arg0, %c0_i32 : i32, i32
  }
}

module attributes {stable_mosaic.version = 11 : i64} {
  func.func @_ffn_decomp_kernel(%arg0: i32, %arg1: memref<1x16x32xf32, #tpu.memory_space<vmem>>, %arg2: memref<32x64xbf16, #tpu.memory_space<vmem>>, %arg3: memref<1x64xf32, #tpu.memory_space<vmem>>, %arg4: memref<64x32xbf16, #tpu.memory_space<vmem>>, %arg5: memref<1x32xf32, #tpu.memory_space<vmem>>, %arg6: memref<16x16xf32, #tpu.memory_space<vmem>>, %arg7: memref<1x16x32xf32, #tpu.memory_space<vmem>>, %arg8: memref<1x16x32xf32, #tpu.memory_space<vmem>>) attributes {dimension_semantics = [#tpu.dimension_semantics<parallel>], iteration_bounds = array<i64: 2>, scalar_prefetch = 0 : i64, scratch_operands = 0 : i64, tpu.core_type = #tpu.core_type<tc>, window_params = [{transform_indices = @transform_0, window_bounds = array<i64: 1, 16, 32>}, {pipeline_mode = #tpu.pipeline_mode<synchronous>, transform_indices = @transform_1, window_bounds = array<i64: 32, 64>}, {pipeline_mode = #tpu.pipeline_mode<synchronous>, transform_indices = @transform_2, window_bounds = array<i64: 1, 64>}, {pipeline_mode = #tpu.pipeline_mode<synchronous>, transform_indices = @transform_3, window_bounds = array<i64: 64, 32>}, {pipeline_mode = #tpu.pipeline_mode<synchronous>, transform_indices = @transform_4, window_bounds = array<i64: 1, 32>}, {pipeline_mode = #tpu.pipeline_mode<synchronous>, transform_indices = @transform_5, window_bounds = array<i64: 16, 16>}, {transform_indices = @transform_6, window_bounds = array<i64: 1, 16, 32>}, {transform_indices = @transform_7, window_bounds = array<i64: 1, 16, 32>}]} {
    %c0 = arith.constant 0 : index
    %c0_0 = arith.constant 0 : index
    %c0_1 = arith.constant 0 : index
    %0 = vector.load %arg1[%c0, %c0_0, %c0_1] : memref<1x16x32xf32, #tpu.memory_space<vmem>>, vector<1x16x32xf32>
    %1 = vector.shape_cast %0 : vector<1x16x32xf32> to vector<16x32xf32>
    %2 = arith.truncf %1 : vector<16x32xf32> to vector<16x32xbf16>
    %c0_2 = arith.constant 0 : index
    %c0_3 = arith.constant 0 : index
    %3 = vector.load %arg2[%c0_2, %c0_3] : memref<32x64xbf16, #tpu.memory_space<vmem>>, vector<32x64xbf16>
    %cst = arith.constant dense<0.000000e+00> : vector<16x64xf32>
    %4 = tpu.matmul %2, %3, %cst {dimension_numbers = #tpu.dot_dimension_numbers<[1], [0], [0], [1], [0, 0, 1, 1], [], []>} : vector<16x32xbf16>, vector<32x64xbf16>, vector<16x64xf32> -> vector<16x64xf32>
    %c0_4 = arith.constant 0 : index
    %c0_5 = arith.constant 0 : index
    %5 = vector.load %arg3[%c0_4, %c0_5] : memref<1x64xf32, #tpu.memory_space<vmem>>, vector<1x64xf32>
    %6 = vector.broadcast %5 : vector<1x64xf32> to vector<16x64xf32>
    %7 = arith.addf %4, %6 : vector<16x64xf32>
    %cst_6 = arith.constant 0.000000e+00 : f32
    %8 = vector.broadcast %cst_6 : f32 to vector<16x64xf32>
    %9 = arith.maximumf %7, %8 : vector<16x64xf32>
    %10 = arith.truncf %9 : vector<16x64xf32> to vector<16x64xbf16>
    %c0_7 = arith.constant 0 : index
    %c0_8 = arith.constant 0 : index
    %11 = vector.load %arg4[%c0_7, %c0_8] : memref<64x32xbf16, #tpu.memory_space<vmem>>, vector<64x32xbf16>
    %cst_9 = arith.constant dense<0.000000e+00> : vector<16x32xf32>
    %12 = tpu.matmul %10, %11, %cst_9 {dimension_numbers = #tpu.dot_dimension_numbers<[1], [0], [0], [1], [0, 0, 1, 1], [], []>} : vector<16x64xbf16>, vector<64x32xbf16>, vector<16x32xf32> -> vector<16x32xf32>
    %c0_10 = arith.constant 0 : index
    %c0_11 = arith.constant 0 : index
    %13 = vector.load %arg5[%c0_10, %c0_11] : memref<1x32xf32, #tpu.memory_space<vmem>>, vector<1x32xf32>
    %14 = vector.broadcast %13 : vector<1x32xf32> to vector<16x32xf32>
    %15 = arith.addf %12, %14 : vector<16x32xf32>
    %16 = arith.addf %1, %15 : vector<16x32xf32>
    %c0_12 = arith.constant 0 : index
    %c0_13 = arith.constant 0 : index
    %17 = vector.load %arg6[%c0_12, %c0_13] : memref<16x16xf32, #tpu.memory_space<vmem>>, vector<16x16xf32>
    %18 = arith.truncf %17 : vector<16x16xf32> to vector<16x16xbf16>
    %19 = arith.truncf %16 : vector<16x32xf32> to vector<16x32xbf16>
    %cst_14 = arith.constant dense<0.000000e+00> : vector<16x32xf32>
    %20 = tpu.matmul %18, %19, %cst_14 {dimension_numbers = #tpu.dot_dimension_numbers<[1], [0], [0], [1], [0, 0, 1, 1], [], []>} : vector<16x16xbf16>, vector<16x32xbf16>, vector<16x32xf32> -> vector<16x32xf32>
    %21 = vector.shape_cast %20 : vector<16x32xf32> to vector<1x16x32xf32>
    %c0_15 = arith.constant 0 : index
    %c0_16 = arith.constant 0 : index
    %c0_17 = arith.constant 0 : index
    %22 = vector.load %arg8[%c0_15, %c0_16, %c0_17] : memref<1x16x32xf32, #tpu.memory_space<vmem>>, vector<1x16x32xf32>
    tpu.vector_store %arg8[%c0_15, %c0_16, %c0_17], %21 {strides = array<i32>} : memref<1x16x32xf32, #tpu.memory_space<vmem>>, vector<1x16x32xf32>,
    %23 = arith.subf %16, %20 : vector<16x32xf32>
    %24 = vector.shape_cast %23 : vector<16x32xf32> to vector<1x16x32xf32>
    %c0_18 = arith.constant 0 : index
    %c0_19 = arith.constant 0 : index
    %c0_20 = arith.constant 0 : index
    %25 = vector.load %arg7[%c0_18, %c0_19, %c0_20] : memref<1x16x32xf32, #tpu.memory_space<vmem>>, vector<1x16x32xf32>
    tpu.vector_store %arg7[%c0_18, %c0_19, %c0_20], %24 {strides = array<i32>} : memref<1x16x32xf32, #tpu.memory_space<vmem>>, vector<1x16x32xf32>,
    return
  }
  func.func @transform_0(%arg0: i32) -> (i32, i32, i32) {
    %c0_i32 = arith.constant 0 : i32
    %c0_i32_0 = arith.constant 0 : i32
    %c0_i32_1 = arith.constant 0 : i32
    return %arg0, %c0_i32, %c0_i32_0 : i32, i32, i32
  }
  func.func @transform_1(%arg0: i32) -> (i32, i32) {
    %c0_i32 = arith.constant 0 : i32
    %c0_i32_0 = arith.constant 0 : i32
    %c0_i32_1 = arith.constant 0 : i32
    return %c0_i32, %c0_i32_0 : i32, i32
  }
  func.func @transform_2(%arg0: i32) -> (i32, i32) {
    %c0_i32 = arith.constant 0 : i32
    %c0_i32_0 = arith.constant 0 : i32
    %c0_i32_1 = arith.constant 0 : i32
    return %c0_i32, %c0_i32_0 : i32, i32
  }
  func.func @transform_3(%arg0: i32) -> (i32, i32) {
    %c0_i32 = arith.constant 0 : i32
    %c0_i32_0 = arith.constant 0 : i32
    %c0_i32_1 = arith.constant 0 : i32
    return %c0_i32, %c0_i32_0 : i32, i32
  }
  func.func @transform_4(%arg0: i32) -> (i32, i32) {
    %c0_i32 = arith.constant 0 : i32
    %c0_i32_0 = arith.constant 0 : i32
    %c0_i32_1 = arith.constant 0 : i32
    return %c0_i32, %c0_i32_0 : i32, i32
  }
  func.func @transform_5(%arg0: i32) -> (i32, i32) {
    %c0_i32 = arith.constant 0 : i32
    %c0_i32_0 = arith.constant 0 : i32
    %c0_i32_1 = arith.constant 0 : i32
    return %c0_i32, %c0_i32_0 : i32, i32
  }
  func.func @transform_6(%arg0: i32) -> (i32, i32, i32) {
    %c0_i32 = arith.constant 0 : i32
    %c0_i32_0 = arith.constant 0 : i32
    %c0_i32_1 = arith.constant 0 : i32
    return %arg0, %c0_i32, %c0_i32_0 : i32, i32, i32
  }
  func.func @transform_7(%arg0: i32) -> (i32, i32, i32) {
    %c0_i32 = arith.constant 0 : i32
    %c0_i32_0 = arith.constant 0 : i32
    %c0_i32_1 = arith.constant 0 : i32
    return %arg0, %c0_i32, %c0_i32_0 : i32, i32, i32
  }
}

module attributes {stable_mosaic.version = 11 : i64} {
  func.func @_conv3_kernel(%arg0: i32, %arg1: memref<1x16x32xf32, #tpu.memory_space<vmem>>, %arg2: memref<3x32x32xbf16, #tpu.memory_space<vmem>>, %arg3: memref<1x32xf32, #tpu.memory_space<vmem>>, %arg4: memref<1x16x32xf32, #tpu.memory_space<vmem>>) attributes {dimension_semantics = [#tpu.dimension_semantics<parallel>], iteration_bounds = array<i64: 2>, scalar_prefetch = 0 : i64, scratch_operands = 0 : i64, tpu.core_type = #tpu.core_type<tc>, window_params = [{transform_indices = @transform_0, window_bounds = array<i64: 1, 16, 32>}, {pipeline_mode = #tpu.pipeline_mode<synchronous>, transform_indices = @transform_1, window_bounds = array<i64: 3, 32, 32>}, {pipeline_mode = #tpu.pipeline_mode<synchronous>, transform_indices = @transform_2, window_bounds = array<i64: 1, 32>}, {transform_indices = @transform_3, window_bounds = array<i64: 1, 16, 32>}]} {
    %c0 = arith.constant 0 : index
    %c0_0 = arith.constant 0 : index
    %c0_1 = arith.constant 0 : index
    %0 = vector.load %arg1[%c0, %c0_0, %c0_1] : memref<1x16x32xf32, #tpu.memory_space<vmem>>, vector<1x16x32xf32>
    %1 = vector.shape_cast %0 : vector<1x16x32xf32> to vector<16x32xf32>
    %2 = vector.extract_strided_slice %1 {offsets = [15, 0], sizes = [1, 32], strides = [1, 1]} : vector<16x32xf32> to vector<1x32xf32>
    %3 = vector.extract_strided_slice %1 {offsets = [0, 0], sizes = [1, 32], strides = [1, 1]} : vector<16x32xf32> to vector<1x32xf32>
    %4 = tpu.concatenate %2, %1, %3 in 0 : vector<1x32xf32>, vector<16x32xf32>, vector<1x32xf32> -> vector<18x32xf32>
    %c0_2 = arith.constant 0 : index
    %c0_3 = arith.constant 0 : index
    %c0_4 = arith.constant 0 : index
    %5 = vector.load %arg2[%c0_2, %c0_3, %c0_4] : memref<3x32x32xbf16, #tpu.memory_space<vmem>>, vector<3x32x32xbf16>
    %6 = vector.extract_strided_slice %4 {offsets = [0, 0], sizes = [16, 32], strides = [1, 1]} : vector<18x32xf32> to vector<16x32xf32>
    %7 = arith.truncf %6 : vector<16x32xf32> to vector<16x32xbf16>
    %8 = vector.extract_strided_slice %5 {offsets = [0, 0, 0], sizes = [1, 32, 32], strides = [1, 1, 1]} : vector<3x32x32xbf16> to vector<1x32x32xbf16>
    %9 = vector.shape_cast %8 : vector<1x32x32xbf16> to vector<32x32xbf16>
    %cst = arith.constant dense<0.000000e+00> : vector<16x32xf32>
    %10 = tpu.matmul %7, %9, %cst {dimension_numbers = #tpu.dot_dimension_numbers<[1], [0], [0], [1], [0, 0, 1, 1], [], []>} : vector<16x32xbf16>, vector<32x32xbf16>, vector<16x32xf32> -> vector<16x32xf32>
    %11 = vector.extract_strided_slice %4 {offsets = [1, 0], sizes = [16, 32], strides = [1, 1]} : vector<18x32xf32> to vector<16x32xf32>
    %12 = arith.truncf %11 : vector<16x32xf32> to vector<16x32xbf16>
    %13 = vector.extract_strided_slice %5 {offsets = [1, 0, 0], sizes = [1, 32, 32], strides = [1, 1, 1]} : vector<3x32x32xbf16> to vector<1x32x32xbf16>
    %14 = vector.shape_cast %13 : vector<1x32x32xbf16> to vector<32x32xbf16>
    %cst_5 = arith.constant dense<0.000000e+00> : vector<16x32xf32>
    %15 = tpu.matmul %12, %14, %cst_5 {dimension_numbers = #tpu.dot_dimension_numbers<[1], [0], [0], [1], [0, 0, 1, 1], [], []>} : vector<16x32xbf16>, vector<32x32xbf16>, vector<16x32xf32> -> vector<16x32xf32>
    %16 = arith.addf %10, %15 : vector<16x32xf32>
    %17 = vector.extract_strided_slice %4 {offsets = [2, 0], sizes = [16, 32], strides = [1, 1]} : vector<18x32xf32> to vector<16x32xf32>
    %18 = arith.truncf %17 : vector<16x32xf32> to vector<16x32xbf16>
    %19 = vector.extract_strided_slice %5 {offsets = [2, 0, 0], sizes = [1, 32, 32], strides = [1, 1, 1]} : vector<3x32x32xbf16> to vector<1x32x32xbf16>
    %20 = vector.shape_cast %19 : vector<1x32x32xbf16> to vector<32x32xbf16>
    %cst_6 = arith.constant dense<0.000000e+00> : vector<16x32xf32>
    %21 = tpu.matmul %18, %20, %cst_6 {dimension_numbers = #tpu.dot_dimension_numbers<[1], [0], [0], [1], [0, 0, 1, 1], [], []>} : vector<16x32xbf16>, vector<32x32xbf16>, vector<16x32xf32> -> vector<16x32xf32>
    %22 = arith.addf %16, %21 : vector<16x32xf32>
    %c0_7 = arith.constant 0 : index
    %c0_8 = arith.constant 0 : index
    %23 = vector.load %arg3[%c0_7, %c0_8] : memref<1x32xf32, #tpu.memory_space<vmem>>, vector<1x32xf32>
    %24 = vector.broadcast %23 : vector<1x32xf32> to vector<16x32xf32>
    %25 = arith.addf %22, %24 : vector<16x32xf32>
    %26 = vector.shape_cast %25 : vector<16x32xf32> to vector<1x16x32xf32>
    %c0_9 = arith.constant 0 : index
    %c0_10 = arith.constant 0 : index
    %c0_11 = arith.constant 0 : index
    %27 = vector.load %arg4[%c0_9, %c0_10, %c0_11] : memref<1x16x32xf32, #tpu.memory_space<vmem>>, vector<1x16x32xf32>
    tpu.vector_store %arg4[%c0_9, %c0_10, %c0_11], %26 {strides = array<i32>} : memref<1x16x32xf32, #tpu.memory_space<vmem>>, vector<1x16x32xf32>,
    return
  }
  func.func @transform_0(%arg0: i32) -> (i32, i32, i32) {
    %c0_i32 = arith.constant 0 : i32
    %c0_i32_0 = arith.constant 0 : i32
    %c0_i32_1 = arith.constant 0 : i32
    return %arg0, %c0_i32, %c0_i32_0 : i32, i32, i32
  }
  func.func @transform_1(%arg0: i32) -> (i32, i32, i32) {
    %c0_i32 = arith.constant 0 : i32
    %c0_i32_0 = arith.constant 0 : i32
    %c0_i32_1 = arith.constant 0 : i32
    %c0_i32_2 = arith.constant 0 : i32
    return %c0_i32, %c0_i32_0, %c0_i32_1 : i32, i32, i32
  }
  func.func @transform_2(%arg0: i32) -> (i32, i32) {
    %c0_i32 = arith.constant 0 : i32
    %c0_i32_0 = arith.constant 0 : i32
    %c0_i32_1 = arith.constant 0 : i32
    return %c0_i32, %c0_i32_0 : i32, i32
  }
  func.func @transform_3(%arg0: i32) -> (i32, i32, i32) {
    %c0_i32 = arith.constant 0 : i32
    %c0_i32_0 = arith.constant 0 : i32
    %c0_i32_1 = arith.constant 0 : i32
    return %arg0, %c0_i32, %c0_i32_0 : i32, i32, i32
  }
}

</mosaic_0001>

<llo_original>
// kernel: _lambda_.17
$region0: #{_lambda_.17}
  #allocation0 [shape = 'u32[]', space=smem, size = 0x4, offset = 0x4, fixed_abs, tag = 'smem constant byte address 0x4 - core index']
  #allocation1 [shape = 'u32[72,128]{1,0:T(1,128)}', space=vmem, size = 0x9000, scoped, tag = 'internal scratch']
  %s0 = inlined_call_operand.vmem [shape: f32[2,16,4], index: 0, kind: input, shape index: {}]
  %s1 = inlined_call_operand.hbm [shape: f32[16,16], index: 1, kind: input, shape index: {}]
  %s2 = inlined_call_operand.vmem [shape: f32[2,16,4], index: 2, kind: output, shape index: {0}]
  %s3 = inlined_call_operand.hbm [shape: f32[2,16,4], index: 3, kind: output, shape index: {1}]
  %4 = xla_tuple %s2, %s3
  %s5 = sld [smem:[#allocation0]]
  $region53: #{_lambda_.17} parent=0
    _
  %s7 = ssub.s32 1, %s5
  %s8 = scalar_select 0, %s7, %s5
  $region1: #{_lambda_.17} parent=0
    #allocation2 [shape = 'u8[8192]{0}', space=vmem, size = 0x2000, scoped, tag = 'input window, operand 1, single buffered']
    #allocation3 [shape = 's32[2]{0}', space=sflag, size = 0x8, scoped, tag = 'scoped memory for _lambda_.17']
    #allocation4 [shape = 's32[2]{0}', space=sflag, size = 0x8, scoped, tag = 'scoped memory for _lambda_.17']
    #allocation5 [shape = 'u8[16384]{0}', space=vmem, size = 0x4000, scoped, tag = 'output window, operand 1']
    %9 = vsyncpa [#allocation3], 0
    %10 = vsyncpa [#allocation4], 0
    %s11 = scalar_lea.sflag [#allocation4], 1
    %12 = vsyncpa %s11, 0
    loop: start=0, step=1, limit=4
    $region2: #{_lambda_.17} parent=1 // loop_pre_header
      _
    $region3: #{_lambda_.17} parent=1 // loop_header
      %s14 = sphi 0, %s18
      %p15 = scmp.ge.s32.totalorder %s14, 4
      %s24 = sphi 0, %s26
      %s27 = sphi 0, %s24
      %s28 = sphi 0, %s27
      %s44 = sphi 0, %s28
      %s48 = sphi 0, %s48
      %s50 = sphi 0, %s48
      %s51 = sphi 0, %s50
      %s65 = sphi 0, %s51
      %s71 = sphi 0, %s73
      %s74 = sphi 0, %s71
      %s75 = sphi 0, %s74
      %s91 = sphi 0, %s75
      %s97 = sphi 0, %s99
      %s100 = sphi 0, %s97
      %s101 = sphi 0, %s100
      %s117 = sphi 0, %s101
    $region4: #{_lambda_.17} parent=1 // loop_header_branch
      %17 = sbr.rel (%p15) target = $region8
    $region5: #{_lambda_.17} parent=1 // loop_body
      %s19 = ssub.s32 %s14, 1
      %s20 = ssub.s32 %s14, 2
      %s21 = sadd.s32 %s14, 1
      %s22 = ssub.s32 %s14, %s21
      %p23 = scmp.eq.s32.totalorder %s22, 0
      %s25 = sadd.s32 %s24, 1
      %s26 = scalar_select %p23, %s24, %s25
      %p29 = pneg %p23
      %p30 = scmp.eq.s32.totalorder %s14, 1
      %p31 = por %p29, %p30
      %p32 = scmp.ne.s32.totalorder %s24, %s27
      %p33 = scmp.eq.s32.totalorder %s14, 0
      %p34 = por %p32, %p33
      %p35 = scmp.ne.s32.totalorder %s24, %s27
      %p36 = scmp.eq.s32.totalorder %s19, 1
      %p37 = por %p35, %p36
      %p38 = scmp.ne.s32.totalorder %s27, %s28
      %p39 = scmp.eq.s32.totalorder %s19, 0
      %p40 = por %p38, %p39
      %p41 = scmp.ne.s32.totalorder %s27, %s28
      %p42 = scmp.eq.s32.totalorder %s20, 1
      %p43 = por %p41, %p42
      %p45 = scmp.ne.s32.totalorder %s28, %s44
      %p46 = scmp.eq.s32.totalorder %s20, 0
      %p47 = por %p45, %p46
      %s49 = sadd.s32 %s48, 1
      %p52 = scmp.eq.s32.totalorder %s14, 1
      %p53 = scmp.ne.s32.totalorder %s48, %s50
      %p54 = scmp.eq.s32.totalorder %s14, 0
      %p55 = por %p53, %p54
      %p56 = scmp.ne.s32.totalorder %s48, %s50
      %p57 = scmp.eq.s32.totalorder %s19, 1
      %p58 = por %p56, %p57
      %p59 = scmp.ne.s32.totalorder %s50, %s51
      %p60 = scmp.eq.s32.totalorder %s19, 0
      %p61 = por %p59, %p60
      %p62 = scmp.ne.s32.totalorder %s50, %s51
      %p63 = scmp.eq.s32.totalorder %s20, 1
      %p64 = por %p62, %p63
      %p66 = scmp.ne.s32.totalorder %s51, %s65
      %p67 = scmp.eq.s32.totalorder %s20, 0
      %p68 = por %p66, %p67
      %s69 = ssub.s32 %s14, %s21
      %p70 = scmp.eq.s32.totalorder %s69, 0
      %s72 = sadd.s32 %s71, 1
      %s73 = scalar_select %p70, %s71, %s72
      %p76 = pneg %p70
      %p77 = scmp.eq.s32.totalorder %s14, 1
      %p78 = por %p76, %p77
      %p79 = scmp.ne.s32.totalorder %s71, %s74
      %p80 = scmp.eq.s32.totalorder %s14, 0
      %p81 = por %p79, %p80
      %p82 = scmp.ne.s32.totalorder %s71, %s74
      %p83 = scmp.eq.s32.totalorder %s19, 1
      %p84 = por %p82, %p83
      %p85 = scmp.ne.s32.totalorder %s74, %s75
      %p86 = scmp.eq.s32.totalorder %s19, 0
      %p87 = por %p85, %p86
      %p88 = scmp.ne.s32.totalorder %s74, %s75
      %p89 = scmp.eq.s32.totalorder %s20, 1
      %p90 = por %p88, %p89
      %p92 = scmp.ne.s32.totalorder %s75, %s91
      %p93 = scmp.eq.s32.totalorder %s20, 0
      %p94 = por %p92, %p93
      %s95 = ssub.s32 %s14, %s21
      %p96 = scmp.eq.s32.totalorder %s95, 0
      %s98 = sadd.s32 %s97, 1
      %s99 = scalar_select %p96, %s97, %s98
      %p102 = pneg %p96
      %p103 = scmp.eq.s32.totalorder %s14, 1
      %p104 = por %p102, %p103
      %p105 = scmp.ne.s32.totalorder %s97, %s100
      %p106 = scmp.eq.s32.totalorder %s14, 0
      %p107 = por %p105, %p106
      %p108 = scmp.ne.s32.totalorder %s97, %s100
      %p109 = scmp.eq.s32.totalorder %s19, 1
      %p110 = por %p108, %p109
      %p111 = scmp.ne.s32.totalorder %s100, %s101
      %p112 = scmp.eq.s32.totalorder %s19, 0
      %p113 = por %p111, %p112
      %p114 = scmp.ne.s32.totalorder %s100, %s101
      %p115 = scmp.eq.s32.totalorder %s20, 1
      %p116 = por %p114, %p115
      %p118 = scmp.ne.s32.totalorder %s101, %s117
      %p119 = scmp.eq.s32.totalorder %s20, 0
      %p120 = por %p118, %p119
      %p121 = scmp.le.s32.totalorder 1, %s14
      %p122 = scmp.lt.s32.totalorder %s14, 3
      %p123 = pnand %p121, %p122
      %p124 = pneg %p123
      // Predicated region
      $region9: #{_lambda_.17} parent=5 // pred_check
        _
      $region10: #{_lambda_.17} parent=5 // pred_check_branch
        %126 = sbr.rel (%p123) target = $region12
      $region11: #{_lambda_.17} parent=5 // pred_region
        %s127 = ssub.s32 %s14, 1
        // Predicated region
        $region13: #{_lambda_.17} parent=11 // pred_check
          %p128 = pneg %p61
        $region14: #{_lambda_.17} parent=11 // pred_check_branch
          %130 = sbr.rel (%p128) target = $region16
        $region15: #{_lambda_.17} parent=11 // pred_region
          %132 = vsyncadd [#allocation3], 0
          %s133 = sshll.u32 %s1, 4
          %s134 = int_to_ptr.hbm [resolvable:$true] %s133
          %s135 = sshll.u32 [#allocation2], 4
          %s136 = int_to_ptr.vmem [resolvable:$true] %s135
          %141 = dma.hbm_to_vmem [thread:$0]  %s134, 256, %s136, [#allocation3], 128, 128, 8
        $region16: #{_lambda_.17} parent=11 // pred_fallthru
          _
      $region12: #{_lambda_.17} parent=5 // pred_fallthru
        _
      %p142 = scmp.lt.s32.totalorder %s14, 2
      // Predicated region
      $region17: #{_lambda_.17} parent=5 // pred_check
        %p143 = pneg %p142
      $region18: #{_lambda_.17} parent=5 // pred_check_branch
        %145 = sbr.rel (%p143) target = $region20
      $region19: #{_lambda_.17} parent=5 // pred_region
        // Predicated region
        $region21: #{_lambda_.17} parent=19 // pred_check
          %p146 = pneg %p34
        $region22: #{_lambda_.17} parent=19 // pred_check_branch
          %148 = sbr.rel (%p146) target = $region24
        $region23: #{_lambda_.17} parent=19 // pred_region
          %p149 = scmp.lt.s32.totalorder %s14, 1
          %s150 = scalar_select %p149, %s14, 1
          %s151 = smul.addr %s150, 2
          %s152 = smul.addr %s151, 8
          %s153 = scalar_lea.vmem %s0, %s152
        $region24: #{_lambda_.17} parent=19 // pred_fallthru
          _
      $region20: #{_lambda_.17} parent=5 // pred_fallthru
        _
      %p154 = scmp.le.s32.totalorder 1, %s14
      %p155 = scmp.lt.s32.totalorder %s14, 3
      %p156 = pnand %p154, %p155
      %p157 = pneg %p156
      // Predicated region
      $region25: #{_lambda_.17} parent=5 // pred_check
        _
      $region26: #{_lambda_.17} parent=5 // pred_check_branch
        %159 = sbr.rel (%p156) target = $region28
      $region27: #{_lambda_.17} parent=5 // pred_region
        %s160 = ssub.s32 %s14, 1
        // Predicated region
        $region29: #{_lambda_.17} parent=27 // pred_check
          %p161 = pneg %p61
        $region30: #{_lambda_.17} parent=27 // pred_check_branch
          %163 = sbr.rel (%p161) target = $region32
        $region31: #{_lambda_.17} parent=27 // pred_region
          %165 = dma.done [#allocation3], 256
        $region32: #{_lambda_.17} parent=27 // pred_fallthru
          _
        %p166 = scmp.lt.s32.totalorder %s19, 1
        %s167 = scalar_select %p166, %s19, 1
        %s168 = smul.addr %s167, 2
        %s169 = smul.addr %s168, 8
        %s170 = scalar_lea.vmem %s0, %s169
        %p171 = pneg %p40
        %p172 = pneg %p37
        %p173 = pneg %p61
        %p174 = pneg %p58
        %p175 = pneg %p87
        %p176 = pneg %p84
        %p177 = scmp.lt.s32.totalorder %s19, 1
        %s178 = scalar_select %p177, %s19, 1
        %s179 = smul.addr %s178, 2
        %s180 = smul.addr %s179, 8
        %s181 = scalar_lea.vmem %s2, %s180
        %p182 = pneg %p113
        %p183 = pneg %p110
        %s184 = sand.u32 %s100, 1
        %s185 = scalar_lea.sflag [#allocation4], %s184
        %s186 = sand.u32 %s100, 1
        %s187 = smul.addr %s186, 16
        %s188 = scalar_lea.vmem [#allocation5], %s187
        %p189 = scmp.lt.s32.totalorder %s19, 1
        %s190 = scalar_select %p189, %s19, 1
        %s191 = smul.addr %s190, 2
        %s192 = smul.addr %s191, 8
        %s193 = scalar_lea.vmem %s0, %s192
        %p194 = scmp.lt.s32.totalorder %s19, 1
        %s195 = scalar_select %p194, %s19, 1
        %s196 = smul.addr %s195, 2
        %s197 = smul.addr %s196, 8
        %s198 = scalar_lea.vmem %s2, %s197
        %v199 = vld [vmem:[%s193] sm:$0xff]
        %v200 = vld [vmem:[%s193 + $0x8] sm:$0xff]
        %v201 = vld [vmem:[#allocation2] sm:$0xff]
        %v202 = vld [vmem:[#allocation2 + $0x8] sm:$0xff]
        %vm203 = vcmask 130048
        %v205 = vsel %vm203, %v201, 0
        %v208 = vsel %vm203, %v202, 0
        %210 = vmatpush.msra.mxu0 0.0
        %211 = vmatpush.msra.mxu0 0.0
        %212 = vmatpush.msra.mxu0 0.0
        %213 = vmatpush.msra.mxu0 0.0
        %214 = vmatpush.msra.mxu0 0.0
        %215 = vmatpush.msra.mxu0 0.0
        %216 = vmatpush.msra.mxu0 0.0
        %217 = vmatpush.msra.mxu0 0.0
        %218 = vmatpush.msra.mxu0 0.0
        %219 = vmatpush.msra.mxu0 0.0
        %220 = vmatpush.msra.mxu0 0.0
        %221 = vmatpush.msra.mxu0 0.0
        %222 = vmatpush.msra.mxu0 0.0
        %223 = vmatpush.msra.mxu0 0.0
        %224 = vmatpush.msra.mxu0 %v200
        %225 = vmatpush.msra.mxu0 %v199
        %226 = vmatmul.f32.gmra.mxu0 %v205
        %v227 = vpop.f32.mrf.mxu0
        %v228 = vadd.f32 0.0, %v227
        %229 = vmatmul.f32.gmra.mxu0 %v208
        %v230 = vpop.f32.mrf.mxu0
        %v231 = vadd.f32 0.0, %v230
        %232 = vdwg.mxu0
        %vm233 = vcmask 31744
        %234 = vst.msk [vmem:[%s188] sm:$0xff] %vm233, %v228
        %235 = vst.msk [vmem:[%s188 + $0x8] sm:$0xff] %vm233, %v231
        %v236 = vsub.f32 %v199, %v228
        %v237 = vsub.f32 %v200, %v231
        %238 = vst.msk [vmem:[%s198] sm:$0xff] %vm233, %v236
        %239 = vst.msk [vmem:[%s198 + $0x8] sm:$0xff] %vm233, %v237
        %p240 = scmp.lt.s32.totalorder %s19, 1
        %s241 = scalar_select %p240, %s19, 1
        %s242 = smul.addr %s241, 2
        %s243 = smul.addr %s242, 8
        %s244 = scalar_lea.vmem %s2, %s243
        %s245 = sand.u32 %s100, 1
        %s246 = scalar_lea.sflag [#allocation4], %s245
        %s247 = sand.u32 %s100, 1
        %s248 = smul.addr %s247, 16
        %s249 = scalar_lea.vmem [#allocation5], %s248
        // Predicated region
        $region33: #{_lambda_.17} parent=27 // pred_check
          %p250 = pneg %p84
        $region34: #{_lambda_.17} parent=27 // pred_check_branch
          %252 = sbr.rel (%p250) target = $region36
        $region35: #{_lambda_.17} parent=27 // pred_region
          _
        $region36: #{_lambda_.17} parent=27 // pred_fallthru
          _
        // Predicated region
        $region37: #{_lambda_.17} parent=27 // pred_check
          %p253 = pneg %p110
        $region38: #{_lambda_.17} parent=27 // pred_check_branch
          %255 = sbr.rel (%p253) target = $region40
        $region39: #{_lambda_.17} parent=27 // pred_region
          %257 = vsyncadd %s246, 0
          %s258 = smul.addr %s19, 2
          %s259 = smul.addr %s258, 8
          %s260 = scalar_lea.hbm %s3, %s259
          %s261 = sshll.u32 %s249, 4
          %s262 = int_to_ptr.vmem [resolvable:$true] %s261
          %s263 = sshll.u32 %s260, 4
          %s264 = int_to_ptr.hbm [resolvable:$true] %s263
          %269 = dma.vmem_to_hbm [thread:$0]  %s262, 256, %s264, %s246, 128, 128, 8
        $region40: #{_lambda_.17} parent=27 // pred_fallthru
          _
      $region28: #{_lambda_.17} parent=5 // pred_fallthru
        _
      %p270 = scmp.le.s32.totalorder 2, %s14
      // Predicated region
      $region41: #{_lambda_.17} parent=5 // pred_check
        %p271 = pneg %p270
      $region42: #{_lambda_.17} parent=5 // pred_check_branch
        %273 = sbr.rel (%p271) target = $region44
      $region43: #{_lambda_.17} parent=5 // pred_region
        %s274 = ssub.s32 %s14, 2
        // Predicated region
        $region45: #{_lambda_.17} parent=43 // pred_check
          %p275 = pneg %p90
        $region46: #{_lambda_.17} parent=43 // pred_check_branch
          %277 = sbr.rel (%p275) target = $region48
        $region47: #{_lambda_.17} parent=43 // pred_region
          %p278 = scmp.lt.s32.totalorder %s20, 1
          %s279 = scalar_select %p278, %s20, 1
          %s280 = smul.addr %s279, 2
          %s281 = smul.addr %s280, 8
          %s282 = scalar_lea.vmem %s2, %s281
        $region48: #{_lambda_.17} parent=43 // pred_fallthru
          _
        // Predicated region
        $region49: #{_lambda_.17} parent=43 // pred_check
          %p283 = pneg %p116
        $region50: #{_lambda_.17} parent=43 // pred_check_branch
          %285 = sbr.rel (%p283) target = $region52
        $region51: #{_lambda_.17} parent=43 // pred_region
          %s286 = sand.u32 %s101, 1
          %s287 = scalar_lea.sflag [#allocation4], %s286
          %s288 = sand.u32 %s101, 1
          %s289 = smul.addr %s288, 16
          %s290 = scalar_lea.vmem [#allocation5], %s289
          %292 = dma.done %s287, 256
        $region52: #{_lambda_.17} parent=43 // pred_fallthru
          _
      $region44: #{_lambda_.17} parent=5 // pred_fallthru
        _
    $region6: #{_lambda_.17} parent=1 // loop_footer
      %s18 = sadd.s32 1, %s14
    $region7: #{_lambda_.17} parent=1 // loop_footer_branch
      %13 = sbr.rel target = $region3
    $region8: #{_lambda_.17} parent=1 // loop_exit
      _
    %293 = vsyncpa [#allocation3], 1
    %s294 = scalar_lea.sflag [#allocation3], 1
    %295 = vsyncpa %s294, 1
    %296 = vsyncpa [#allocation4], 1
    %s297 = scalar_lea.sflag [#allocation4], 1
    %298 = vsyncpa %s297, 1

// kernel: _lambda_.24
$region0: #{_lambda_.24}
  #allocation0 [shape = 'u32[]', space=smem, size = 0x4, offset = 0x4, fixed_abs, tag = 'smem constant byte address 0x4 - core index']
  #allocation1 [shape = 'u32[72,128]{1,0:T(1,128)}', space=vmem, size = 0x9000, scoped, tag = 'internal scratch']
  %s0 = inlined_call_operand.vmem [shape: f32[32,32], index: 0, kind: input, shape index: {}]
  %s1 = inlined_call_operand.vmem [shape: bf16[32,96], index: 1, kind: input, shape index: {}]
  %s2 = inlined_call_operand.vmem [shape: f32[1,96], index: 2, kind: input, shape index: {}]
  %s3 = inlined_call_operand.vmem [shape: f32[32,32], index: 3, kind: output, shape index: {0}]
  %s4 = inlined_call_operand.vmem [shape: f32[32,32], index: 4, kind: output, shape index: {1}]
  %s5 = inlined_call_operand.vmem [shape: f32[32,32], index: 5, kind: output, shape index: {2}]
  %6 = xla_tuple %s3, %s4, %s5
  %s7 = sld [smem:[#allocation0]]
  $region38: #{_lambda_.24} parent=0
    _
  %s9 = ssub.s32 1, %s7
  %s10 = scalar_select 0, %s9, %s7
  // Predicated region
  $region2: #{_lambda_.24} parent=0 // pred_check
    _
  $region3: #{_lambda_.24} parent=0 // pred_check_branch
    %12 = sbr.rel (0) target = $region5
  $region4: #{_lambda_.24} parent=0 // pred_region
    _
  $region5: #{_lambda_.24} parent=0 // pred_fallthru
    _
  // Predicated region
  $region6: #{_lambda_.24} parent=0 // pred_check
    _
  $region7: #{_lambda_.24} parent=0 // pred_check_branch
    %14 = sbr.rel (0) target = $region9
  $region8: #{_lambda_.24} parent=0 // pred_region
    _
  $region9: #{_lambda_.24} parent=0 // pred_fallthru
    _
  // Predicated region
  $region10: #{_lambda_.24} parent=0 // pred_check
    _
  $region11: #{_lambda_.24} parent=0 // pred_check_branch
    %16 = sbr.rel (0) target = $region13
  $region12: #{_lambda_.24} parent=0 // pred_region
    _
  $region13: #{_lambda_.24} parent=0 // pred_fallthru
    _
  %v18 = vld [vmem:[%s0] sm:$0xff]
  %v19 = vld [vmem:[%s0 + $0x8] sm:$0xff]
  %v20 = vld [vmem:[%s0 + $0x10] sm:$0xff]
  %v21 = vld [vmem:[%s0 + $0x18] sm:$0xff]
  %v22 = vpack.c.bf16 %v19, %v18
  %v23 = vpack.c.bf16 %v21, %v20
  %v24 = vld [vmem:[%s1] sm:$0xf]
  %v25 = vld [vmem:[%s1 + $0x4] sm:$0xf]
  %v26 = vld [vmem:[%s1 + $0x8] sm:$0xf]
  %v27 = vld [vmem:[%s1 + $0xc] sm:$0xf]
  %v28 = vld [vmem:[%s2] sm:$0x1]
  %v30 = vperm.slane %v28, 0
  %v36 = vunpack.c.l.b16 %v24
  %v37 = vunpack.c.l.b16 %v25
  %v38 = vunpack.c.l.b16 %v26
  %v39 = vunpack.c.l.b16 %v27
  %v40 = vpack.c.b16 %v37, %v36
  %v41 = vpack.c.b16 %v39, %v38
  %vm44 = vcmask 261120
  %v46 = vsel %vm44, %v22, 0
  %v49 = vsel %vm44, %v23, 0
  %51 = vmatpush.bf16.msra.mxu0 0
  %52 = vmatpush.bf16.msra.mxu0 0
  %53 = vmatpush.bf16.msra.mxu0 0
  %54 = vmatpush.bf16.msra.mxu0 0
  %55 = vmatpush.bf16.msra.mxu0 0
  %56 = vmatpush.bf16.msra.mxu0 0
  %57 = vmatpush.bf16.msra.mxu0 %v41
  %58 = vmatpush.bf16.msra.mxu0 %v40
  %59 = vmatmul.bf16.gmra.mxu0 %v46
  %v60 = vpop.f32.mrf.mxu0
  %v61 = vadd.f32 %v30, %v60
  %v62 = vpop.f32.mrf.mxu0
  %v63 = vadd.f32 %v30, %v62
  %64 = vmatmul.bf16.gmra.mxu0 %v49
  %v65 = vpop.f32.mrf.mxu0
  %v66 = vadd.f32 %v30, %v65
  %v67 = vpop.f32.mrf.mxu0
  %v68 = vadd.f32 %v30, %v67
  %69 = vdwg.mxu0
  %70 = vst.msk [vmem:[%s3] sm:$0xff] %vm44, %v61
  %71 = vst.msk [vmem:[%s3 + $0x8] sm:$0xff] %vm44, %v63
  %72 = vst.msk [vmem:[%s3 + $0x10] sm:$0xff] %vm44, %v66
  %73 = vst.msk [vmem:[%s3 + $0x18] sm:$0xff] %vm44, %v68
  %78 = vrot.lane.b32.xlu0 %v61, 96
  %v79 = vpop.permute.xlu0 %78
  %80 = vrot.lane.b32.xlu0 %v63, 96
  %v81 = vpop.permute.xlu0 %80
  %82 = vrot.lane.b32.xlu0 %v66, 96
  %v83 = vpop.permute.xlu0 %82
  %84 = vrot.lane.b32.xlu0 %v68, 96
  %v85 = vpop.permute.xlu0 %84
  %90 = vst.msk [vmem:[%s4] sm:$0xff] %vm44, %v79
  %91 = vst.msk [vmem:[%s4 + $0x8] sm:$0xff] %vm44, %v81
  %92 = vst.msk [vmem:[%s4 + $0x10] sm:$0xff] %vm44, %v83
  %93 = vst.msk [vmem:[%s4 + $0x18] sm:$0xff] %vm44, %v85
  %94 = vrot.lane.b32.xlu0 %v61, 64
  %v95 = vpop.permute.xlu0 %94
  %96 = vrot.lane.b32.xlu0 %v63, 64
  %v97 = vpop.permute.xlu0 %96
  %98 = vrot.lane.b32.xlu0 %v66, 64
  %v99 = vpop.permute.xlu0 %98
  %100 = vrot.lane.b32.xlu0 %v68, 64
  %v101 = vpop.permute.xlu0 %100
  %106 = vst.msk [vmem:[%s5] sm:$0xff] %vm44, %v95
  %107 = vst.msk [vmem:[%s5 + $0x8] sm:$0xff] %vm44, %v97
  %108 = vst.msk [vmem:[%s5 + $0x10] sm:$0xff] %vm44, %v99
  %109 = vst.msk [vmem:[%s5 + $0x18] sm:$0xff] %vm44, %v101
  // Predicated region
  $region14: #{_lambda_.24} parent=0 // pred_check
    _
  $region15: #{_lambda_.24} parent=0 // pred_check_branch
    %111 = sbr.rel (0) target = $region17
  $region16: #{_lambda_.24} parent=0 // pred_region
    _
  $region17: #{_lambda_.24} parent=0 // pred_fallthru
    _
  // Predicated region
  $region18: #{_lambda_.24} parent=0 // pred_check
    _
  $region19: #{_lambda_.24} parent=0 // pred_check_branch
    %113 = sbr.rel (0) target = $region21
  $region20: #{_lambda_.24} parent=0 // pred_region
    _
  $region21: #{_lambda_.24} parent=0 // pred_fallthru
    _
  // Predicated region
  $region22: #{_lambda_.24} parent=0 // pred_check
    _
  $region23: #{_lambda_.24} parent=0 // pred_check_branch
    %115 = sbr.rel (0) target = $region25
  $region24: #{_lambda_.24} parent=0 // pred_region
    _
  $region25: #{_lambda_.24} parent=0 // pred_fallthru
    _
  // Predicated region
  $region26: #{_lambda_.24} parent=0 // pred_check
    _
  $region27: #{_lambda_.24} parent=0 // pred_check_branch
    %117 = sbr.rel (0) target = $region29
  $region28: #{_lambda_.24} parent=0 // pred_region
    _
  $region29: #{_lambda_.24} parent=0 // pred_fallthru
    _
  // Predicated region
  $region30: #{_lambda_.24} parent=0 // pred_check
    _
  $region31: #{_lambda_.24} parent=0 // pred_check_branch
    %119 = sbr.rel (0) target = $region33
  $region32: #{_lambda_.24} parent=0 // pred_region
    _
  $region33: #{_lambda_.24} parent=0 // pred_fallthru
    _
  // Predicated region
  $region34: #{_lambda_.24} parent=0 // pred_check
    _
  $region35: #{_lambda_.24} parent=0 // pred_check_branch
    %121 = sbr.rel (0) target = $region37
  $region36: #{_lambda_.24} parent=0 // pred_region
    _
  $region37: #{_lambda_.24} parent=0 // pred_fallthru
    _

// kernel: _lambda_.23
$region0: #{_lambda_.23}
  #allocation0 [shape = 'u32[]', space=smem, size = 0x4, offset = 0x4, fixed_abs, tag = 'smem constant byte address 0x4 - core index']
  #allocation1 [shape = 'u32[72,128]{1,0:T(1,128)}', space=vmem, size = 0x9000, scoped, tag = 'internal scratch']
  %s0 = inlined_call_operand.vmem [shape: f32[2,16,4], index: 0, kind: input, shape index: {}]
  %s1 = inlined_call_operand.hbm [shape: bf16[3,4,32], index: 1, kind: input, shape index: {}]
  %s2 = inlined_call_operand.vmem [shape: f32[1,32], index: 2, kind: input, shape index: {}]
  %s3 = inlined_call_operand.vmem [shape: f32[1,16,32], index: 3, kind: input, shape index: {}]
  %s4 = inlined_call_operand.vmem [shape: f32[2,16,32], index: 4, kind: output, shape index: {}]
  %s5 = sld [smem:[#allocation0]]
  $region53: #{_lambda_.23} parent=0
    _
  %s7 = ssub.s32 1, %s5
  %s8 = scalar_select 0, %s7, %s5
  $region1: #{_lambda_.23} parent=0
    #allocation2 [shape = 'u8[3072]{0}', space=vmem, size = 0xc00, scoped, tag = 'input window, operand 1, single buffered']
    #allocation3 [shape = 's32[2]{0}', space=sflag, size = 0x8, scoped, tag = 'scoped memory for _lambda_.23']
    %9 = vsyncpa [#allocation3], 0
    loop: start=0, step=1, limit=4
    $region2: #{_lambda_.23} parent=1 // loop_pre_header
      _
    $region3: #{_lambda_.23} parent=1 // loop_header
      %s11 = sphi 0, %s15
      %p12 = scmp.ge.s32.totalorder %s11, 4
      %s21 = sphi 0, %s23
      %s24 = sphi 0, %s21
      %s25 = sphi 0, %s24
      %s41 = sphi 0, %s25
      %s45 = sphi 0, %s45
      %s47 = sphi 0, %s45
      %s48 = sphi 0, %s47
      %s62 = sphi 0, %s48
      %s66 = sphi 0, %s66
      %s68 = sphi 0, %s66
      %s69 = sphi 0, %s68
      %s83 = sphi 0, %s69
      %s87 = sphi 0, %s87
      %s89 = sphi 0, %s87
      %s90 = sphi 0, %s89
      %s104 = sphi 0, %s90
      %s110 = sphi 0, %s112
      %s113 = sphi 0, %s110
      %s114 = sphi 0, %s113
      %s130 = sphi 0, %s114
    $region4: #{_lambda_.23} parent=1 // loop_header_branch
      %14 = sbr.rel (%p12) target = $region8
    $region5: #{_lambda_.23} parent=1 // loop_body
      %s16 = ssub.s32 %s11, 1
      %s17 = ssub.s32 %s11, 2
      %s18 = sadd.s32 %s11, 1
      %s19 = ssub.s32 %s11, %s18
      %p20 = scmp.eq.s32.totalorder %s19, 0
      %s22 = sadd.s32 %s21, 1
      %s23 = scalar_select %p20, %s21, %s22
      %p26 = pneg %p20
      %p27 = scmp.eq.s32.totalorder %s11, 1
      %p28 = por %p26, %p27
      %p29 = scmp.ne.s32.totalorder %s21, %s24
      %p30 = scmp.eq.s32.totalorder %s11, 0
      %p31 = por %p29, %p30
      %p32 = scmp.ne.s32.totalorder %s21, %s24
      %p33 = scmp.eq.s32.totalorder %s16, 1
      %p34 = por %p32, %p33
      %p35 = scmp.ne.s32.totalorder %s24, %s25
      %p36 = scmp.eq.s32.totalorder %s16, 0
      %p37 = por %p35, %p36
      %p38 = scmp.ne.s32.totalorder %s24, %s25
      %p39 = scmp.eq.s32.totalorder %s17, 1
      %p40 = por %p38, %p39
      %p42 = scmp.ne.s32.totalorder %s25, %s41
      %p43 = scmp.eq.s32.totalorder %s17, 0
      %p44 = por %p42, %p43
      %s46 = sadd.s32 %s45, 1
      %p49 = scmp.eq.s32.totalorder %s11, 1
      %p50 = scmp.ne.s32.totalorder %s45, %s47
      %p51 = scmp.eq.s32.totalorder %s11, 0
      %p52 = por %p50, %p51
      %p53 = scmp.ne.s32.totalorder %s45, %s47
      %p54 = scmp.eq.s32.totalorder %s16, 1
      %p55 = por %p53, %p54
      %p56 = scmp.ne.s32.totalorder %s47, %s48
      %p57 = scmp.eq.s32.totalorder %s16, 0
      %p58 = por %p56, %p57
      %p59 = scmp.ne.s32.totalorder %s47, %s48
      %p60 = scmp.eq.s32.totalorder %s17, 1
      %p61 = por %p59, %p60
      %p63 = scmp.ne.s32.totalorder %s48, %s62
      %p64 = scmp.eq.s32.totalorder %s17, 0
      %p65 = por %p63, %p64
      %s67 = sadd.s32 %s66, 1
      %p70 = scmp.eq.s32.totalorder %s11, 1
      %p71 = scmp.ne.s32.totalorder %s66, %s68
      %p72 = scmp.eq.s32.totalorder %s11, 0
      %p73 = por %p71, %p72
      %p74 = scmp.ne.s32.totalorder %s66, %s68
      %p75 = scmp.eq.s32.totalorder %s16, 1
      %p76 = por %p74, %p75
      %p77 = scmp.ne.s32.totalorder %s68, %s69
      %p78 = scmp.eq.s32.totalorder %s16, 0
      %p79 = por %p77, %p78
      %p80 = scmp.ne.s32.totalorder %s68, %s69
      %p81 = scmp.eq.s32.totalorder %s17, 1
      %p82 = por %p80, %p81
      %p84 = scmp.ne.s32.totalorder %s69, %s83
      %p85 = scmp.eq.s32.totalorder %s17, 0
      %p86 = por %p84, %p85
      %s88 = sadd.s32 %s87, 1
      %p91 = scmp.eq.s32.totalorder %s11, 1
      %p92 = scmp.ne.s32.totalorder %s87, %s89
      %p93 = scmp.eq.s32.totalorder %s11, 0
      %p94 = por %p92, %p93
      %p95 = scmp.ne.s32.totalorder %s87, %s89
      %p96 = scmp.eq.s32.totalorder %s16, 1
      %p97 = por %p95, %p96
      %p98 = scmp.ne.s32.totalorder %s89, %s90
      %p99 = scmp.eq.s32.totalorder %s16, 0
      %p100 = por %p98, %p99
      %p101 = scmp.ne.s32.totalorder %s89, %s90
      %p102 = scmp.eq.s32.totalorder %s17, 1
      %p103 = por %p101, %p102
      %p105 = scmp.ne.s32.totalorder %s90, %s104
      %p106 = scmp.eq.s32.totalorder %s17, 0
      %p107 = por %p105, %p106
      %s108 = ssub.s32 %s11, %s18
      %p109 = scmp.eq.s32.totalorder %s108, 0
      %s111 = sadd.s32 %s110, 1
      %s112 = scalar_select %p109, %s110, %s111
      %p115 = pneg %p109
      %p116 = scmp.eq.s32.totalorder %s11, 1
      %p117 = por %p115, %p116
      %p118 = scmp.ne.s32.totalorder %s110, %s113
      %p119 = scmp.eq.s32.totalorder %s11, 0
      %p120 = por %p118, %p119
      %p121 = scmp.ne.s32.totalorder %s110, %s113
      %p122 = scmp.eq.s32.totalorder %s16, 1
      %p123 = por %p121, %p122
      %p124 = scmp.ne.s32.totalorder %s113, %s114
      %p125 = scmp.eq.s32.totalorder %s16, 0
      %p126 = por %p124, %p125
      %p127 = scmp.ne.s32.totalorder %s113, %s114
      %p128 = scmp.eq.s32.totalorder %s17, 1
      %p129 = por %p127, %p128
      %p131 = scmp.ne.s32.totalorder %s114, %s130
      %p132 = scmp.eq.s32.totalorder %s17, 0
      %p133 = por %p131, %p132
      %p134 = scmp.le.s32.totalorder 1, %s11
      %p135 = scmp.lt.s32.totalorder %s11, 3
      %p136 = pnand %p134, %p135
      %p137 = pneg %p136
      // Predicated region
      $region9: #{_lambda_.23} parent=5 // pred_check
        _
      $region10: #{_lambda_.23} parent=5 // pred_check_branch
        %139 = sbr.rel (%p136) target = $region12
      $region11: #{_lambda_.23} parent=5 // pred_region
        %s140 = ssub.s32 %s11, 1
        // Predicated region
        $region13: #{_lambda_.23} parent=11 // pred_check
          %p141 = pneg %p58
        $region14: #{_lambda_.23} parent=11 // pred_check_branch
          %143 = sbr.rel (%p141) target = $region16
        $region15: #{_lambda_.23} parent=11 // pred_region
          %145 = vsyncadd [#allocation3], 0
          %s146 = sshll.u32 %s1, 4
          %s147 = int_to_ptr.hbm [resolvable:$true] %s146
          %s148 = sshll.u32 [#allocation2], 4
          %s149 = int_to_ptr.vmem [resolvable:$true] %s148
          %154 = dma.hbm_to_vmem [thread:$0]  %s147, 96, %s149, [#allocation3], 32, 32, 2
        $region16: #{_lambda_.23} parent=11 // pred_fallthru
          _
        // Predicated region
        $region17: #{_lambda_.23} parent=11 // pred_check
          %p155 = pneg %p79
        $region18: #{_lambda_.23} parent=11 // pred_check_branch
          %157 = sbr.rel (%p155) target = $region20
        $region19: #{_lambda_.23} parent=11 // pred_region
          _
        $region20: #{_lambda_.23} parent=11 // pred_fallthru
          _
        // Predicated region
        $region21: #{_lambda_.23} parent=11 // pred_check
          %p158 = pneg %p100
        $region22: #{_lambda_.23} parent=11 // pred_check_branch
          %160 = sbr.rel (%p158) target = $region24
        $region23: #{_lambda_.23} parent=11 // pred_region
          _
        $region24: #{_lambda_.23} parent=11 // pred_fallthru
          _
      $region12: #{_lambda_.23} parent=5 // pred_fallthru
        _
      %p161 = scmp.lt.s32.totalorder %s11, 2
      // Predicated region
      $region25: #{_lambda_.23} parent=5 // pred_check
        %p162 = pneg %p161
      $region26: #{_lambda_.23} parent=5 // pred_check_branch
        %164 = sbr.rel (%p162) target = $region28
      $region27: #{_lambda_.23} parent=5 // pred_region
        // Predicated region
        $region29: #{_lambda_.23} parent=27 // pred_check
          %p165 = pneg %p31
        $region30: #{_lambda_.23} parent=27 // pred_check_branch
          %167 = sbr.rel (%p165) target = $region32
        $region31: #{_lambda_.23} parent=27 // pred_region
          %p168 = scmp.lt.s32.totalorder %s11, 1
          %s169 = scalar_select %p168, %s11, 1
          %s170 = smul.addr %s169, 2
          %s171 = smul.addr %s170, 8
          %s172 = scalar_lea.vmem %s0, %s171
        $region32: #{_lambda_.23} parent=27 // pred_fallthru
          _
      $region28: #{_lambda_.23} parent=5 // pred_fallthru
        _
      %p173 = scmp.le.s32.totalorder 1, %s11
      %p174 = scmp.lt.s32.totalorder %s11, 3
      %p175 = pnand %p173, %p174
      %p176 = pneg %p175
      // Predicated region
      $region33: #{_lambda_.23} parent=5 // pred_check
        _
      $region34: #{_lambda_.23} parent=5 // pred_check_branch
        %178 = sbr.rel (%p175) target = $region36
      $region35: #{_lambda_.23} parent=5 // pred_region
        %s179 = ssub.s32 %s11, 1
        // Predicated region
        $region37: #{_lambda_.23} parent=35 // pred_check
          %p180 = pneg %p58
        $region38: #{_lambda_.23} parent=35 // pred_check_branch
          %182 = sbr.rel (%p180) target = $region40
        $region39: #{_lambda_.23} parent=35 // pred_region
          %184 = dma.done [#allocation3], 96
        $region40: #{_lambda_.23} parent=35 // pred_fallthru
          _
        %p185 = scmp.lt.s32.totalorder %s16, 1
        %s186 = scalar_select %p185, %s16, 1
        %s187 = smul.addr %s186, 2
        %s188 = smul.addr %s187, 8
        %s189 = scalar_lea.vmem %s0, %s188
        %p190 = pneg %p37
        %p191 = pneg %p34
        %p192 = pneg %p58
        %p193 = pneg %p55
        %p194 = pneg %p79
        %p195 = pneg %p76
        %p196 = pneg %p100
        %p197 = pneg %p97
        %p198 = pneg %p126
        %p199 = pneg %p123
        %p200 = scmp.lt.s32.totalorder %s16, 1
        %s201 = scalar_select %p200, %s16, 1
        %s202 = smul.addr %s201, 2
        %s203 = smul.addr %s202, 8
        %s204 = scalar_lea.vmem %s4, %s203
        %p205 = scmp.lt.s32.totalorder %s16, 1
        %s206 = scalar_select %p205, %s16, 1
        %s207 = smul.addr %s206, 2
        %s208 = smul.addr %s207, 8
        %s209 = scalar_lea.vmem %s0, %s208
        %p210 = scmp.lt.s32.totalorder %s16, 1
        %s211 = scalar_select %p210, %s16, 1
        %s212 = smul.addr %s211, 2
        %s213 = smul.addr %s212, 8
        %s214 = scalar_lea.vmem %s4, %s213
        %v216 = vld [vmem:[%s3] sm:$0xff]
        %v217 = vld [vmem:[%s3 + $0x8] sm:$0xff]
        %v218 = vld [vmem:[%s209] sm:$0xff]
        %v219 = vld [vmem:[%s209 + $0x8] sm:$0xff]
        %v221 = vrot.slane %v219, 7
        %vm224 = vcmask 1040384
        %v225 = vrot.slane %v218, 7
        %v226 = vsel %vm224, %v225, %v221
        %v229 = vsel %vm224, %v221, %v225
        %v230 = vld [vmem:[#allocation2] sm:$0x3]
        %v231 = vld [vmem:[#allocation2 + $0x2] sm:$0x3]
        %v232 = vld [vmem:[#allocation2 + $0x4] sm:$0x3]
        %v233 = vpack.c.bf16 %v226, %v229
        %v234 = vpack.c.bf16 %v229, %v229
        %vm235 = vsmask.f32 7424
        %v237 = vshrl.u32 %v233, 16
        %v239 = vshll.u32 %v233, 16
        %v241 = vrot.slane %v239, 1
        %v242 = vor.u32 %v237, %v241
        %v244 = vshll.u32 %v234, 16
        %v246 = vrot.slane %v244, 1
        %v247 = vsel %vm235, %v242, %v246
        %vm248 = vcmask 31744
        %v250 = vsel %vm248, %v247, 0
        %vm252 = vcmask 1041408
        %v254 = vsel %vm252, %v231, 0
        %256 = vmatpush.bf16.msra.mxu0 0
        %257 = vmatpush.bf16.msra.mxu0 0
        %258 = vmatpush.bf16.msra.mxu0 0
        %259 = vmatpush.bf16.msra.mxu0 0
        %260 = vmatpush.bf16.msra.mxu0 0
        %261 = vmatpush.bf16.msra.mxu0 0
        %262 = vmatpush.bf16.msra.mxu0 0
        %263 = vmatpush.bf16.msra.mxu0 %v254
        %264 = vmatmul.bf16.gmra.mxu0 %v250
        %v265 = vpop.f32.mrf.mxu0
        %v266 = vadd.f32 0.0, %v265
        %v267 = vpop.f32.mrf.mxu0
        %v268 = vadd.f32 0.0, %v267
        %269 = vdwg.mxu0
        %v270 = vsel %vm248, %v233, 0
        %v273 = vsel %vm252, %v230, 0
        %275 = vmatpush.bf16.msra.mxu0 0
        %276 = vmatpush.bf16.msra.mxu0 0
        %277 = vmatpush.bf16.msra.mxu0 0
        %278 = vmatpush.bf16.msra.mxu0 0
        %279 = vmatpush.bf16.msra.mxu0 0
        %280 = vmatpush.bf16.msra.mxu0 0
        %281 = vmatpush.bf16.msra.mxu0 0
        %282 = vmatpush.bf16.msra.mxu0 %v273
        %283 = vmatmul.bf16.gmra.mxu0 %v270
        %v284 = vpop.f32.mrf.mxu0
        %v285 = vadd.f32 %v266, %v284
        %v286 = vpop.f32.mrf.mxu0
        %v287 = vadd.f32 %v268, %v286
        %288 = vdwg.mxu0
        %vm291 = vcmask 1046528
        %v292 = vrot.slane %v233, 1
        %v293 = vrot.slane %v234, 1
        %v294 = vsel %vm291, %v292, %v293
        %v296 = vsel %vm248, %v294, 0
        %v299 = vsel %vm252, %v232, 0
        %301 = vmatpush.bf16.msra.mxu0 0
        %302 = vmatpush.bf16.msra.mxu0 0
        %303 = vmatpush.bf16.msra.mxu0 0
        %304 = vmatpush.bf16.msra.mxu0 0
        %305 = vmatpush.bf16.msra.mxu0 0
        %306 = vmatpush.bf16.msra.mxu0 0
        %307 = vmatpush.bf16.msra.mxu0 0
        %308 = vmatpush.bf16.msra.mxu0 %v299
        %309 = vmatmul.bf16.gmra.mxu0 %v296
        %v310 = vpop.f32.mrf.mxu0
        %v311 = vadd.f32 0.0, %v310
        %v312 = vpop.f32.mrf.mxu0
        %v313 = vadd.f32 0.0, %v312
        %314 = vdwg.mxu0
        %v315 = vadd.f32 %v285, %v311
        %v316 = vadd.f32 %v287, %v313
        %v317 = vld [vmem:[%s2] sm:$0x1]
        %v319 = vperm.slane %v317, 0
        %v321 = vadd.f32 %v315, %v319
        %v322 = vadd.f32 %v316, %v319
        %v323 = vadd.f32 %v321, %v216
        %v324 = vadd.f32 %v322, %v217
        %vm325 = vcmask 261120
        %326 = vst.msk [vmem:[%s214] sm:$0xff] %vm325, %v323
        %327 = vst.msk [vmem:[%s214 + $0x8] sm:$0xff] %vm325, %v324
        %p328 = scmp.lt.s32.totalorder %s16, 1
        %s329 = scalar_select %p328, %s16, 1
        %s330 = smul.addr %s329, 2
        %s331 = smul.addr %s330, 8
        %s332 = scalar_lea.vmem %s4, %s331
        // Predicated region
        $region41: #{_lambda_.23} parent=35 // pred_check
          %p333 = pneg %p123
        $region42: #{_lambda_.23} parent=35 // pred_check_branch
          %335 = sbr.rel (%p333) target = $region44
        $region43: #{_lambda_.23} parent=35 // pred_region
          _
        $region44: #{_lambda_.23} parent=35 // pred_fallthru
          _
      $region36: #{_lambda_.23} parent=5 // pred_fallthru
        _
      %p336 = scmp.le.s32.totalorder 2, %s11
      // Predicated region
      $region45: #{_lambda_.23} parent=5 // pred_check
        %p337 = pneg %p336
      $region46: #{_lambda_.23} parent=5 // pred_check_branch
        %339 = sbr.rel (%p337) target = $region48
      $region47: #{_lambda_.23} parent=5 // pred_region
        %s340 = ssub.s32 %s11, 2
        // Predicated region
        $region49: #{_lambda_.23} parent=47 // pred_check
          %p341 = pneg %p129
        $region50: #{_lambda_.23} parent=47 // pred_check_branch
          %343 = sbr.rel (%p341) target = $region52
        $region51: #{_lambda_.23} parent=47 // pred_region
          %p344 = scmp.lt.s32.totalorder %s17, 1
          %s345 = scalar_select %p344, %s17, 1
          %s346 = smul.addr %s345, 2
          %s347 = smul.addr %s346, 8
          %s348 = scalar_lea.vmem %s4, %s347
        $region52: #{_lambda_.23} parent=47 // pred_fallthru
          _
      $region48: #{_lambda_.23} parent=5 // pred_fallthru
        _
    $region6: #{_lambda_.23} parent=1 // loop_footer
      %s15 = sadd.s32 1, %s11
    $region7: #{_lambda_.23} parent=1 // loop_footer_branch
      %10 = sbr.rel target = $region3
    $region8: #{_lambda_.23} parent=1 // loop_exit
      _
    %349 = vsyncpa [#allocation3], 1
    %s350 = scalar_lea.sflag [#allocation3], 1
    %351 = vsyncpa %s350, 1

// kernel: _lambda_.25
$region0: #{_lambda_.25}
  #allocation0 [shape = 'u32[]', space=smem, size = 0x4, offset = 0x4, fixed_abs, tag = 'smem constant byte address 0x4 - core index']
  #allocation1 [shape = 'u32[72,128]{1,0:T(1,128)}', space=vmem, size = 0x9000, scoped, tag = 'internal scratch']
  %s0 = inlined_call_operand.vmem [shape: f32[2,16,32], index: 0, kind: input, shape index: {}]
  %s1 = inlined_call_operand.vmem [shape: f32[2,16,32], index: 1, kind: input, shape index: {}]
  %s2 = inlined_call_operand.vmem [shape: f32[16,16], index: 2, kind: input, shape index: {}]
  %s3 = inlined_call_operand.vmem [shape: f32[16,16], index: 3, kind: input, shape index: {}]
  %s4 = inlined_call_operand.vmem [shape: f32[2,16,1], index: 4, kind: output, shape index: {}]
  %s5 = sld [smem:[#allocation0]]
  $region49: #{_lambda_.25} parent=0
    _
  %s7 = ssub.s32 1, %s5
  %s8 = scalar_select 0, %s7, %s5
  loop: start=0, step=1, limit=4
  $region2: #{_lambda_.25} parent=0 // loop_pre_header
    _
  $region3: #{_lambda_.25} parent=0 // loop_header
    %s10 = sphi 0, %s14
    %p11 = scmp.ge.s32.totalorder %s10, 4
    %s20 = sphi 0, %s22
    %s23 = sphi 0, %s20
    %s24 = sphi 0, %s23
    %s40 = sphi 0, %s24
    %s46 = sphi 0, %s48
    %s49 = sphi 0, %s46
    %s50 = sphi 0, %s49
    %s66 = sphi 0, %s50
    %s70 = sphi 0, %s70
    %s72 = sphi 0, %s70
    %s73 = sphi 0, %s72
    %s87 = sphi 0, %s73
    %s91 = sphi 0, %s91
    %s93 = sphi 0, %s91
    %s94 = sphi 0, %s93
    %s108 = sphi 0, %s94
    %s114 = sphi 0, %s116
    %s117 = sphi 0, %s114
    %s118 = sphi 0, %s117
    %s134 = sphi 0, %s118
  $region4: #{_lambda_.25} parent=0 // loop_header_branch
    %13 = sbr.rel (%p11) target = $region8
  $region5: #{_lambda_.25} parent=0 // loop_body
    %s15 = ssub.s32 %s10, 1
    %s16 = ssub.s32 %s10, 2
    %s17 = sadd.s32 %s10, 1
    %s18 = ssub.s32 %s10, %s17
    %p19 = scmp.eq.s32.totalorder %s18, 0
    %s21 = sadd.s32 %s20, 1
    %s22 = scalar_select %p19, %s20, %s21
    %p25 = pneg %p19
    %p26 = scmp.eq.s32.totalorder %s10, 1
    %p27 = por %p25, %p26
    %p28 = scmp.ne.s32.totalorder %s20, %s23
    %p29 = scmp.eq.s32.totalorder %s10, 0
    %p30 = por %p28, %p29
    %p31 = scmp.ne.s32.totalorder %s20, %s23
    %p32 = scmp.eq.s32.totalorder %s15, 1
    %p33 = por %p31, %p32
    %p34 = scmp.ne.s32.totalorder %s23, %s24
    %p35 = scmp.eq.s32.totalorder %s15, 0
    %p36 = por %p34, %p35
    %p37 = scmp.ne.s32.totalorder %s23, %s24
    %p38 = scmp.eq.s32.totalorder %s16, 1
    %p39 = por %p37, %p38
    %p41 = scmp.ne.s32.totalorder %s24, %s40
    %p42 = scmp.eq.s32.totalorder %s16, 0
    %p43 = por %p41, %p42
    %s44 = ssub.s32 %s10, %s17
    %p45 = scmp.eq.s32.totalorder %s44, 0
    %s47 = sadd.s32 %s46, 1
    %s48 = scalar_select %p45, %s46, %s47
    %p51 = pneg %p45
    %p52 = scmp.eq.s32.totalorder %s10, 1
    %p53 = por %p51, %p52
    %p54 = scmp.ne.s32.totalorder %s46, %s49
    %p55 = scmp.eq.s32.totalorder %s10, 0
    %p56 = por %p54, %p55
    %p57 = scmp.ne.s32.totalorder %s46, %s49
    %p58 = scmp.eq.s32.totalorder %s15, 1
    %p59 = por %p57, %p58
    %p60 = scmp.ne.s32.totalorder %s49, %s50
    %p61 = scmp.eq.s32.totalorder %s15, 0
    %p62 = por %p60, %p61
    %p63 = scmp.ne.s32.totalorder %s49, %s50
    %p64 = scmp.eq.s32.totalorder %s16, 1
    %p65 = por %p63, %p64
    %p67 = scmp.ne.s32.totalorder %s50, %s66
    %p68 = scmp.eq.s32.totalorder %s16, 0
    %p69 = por %p67, %p68
    %s71 = sadd.s32 %s70, 1
    %p74 = scmp.eq.s32.totalorder %s10, 1
    %p75 = scmp.ne.s32.totalorder %s70, %s72
    %p76 = scmp.eq.s32.totalorder %s10, 0
    %p77 = por %p75, %p76
    %p78 = scmp.ne.s32.totalorder %s70, %s72
    %p79 = scmp.eq.s32.totalorder %s15, 1
    %p80 = por %p78, %p79
    %p81 = scmp.ne.s32.totalorder %s72, %s73
    %p82 = scmp.eq.s32.totalorder %s15, 0
    %p83 = por %p81, %p82
    %p84 = scmp.ne.s32.totalorder %s72, %s73
    %p85 = scmp.eq.s32.totalorder %s16, 1
    %p86 = por %p84, %p85
    %p88 = scmp.ne.s32.totalorder %s73, %s87
    %p89 = scmp.eq.s32.totalorder %s16, 0
    %p90 = por %p88, %p89
    %s92 = sadd.s32 %s91, 1
    %p95 = scmp.eq.s32.totalorder %s10, 1
    %p96 = scmp.ne.s32.totalorder %s91, %s93
    %p97 = scmp.eq.s32.totalorder %s10, 0
    %p98 = por %p96, %p97
    %p99 = scmp.ne.s32.totalorder %s91, %s93
    %p100 = scmp.eq.s32.totalorder %s15, 1
    %p101 = por %p99, %p100
    %p102 = scmp.ne.s32.totalorder %s93, %s94
    %p103 = scmp.eq.s32.totalorder %s15, 0
    %p104 = por %p102, %p103
    %p105 = scmp.ne.s32.totalorder %s93, %s94
    %p106 = scmp.eq.s32.totalorder %s16, 1
    %p107 = por %p105, %p106
    %p109 = scmp.ne.s32.totalorder %s94, %s108
    %p110 = scmp.eq.s32.totalorder %s16, 0
    %p111 = por %p109, %p110
    %s112 = ssub.s32 %s10, %s17
    %p113 = scmp.eq.s32.totalorder %s112, 0
    %s115 = sadd.s32 %s114, 1
    %s116 = scalar_select %p113, %s114, %s115
    %p119 = pneg %p113
    %p120 = scmp.eq.s32.totalorder %s10, 1
    %p121 = por %p119, %p120
    %p122 = scmp.ne.s32.totalorder %s114, %s117
    %p123 = scmp.eq.s32.totalorder %s10, 0
    %p124 = por %p122, %p123
    %p125 = scmp.ne.s32.totalorder %s114, %s117
    %p126 = scmp.eq.s32.totalorder %s15, 1
    %p127 = por %p125, %p126
    %p128 = scmp.ne.s32.totalorder %s117, %s118
    %p129 = scmp.eq.s32.totalorder %s15, 0
    %p130 = por %p128, %p129
    %p131 = scmp.ne.s32.totalorder %s117, %s118
    %p132 = scmp.eq.s32.totalorder %s16, 1
    %p133 = por %p131, %p132
    %p135 = scmp.ne.s32.totalorder %s118, %s134
    %p136 = scmp.eq.s32.totalorder %s16, 0
    %p137 = por %p135, %p136
    %p138 = scmp.le.s32.totalorder 1, %s10
    %p139 = scmp.lt.s32.totalorder %s10, 3
    %p140 = pnand %p138, %p139
    %p141 = pneg %p140
    // Predicated region
    $region9: #{_lambda_.25} parent=5 // pred_check
      _
    $region10: #{_lambda_.25} parent=5 // pred_check_branch
      %143 = sbr.rel (%p140) target = $region12
    $region11: #{_lambda_.25} parent=5 // pred_region
      %s144 = ssub.s32 %s10, 1
      // Predicated region
      $region13: #{_lambda_.25} parent=11 // pred_check
        %p145 = pneg %p83
      $region14: #{_lambda_.25} parent=11 // pred_check_branch
        %147 = sbr.rel (%p145) target = $region16
      $region15: #{_lambda_.25} parent=11 // pred_region
        _
      $region16: #{_lambda_.25} parent=11 // pred_fallthru
        _
      // Predicated region
      $region17: #{_lambda_.25} parent=11 // pred_check
        %p148 = pneg %p104
      $region18: #{_lambda_.25} parent=11 // pred_check_branch
        %150 = sbr.rel (%p148) target = $region20
      $region19: #{_lambda_.25} parent=11 // pred_region
        _
      $region20: #{_lambda_.25} parent=11 // pred_fallthru
        _
    $region12: #{_lambda_.25} parent=5 // pred_fallthru
      _
    %p151 = scmp.lt.s32.totalorder %s10, 2
    // Predicated region
    $region21: #{_lambda_.25} parent=5 // pred_check
      %p152 = pneg %p151
    $region22: #{_lambda_.25} parent=5 // pred_check_branch
      %154 = sbr.rel (%p152) target = $region24
    $region23: #{_lambda_.25} parent=5 // pred_region
      // Predicated region
      $region25: #{_lambda_.25} parent=23 // pred_check
        %p155 = pneg %p30
      $region26: #{_lambda_.25} parent=23 // pred_check_branch
        %157 = sbr.rel (%p155) target = $region28
      $region27: #{_lambda_.25} parent=23 // pred_region
        %p158 = scmp.lt.s32.totalorder %s10, 1
        %s159 = scalar_select %p158, %s10, 1
        %s160 = smul.addr %s159, 2
        %s161 = smul.addr %s160, 8
        %s162 = scalar_lea.vmem %s0, %s161
      $region28: #{_lambda_.25} parent=23 // pred_fallthru
        _
      // Predicated region
      $region29: #{_lambda_.25} parent=23 // pred_check
        %p163 = pneg %p56
      $region30: #{_lambda_.25} parent=23 // pred_check_branch
        %165 = sbr.rel (%p163) target = $region32
      $region31: #{_lambda_.25} parent=23 // pred_region
        %p166 = scmp.lt.s32.totalorder %s10, 1
        %s167 = scalar_select %p166, %s10, 1
        %s168 = smul.addr %s167, 2
        %s169 = smul.addr %s168, 8
        %s170 = scalar_lea.vmem %s1, %s169
      $region32: #{_lambda_.25} parent=23 // pred_fallthru
        _
    $region24: #{_lambda_.25} parent=5 // pred_fallthru
      _
    %p171 = scmp.le.s32.totalorder 1, %s10
    %p172 = scmp.lt.s32.totalorder %s10, 3
    %p173 = pnand %p171, %p172
    %p174 = pneg %p173
    // Predicated region
    $region33: #{_lambda_.25} parent=5 // pred_check
      _
    $region34: #{_lambda_.25} parent=5 // pred_check_branch
      %176 = sbr.rel (%p173) target = $region36
    $region35: #{_lambda_.25} parent=5 // pred_region
      %s177 = ssub.s32 %s10, 1
      %p178 = scmp.lt.s32.totalorder %s15, 1
      %s179 = scalar_select %p178, %s15, 1
      %s180 = smul.addr %s179, 2
      %s181 = smul.addr %s180, 8
      %s182 = scalar_lea.vmem %s0, %s181
      %p183 = pneg %p36
      %p184 = pneg %p33
      %p185 = scmp.lt.s32.totalorder %s15, 1
      %s186 = scalar_select %p185, %s15, 1
      %s187 = smul.addr %s186, 2
      %s188 = smul.addr %s187, 8
      %s189 = scalar_lea.vmem %s1, %s188
      %p190 = pneg %p62
      %p191 = pneg %p59
      %p192 = pneg %p83
      %p193 = pneg %p80
      %p194 = pneg %p104
      %p195 = pneg %p101
      %p196 = pneg %p130
      %p197 = pneg %p127
      %p198 = scmp.lt.s32.totalorder %s15, 1
      %s199 = scalar_select %p198, %s15, 1
      %s200 = smul.addr %s199, 2
      %s201 = smul.addr %s200, 8
      %s202 = scalar_lea.vmem %s4, %s201
      %p203 = scmp.lt.s32.totalorder %s15, 1
      %s204 = scalar_select %p203, %s15, 1
      %s205 = smul.addr %s204, 2
      %s206 = smul.addr %s205, 8
      %s207 = scalar_lea.vmem %s0, %s206
      %p208 = scmp.lt.s32.totalorder %s15, 1
      %s209 = scalar_select %p208, %s15, 1
      %s210 = smul.addr %s209, 2
      %s211 = smul.addr %s210, 8
      %s212 = scalar_lea.vmem %s1, %s211
      %p213 = scmp.lt.s32.totalorder %s15, 1
      %s214 = scalar_select %p213, %s15, 1
      %s215 = smul.addr %s214, 2
      %s216 = smul.addr %s215, 8
      %s217 = scalar_lea.vmem %s4, %s216
      %v219 = vld [vmem:[%s207] sm:$0xff]
      %v220 = vld [vmem:[%s207 + $0x8] sm:$0xff]
      %v221 = vld [vmem:[%s212] sm:$0xff]
      %v222 = vld [vmem:[%s212 + $0x8] sm:$0xff]
      %v223 = vld [vmem:[%s2] sm:$0xff]
      %v224 = vld [vmem:[%s2 + $0x8] sm:$0xff]
      %v225 = vld [vmem:[%s3] sm:$0xff]
      %v226 = vld [vmem:[%s3 + $0x8] sm:$0xff]
      %229 = vrot.lane.b32.xlu0 %v221, 32
      %v230 = vpop.permute.xlu0 %229
      %231 = vrot.lane.b32.xlu0 %v222, 32
      %v232 = vpop.permute.xlu0 %231
      %vm235 = vcmask 261120
      %v236 = vsel %vm235, %v219, %v230
      %v237 = vsel %vm235, %v220, %v232
      %v238 = vpack.c.bf16 %v237, %v236
      %v239 = vpack.c.bf16 %v224, %v223
      %vm240 = vcmask 130048
      %v242 = vsel %vm240, %v239, 0
      %244 = vmatpush.bf16.msra.mxu0 0
      %245 = vmatpush.bf16.msra.mxu0 0
      %246 = vmatpush.bf16.msra.mxu0 0
      %247 = vmatpush.bf16.msra.mxu0 0
      %248 = vmatpush.bf16.msra.mxu0 0
      %249 = vmatpush.bf16.msra.mxu0 0
      %250 = vmatpush.bf16.msra.mxu0 0
      %251 = vmatpush.bf16.msra.mxu0 %v238
      %252 = vmatmul.bf16.gmra.mxu0 %v242
      %v253 = vpop.f32.mrf.mxu0
      %v254 = vadd.f32 0.0, %v253
      %v255 = vpop.f32.mrf.mxu0
      %v256 = vadd.f32 0.0, %v255
      %257 = vdwg.mxu0
      %v258 = vpack.c.bf16 %v226, %v225
      %v260 = vsel %vm240, %v258, 0
      %262 = vmatpush.bf16.msra.mxu0 0
      %263 = vmatpush.bf16.msra.mxu0 0
      %264 = vmatpush.bf16.msra.mxu0 0
      %265 = vmatpush.bf16.msra.mxu0 0
      %266 = vmatpush.bf16.msra.mxu0 0
      %267 = vmatpush.bf16.msra.mxu0 0
      %268 = vmatpush.bf16.msra.mxu0 0
      %269 = vmatpush.bf16.msra.mxu0 %v238
      %270 = vmatmul.bf16.gmra.mxu0 %v260
      %v271 = vpop.f32.mrf.mxu0
      %v272 = vadd.f32 0.0, %v271
      %v273 = vpop.f32.mrf.mxu0
      %v274 = vadd.f32 0.0, %v273
      %275 = vdwg.mxu0
      %278 = vrot.lane.b32.xlu0 %v254, 96
      %v279 = vpop.permute.xlu0 %278
      %280 = vrot.lane.b32.xlu0 %v256, 96
      %v281 = vpop.permute.xlu0 %280
      %v284 = vmul.f32 %v254, %v279
      %v285 = vmul.f32 %v256, %v281
      %288 = vrot.lane.b32.xlu0 %v272, 96
      %v289 = vpop.permute.xlu0 %288
      %290 = vrot.lane.b32.xlu0 %v274, 96
      %v291 = vpop.permute.xlu0 %290
      %v294 = vmul.f32 %v272, %v289
      %v295 = vmul.f32 %v274, %v291
      %v296 = vadd.f32 %v284, %v294
      %v297 = vadd.f32 %v285, %v295
      %v298 = vsel %vm235, %v296, 0.0
      %299 = vadd.xlane.f32.xlu0 %v298
      %v300 = vpop.xlane.xlu0 %299
      %v301 = vsel %vm235, %v297, 0.0
      %302 = vadd.xlane.f32.xlu0 %v301
      %v303 = vpop.xlane.xlu0 %302
      %v304 = vrcp.pop 32.0
      %v305 = vmul.f32 32.0, %v304
      %v306 = vsub.f32 1.0, %v305
      %v307 = vmul.f32 %v304, %v306
      %v308 = vadd.f32 %v304, %v307
      %vm309 = vweird.f32 %v304
      %v310 = vsel %vm309, %v304, %v308
      %v311 = vmul.f32 %v300, %v310
      %v312 = vmul.f32 %v303, %v310
      %v313 = vmul.f32 %v254, %v289
      %v314 = vmul.f32 %v256, %v291
      %v315 = vmul.f32 %v272, %v279
      %v316 = vmul.f32 %v274, %v281
      %v317 = vsub.f32 %v313, %v315
      %v318 = vsub.f32 %v314, %v316
      %v319 = vsel %vm235, %v317, 0.0
      %320 = vadd.xlane.f32.xlu0 %v319
      %v321 = vpop.xlane.xlu0 %320
      %v322 = vsel %vm235, %v318, 0.0
      %323 = vadd.xlane.f32.xlu0 %v322
      %v324 = vpop.xlane.xlu0 %323
      %v325 = vmul.f32 %v321, %v310
      %v326 = vmul.f32 %v324, %v310
      %v328 = vsel %vm240, %v223, 0
      %v331 = vsel %vm240, %v224, 0
      %333 = vmatpush.msra.mxu0 0.0
      %334 = vmatpush.msra.mxu0 0.0
      %335 = vmatpush.msra.mxu0 0.0
      %336 = vmatpush.msra.mxu0 0.0
      %337 = vmatpush.msra.mxu0 0.0
      %338 = vmatpush.msra.mxu0 0.0
      %339 = vmatpush.msra.mxu0 0.0
      %340 = vmatpush.msra.mxu0 0.0
      %341 = vmatpush.msra.mxu0 0.0
      %342 = vmatpush.msra.mxu0 0.0
      %343 = vmatpush.msra.mxu0 0.0
      %344 = vmatpush.msra.mxu0 0.0
      %345 = vmatpush.msra.mxu0 0.0
      %346 = vmatpush.msra.mxu0 0.0
      %347 = vmatpush.msra.mxu0 %v312
      %348 = vmatpush.msra.mxu0 %v311
      %349 = vmatmul.f32.gmra.mxu0 %v328
      %v350 = vpop.f32.mrf.mxu0
      %v351 = vadd.f32 0.0, %v350
      %352 = vmatmul.f32.gmra.mxu0 %v331
      %v353 = vpop.f32.mrf.mxu0
      %v354 = vadd.f32 0.0, %v353
      %355 = vdwg.mxu0
      %v357 = vsel %vm240, %v225, 0
      %v360 = vsel %vm240, %v226, 0
      %362 = vmatpush.msra.mxu0 0.0
      %363 = vmatpush.msra.mxu0 0.0
      %364 = vmatpush.msra.mxu0 0.0
      %365 = vmatpush.msra.mxu0 0.0
      %366 = vmatpush.msra.mxu0 0.0
      %367 = vmatpush.msra.mxu0 0.0
      %368 = vmatpush.msra.mxu0 0.0
      %369 = vmatpush.msra.mxu0 0.0
      %370 = vmatpush.msra.mxu0 0.0
      %371 = vmatpush.msra.mxu0 0.0
      %372 = vmatpush.msra.mxu0 0.0
      %373 = vmatpush.msra.mxu0 0.0
      %374 = vmatpush.msra.mxu0 0.0
      %375 = vmatpush.msra.mxu0 0.0
      %376 = vmatpush.msra.mxu0 %v326
      %377 = vmatpush.msra.mxu0 %v325
      %378 = vmatmul.f32.gmra.mxu0 %v357
      %v379 = vpop.f32.mrf.mxu0
      %v380 = vadd.f32 0.0, %v379
      %381 = vmatmul.f32.gmra.mxu0 %v360
      %v382 = vpop.f32.mrf.mxu0
      %v383 = vadd.f32 0.0, %v382
      %384 = vdwg.mxu0
      %v385 = vsub.f32 %v351, %v380
      %v386 = vsub.f32 %v354, %v383
      %v387 = vmul.f32 %v385, 0.0625
      %v388 = vmul.f32 %v386, 0.0625
      %vm389 = vcmask 7168
      %390 = vst.msk [vmem:[%s217] sm:$0xff] %vm389, %v387
      %391 = vst.msk [vmem:[%s217 + $0x8] sm:$0xff] %vm389, %v388
      %p392 = scmp.lt.s32.totalorder %s15, 1
      %s393 = scalar_select %p392, %s15, 1
      %s394 = smul.addr %s393, 2
      %s395 = smul.addr %s394, 8
      %s396 = scalar_lea.vmem %s4, %s395
      // Predicated region
      $region37: #{_lambda_.25} parent=35 // pred_check
        %p397 = pneg %p127
      $region38: #{_lambda_.25} parent=35 // pred_check_branch
        %399 = sbr.rel (%p397) target = $region40
      $region39: #{_lambda_.25} parent=35 // pred_region
        _
      $region40: #{_lambda_.25} parent=35 // pred_fallthru
        _
    $region36: #{_lambda_.25} parent=5 // pred_fallthru
      _
    %p400 = scmp.le.s32.totalorder 2, %s10
    // Predicated region
    $region41: #{_lambda_.25} parent=5 // pred_check
      %p401 = pneg %p400
    $region42: #{_lambda_.25} parent=5 // pred_check_branch
      %403 = sbr.rel (%p401) target = $region44
    $region43: #{_lambda_.25} parent=5 // pred_region
      %s404 = ssub.s32 %s10, 2
      // Predicated region
      $region45: #{_lambda_.25} parent=43 // pred_check
        %p405 = pneg %p133
      $region46: #{_lambda_.25} parent=43 // pred_check_branch
        %407 = sbr.rel (%p405) target = $region48
      $region47: #{_lambda_.25} parent=43 // pred_region
        %p408 = scmp.lt.s32.totalorder %s16, 1
        %s409 = scalar_select %p408, %s16, 1
        %s410 = smul.addr %s409, 2
        %s411 = smul.addr %s410, 8
        %s412 = scalar_lea.vmem %s4, %s411
      $region48: #{_lambda_.25} parent=43 // pred_fallthru
        _
    $region44: #{_lambda_.25} parent=5 // pred_fallthru
      _
  $region6: #{_lambda_.25} parent=0 // loop_footer
    %s14 = sadd.s32 1, %s10
  $region7: #{_lambda_.25} parent=0 // loop_footer_branch
    %9 = sbr.rel target = $region3
  $region8: #{_lambda_.25} parent=0 // loop_exit
    _

// kernel: _lambda_.26
$region0: #{_lambda_.26}
  #allocation0 [shape = 'u32[]', space=smem, size = 0x4, offset = 0x4, fixed_abs, tag = 'smem constant byte address 0x4 - core index']
  #allocation1 [shape = 'u32[72,128]{1,0:T(1,128)}', space=vmem, size = 0x9000, scoped, tag = 'internal scratch']
  %s0 = inlined_call_operand.vmem [shape: bf16[2,16,16], index: 0, kind: input, shape index: {}]
  %s1 = inlined_call_operand.vmem [shape: f32[2,16,32], index: 1, kind: input, shape index: {}]
  %s2 = inlined_call_operand.vmem [shape: f32[2,16,32], index: 2, kind: input, shape index: {}]
  %s3 = inlined_call_operand.vmem [shape: bf16[32,32], index: 3, kind: input, shape index: {}]
  %s4 = inlined_call_operand.vmem [shape: f32[1,32], index: 4, kind: input, shape index: {}]
  %s5 = inlined_call_operand.vmem [shape: f32[16,16], index: 5, kind: input, shape index: {}]
  %s6 = inlined_call_operand.vmem [shape: f32[2,16,32], index: 6, kind: output, shape index: {0}]
  %s7 = inlined_call_operand.vmem [shape: f32[2,16,32], index: 7, kind: output, shape index: {1}]
  %8 = xla_tuple %s6, %s7
  %s9 = sld [smem:[#allocation0]]
  $region65: #{_lambda_.26} parent=0
    _
  %s11 = ssub.s32 1, %s9
  %s12 = scalar_select 0, %s11, %s9
  loop: start=0, step=1, limit=4
  $region2: #{_lambda_.26} parent=0 // loop_pre_header
    _
  $region3: #{_lambda_.26} parent=0 // loop_header
    %s14 = sphi 0, %s18
    %p15 = scmp.ge.s32.totalorder %s14, 4
    %s24 = sphi 0, %s26
    %s27 = sphi 0, %s24
    %s28 = sphi 0, %s27
    %s44 = sphi 0, %s28
    %s50 = sphi 0, %s52
    %s53 = sphi 0, %s50
    %s54 = sphi 0, %s53
    %s70 = sphi 0, %s54
    %s76 = sphi 0, %s78
    %s79 = sphi 0, %s76
    %s80 = sphi 0, %s79
    %s96 = sphi 0, %s80
    %s100 = sphi 0, %s100
    %s102 = sphi 0, %s100
    %s103 = sphi 0, %s102
    %s117 = sphi 0, %s103
    %s121 = sphi 0, %s121
    %s123 = sphi 0, %s121
    %s124 = sphi 0, %s123
    %s138 = sphi 0, %s124
    %s142 = sphi 0, %s142
    %s144 = sphi 0, %s142
    %s145 = sphi 0, %s144
    %s159 = sphi 0, %s145
    %s165 = sphi 0, %s167
    %s168 = sphi 0, %s165
    %s169 = sphi 0, %s168
    %s185 = sphi 0, %s169
    %s191 = sphi 0, %s193
    %s194 = sphi 0, %s191
    %s195 = sphi 0, %s194
    %s211 = sphi 0, %s195
  $region4: #{_lambda_.26} parent=0 // loop_header_branch
    %17 = sbr.rel (%p15) target = $region8
  $region5: #{_lambda_.26} parent=0 // loop_body
    %s19 = ssub.s32 %s14, 1
    %s20 = ssub.s32 %s14, 2
    %s21 = sadd.s32 %s14, 1
    %s22 = ssub.s32 %s14, %s21
    %p23 = scmp.eq.s32.totalorder %s22, 0
    %s25 = sadd.s32 %s24, 1
    %s26 = scalar_select %p23, %s24, %s25
    %p29 = pneg %p23
    %p30 = scmp.eq.s32.totalorder %s14, 1
    %p31 = por %p29, %p30
    %p32 = scmp.ne.s32.totalorder %s24, %s27
    %p33 = scmp.eq.s32.totalorder %s14, 0
    %p34 = por %p32, %p33
    %p35 = scmp.ne.s32.totalorder %s24, %s27
    %p36 = scmp.eq.s32.totalorder %s19, 1
    %p37 = por %p35, %p36
    %p38 = scmp.ne.s32.totalorder %s27, %s28
    %p39 = scmp.eq.s32.totalorder %s19, 0
    %p40 = por %p38, %p39
    %p41 = scmp.ne.s32.totalorder %s27, %s28
    %p42 = scmp.eq.s32.totalorder %s20, 1
    %p43 = por %p41, %p42
    %p45 = scmp.ne.s32.totalorder %s28, %s44
    %p46 = scmp.eq.s32.totalorder %s20, 0
    %p47 = por %p45, %p46
    %s48 = ssub.s32 %s14, %s21
    %p49 = scmp.eq.s32.totalorder %s48, 0
    %s51 = sadd.s32 %s50, 1
    %s52 = scalar_select %p49, %s50, %s51
    %p55 = pneg %p49
    %p56 = scmp.eq.s32.totalorder %s14, 1
    %p57 = por %p55, %p56
    %p58 = scmp.ne.s32.totalorder %s50, %s53
    %p59 = scmp.eq.s32.totalorder %s14, 0
    %p60 = por %p58, %p59
    %p61 = scmp.ne.s32.totalorder %s50, %s53
    %p62 = scmp.eq.s32.totalorder %s19, 1
    %p63 = por %p61, %p62
    %p64 = scmp.ne.s32.totalorder %s53, %s54
    %p65 = scmp.eq.s32.totalorder %s19, 0
    %p66 = por %p64, %p65
    %p67 = scmp.ne.s32.totalorder %s53, %s54
    %p68 = scmp.eq.s32.totalorder %s20, 1
    %p69 = por %p67, %p68
    %p71 = scmp.ne.s32.totalorder %s54, %s70
    %p72 = scmp.eq.s32.totalorder %s20, 0
    %p73 = por %p71, %p72
    %s74 = ssub.s32 %s14, %s21
    %p75 = scmp.eq.s32.totalorder %s74, 0
    %s77 = sadd.s32 %s76, 1
    %s78 = scalar_select %p75, %s76, %s77
    %p81 = pneg %p75
    %p82 = scmp.eq.s32.totalorder %s14, 1
    %p83 = por %p81, %p82
    %p84 = scmp.ne.s32.totalorder %s76, %s79
    %p85 = scmp.eq.s32.totalorder %s14, 0
    %p86 = por %p84, %p85
    %p87 = scmp.ne.s32.totalorder %s76, %s79
    %p88 = scmp.eq.s32.totalorder %s19, 1
    %p89 = por %p87, %p88
    %p90 = scmp.ne.s32.totalorder %s79, %s80
    %p91 = scmp.eq.s32.totalorder %s19, 0
    %p92 = por %p90, %p91
    %p93 = scmp.ne.s32.totalorder %s79, %s80
    %p94 = scmp.eq.s32.totalorder %s20, 1
    %p95 = por %p93, %p94
    %p97 = scmp.ne.s32.totalorder %s80, %s96
    %p98 = scmp.eq.s32.totalorder %s20, 0
    %p99 = por %p97, %p98
    %s101 = sadd.s32 %s100, 1
    %p104 = scmp.eq.s32.totalorder %s14, 1
    %p105 = scmp.ne.s32.totalorder %s100, %s102
    %p106 = scmp.eq.s32.totalorder %s14, 0
    %p107 = por %p105, %p106
    %p108 = scmp.ne.s32.totalorder %s100, %s102
    %p109 = scmp.eq.s32.totalorder %s19, 1
    %p110 = por %p108, %p109
    %p111 = scmp.ne.s32.totalorder %s102, %s103
    %p112 = scmp.eq.s32.totalorder %s19, 0
    %p113 = por %p111, %p112
    %p114 = scmp.ne.s32.totalorder %s102, %s103
    %p115 = scmp.eq.s32.totalorder %s20, 1
    %p116 = por %p114, %p115
    %p118 = scmp.ne.s32.totalorder %s103, %s117
    %p119 = scmp.eq.s32.totalorder %s20, 0
    %p120 = por %p118, %p119
    %s122 = sadd.s32 %s121, 1
    %p125 = scmp.eq.s32.totalorder %s14, 1
    %p126 = scmp.ne.s32.totalorder %s121, %s123
    %p127 = scmp.eq.s32.totalorder %s14, 0
    %p128 = por %p126, %p127
    %p129 = scmp.ne.s32.totalorder %s121, %s123
    %p130 = scmp.eq.s32.totalorder %s19, 1
    %p131 = por %p129, %p130
    %p132 = scmp.ne.s32.totalorder %s123, %s124
    %p133 = scmp.eq.s32.totalorder %s19, 0
    %p134 = por %p132, %p133
    %p135 = scmp.ne.s32.totalorder %s123, %s124
    %p136 = scmp.eq.s32.totalorder %s20, 1
    %p137 = por %p135, %p136
    %p139 = scmp.ne.s32.totalorder %s124, %s138
    %p140 = scmp.eq.s32.totalorder %s20, 0
    %p141 = por %p139, %p140
    %s143 = sadd.s32 %s142, 1
    %p146 = scmp.eq.s32.totalorder %s14, 1
    %p147 = scmp.ne.s32.totalorder %s142, %s144
    %p148 = scmp.eq.s32.totalorder %s14, 0
    %p149 = por %p147, %p148
    %p150 = scmp.ne.s32.totalorder %s142, %s144
    %p151 = scmp.eq.s32.totalorder %s19, 1
    %p152 = por %p150, %p151
    %p153 = scmp.ne.s32.totalorder %s144, %s145
    %p154 = scmp.eq.s32.totalorder %s19, 0
    %p155 = por %p153, %p154
    %p156 = scmp.ne.s32.totalorder %s144, %s145
    %p157 = scmp.eq.s32.totalorder %s20, 1
    %p158 = por %p156, %p157
    %p160 = scmp.ne.s32.totalorder %s145, %s159
    %p161 = scmp.eq.s32.totalorder %s20, 0
    %p162 = por %p160, %p161
    %s163 = ssub.s32 %s14, %s21
    %p164 = scmp.eq.s32.totalorder %s163, 0
    %s166 = sadd.s32 %s165, 1
    %s167 = scalar_select %p164, %s165, %s166
    %p170 = pneg %p164
    %p171 = scmp.eq.s32.totalorder %s14, 1
    %p172 = por %p170, %p171
    %p173 = scmp.ne.s32.totalorder %s165, %s168
    %p174 = scmp.eq.s32.totalorder %s14, 0
    %p175 = por %p173, %p174
    %p176 = scmp.ne.s32.totalorder %s165, %s168
    %p177 = scmp.eq.s32.totalorder %s19, 1
    %p178 = por %p176, %p177
    %p179 = scmp.ne.s32.totalorder %s168, %s169
    %p180 = scmp.eq.s32.totalorder %s19, 0
    %p181 = por %p179, %p180
    %p182 = scmp.ne.s32.totalorder %s168, %s169
    %p183 = scmp.eq.s32.totalorder %s20, 1
    %p184 = por %p182, %p183
    %p186 = scmp.ne.s32.totalorder %s169, %s185
    %p187 = scmp.eq.s32.totalorder %s20, 0
    %p188 = por %p186, %p187
    %s189 = ssub.s32 %s14, %s21
    %p190 = scmp.eq.s32.totalorder %s189, 0
    %s192 = sadd.s32 %s191, 1
    %s193 = scalar_select %p190, %s191, %s192
    %p196 = pneg %p190
    %p197 = scmp.eq.s32.totalorder %s14, 1
    %p198 = por %p196, %p197
    %p199 = scmp.ne.s32.totalorder %s191, %s194
    %p200 = scmp.eq.s32.totalorder %s14, 0
    %p201 = por %p199, %p200
    %p202 = scmp.ne.s32.totalorder %s191, %s194
    %p203 = scmp.eq.s32.totalorder %s19, 1
    %p204 = por %p202, %p203
    %p205 = scmp.ne.s32.totalorder %s194, %s195
    %p206 = scmp.eq.s32.totalorder %s19, 0
    %p207 = por %p205, %p206
    %p208 = scmp.ne.s32.totalorder %s194, %s195
    %p209 = scmp.eq.s32.totalorder %s20, 1
    %p210 = por %p208, %p209
    %p212 = scmp.ne.s32.totalorder %s195, %s211
    %p213 = scmp.eq.s32.totalorder %s20, 0
    %p214 = por %p212, %p213
    %p215 = scmp.le.s32.totalorder 1, %s14
    %p216 = scmp.lt.s32.totalorder %s14, 3
    %p217 = pnand %p215, %p216
    %p218 = pneg %p217
    // Predicated region
    $region9: #{_lambda_.26} parent=5 // pred_check
      _
    $region10: #{_lambda_.26} parent=5 // pred_check_branch
      %220 = sbr.rel (%p217) target = $region12
    $region11: #{_lambda_.26} parent=5 // pred_region
      %s221 = ssub.s32 %s14, 1
      // Predicated region
      $region13: #{_lambda_.26} parent=11 // pred_check
        %p222 = pneg %p113
      $region14: #{_lambda_.26} parent=11 // pred_check_branch
        %224 = sbr.rel (%p222) target = $region16
      $region15: #{_lambda_.26} parent=11 // pred_region
        _
      $region16: #{_lambda_.26} parent=11 // pred_fallthru
        _
      // Predicated region
      $region17: #{_lambda_.26} parent=11 // pred_check
        %p225 = pneg %p134
      $region18: #{_lambda_.26} parent=11 // pred_check_branch
        %227 = sbr.rel (%p225) target = $region20
      $region19: #{_lambda_.26} parent=11 // pred_region
        _
      $region20: #{_lambda_.26} parent=11 // pred_fallthru
        _
      // Predicated region
      $region21: #{_lambda_.26} parent=11 // pred_check
        %p228 = pneg %p155
      $region22: #{_lambda_.26} parent=11 // pred_check_branch
        %230 = sbr.rel (%p228) target = $region24
      $region23: #{_lambda_.26} parent=11 // pred_region
        _
      $region24: #{_lambda_.26} parent=11 // pred_fallthru
        _
    $region12: #{_lambda_.26} parent=5 // pred_fallthru
      _
    %p231 = scmp.lt.s32.totalorder %s14, 2
    // Predicated region
    $region25: #{_lambda_.26} parent=5 // pred_check
      %p232 = pneg %p231
    $region26: #{_lambda_.26} parent=5 // pred_check_branch
      %234 = sbr.rel (%p232) target = $region28
    $region27: #{_lambda_.26} parent=5 // pred_region
      // Predicated region
      $region29: #{_lambda_.26} parent=27 // pred_check
        %p235 = pneg %p34
      $region30: #{_lambda_.26} parent=27 // pred_check_branch
        %237 = sbr.rel (%p235) target = $region32
      $region31: #{_lambda_.26} parent=27 // pred_region
        %p238 = scmp.lt.s32.totalorder %s14, 1
        %s239 = scalar_select %p238, %s14, 1
        %s240 = smul.addr %s239, 2
        %s241 = smul.addr %s240, 4
        %s242 = scalar_lea.vmem %s0, %s241
      $region32: #{_lambda_.26} parent=27 // pred_fallthru
        _
      // Predicated region
      $region33: #{_lambda_.26} parent=27 // pred_check
        %p243 = pneg %p60
      $region34: #{_lambda_.26} parent=27 // pred_check_branch
        %245 = sbr.rel (%p243) target = $region36
      $region35: #{_lambda_.26} parent=27 // pred_region
        %p246 = scmp.lt.s32.totalorder %s14, 1
        %s247 = scalar_select %p246, %s14, 1
        %s248 = smul.addr %s247, 2
        %s249 = smul.addr %s248, 8
        %s250 = scalar_lea.vmem %s1, %s249
      $region36: #{_lambda_.26} parent=27 // pred_fallthru
        _
      // Predicated region
      $region37: #{_lambda_.26} parent=27 // pred_check
        %p251 = pneg %p86
      $region38: #{_lambda_.26} parent=27 // pred_check_branch
        %253 = sbr.rel (%p251) target = $region40
      $region39: #{_lambda_.26} parent=27 // pred_region
        %p254 = scmp.lt.s32.totalorder %s14, 1
        %s255 = scalar_select %p254, %s14, 1
        %s256 = smul.addr %s255, 2
        %s257 = smul.addr %s256, 8
        %s258 = scalar_lea.vmem %s2, %s257
      $region40: #{_lambda_.26} parent=27 // pred_fallthru
        _
    $region28: #{_lambda_.26} parent=5 // pred_fallthru
      _
    %p259 = scmp.le.s32.totalorder 1, %s14
    %p260 = scmp.lt.s32.totalorder %s14, 3
    %p261 = pnand %p259, %p260
    %p262 = pneg %p261
    // Predicated region
    $region41: #{_lambda_.26} parent=5 // pred_check
      _
    $region42: #{_lambda_.26} parent=5 // pred_check_branch
      %264 = sbr.rel (%p261) target = $region44
    $region43: #{_lambda_.26} parent=5 // pred_region
      %s265 = ssub.s32 %s14, 1
      %p266 = scmp.lt.s32.totalorder %s19, 1
      %s267 = scalar_select %p266, %s19, 1
      %s268 = smul.addr %s267, 2
      %s269 = smul.addr %s268, 4
      %s270 = scalar_lea.vmem %s0, %s269
      %p271 = pneg %p40
      %p272 = pneg %p37
      %p273 = scmp.lt.s32.totalorder %s19, 1
      %s274 = scalar_select %p273, %s19, 1
      %s275 = smul.addr %s274, 2
      %s276 = smul.addr %s275, 8
      %s277 = scalar_lea.vmem %s1, %s276
      %p278 = pneg %p66
      %p279 = pneg %p63
      %p280 = scmp.lt.s32.totalorder %s19, 1
      %s281 = scalar_select %p280, %s19, 1
      %s282 = smul.addr %s281, 2
      %s283 = smul.addr %s282, 8
      %s284 = scalar_lea.vmem %s2, %s283
      %p285 = pneg %p92
      %p286 = pneg %p89
      %p287 = pneg %p113
      %p288 = pneg %p110
      %p289 = pneg %p134
      %p290 = pneg %p131
      %p291 = pneg %p155
      %p292 = pneg %p152
      %p293 = pneg %p181
      %p294 = pneg %p178
      %p295 = scmp.lt.s32.totalorder %s19, 1
      %s296 = scalar_select %p295, %s19, 1
      %s297 = smul.addr %s296, 2
      %s298 = smul.addr %s297, 8
      %s299 = scalar_lea.vmem %s6, %s298
      %p300 = pneg %p207
      %p301 = pneg %p204
      %p302 = scmp.lt.s32.totalorder %s19, 1
      %s303 = scalar_select %p302, %s19, 1
      %s304 = smul.addr %s303, 2
      %s305 = smul.addr %s304, 8
      %s306 = scalar_lea.vmem %s7, %s305
      %p307 = scmp.lt.s32.totalorder %s19, 1
      %s308 = scalar_select %p307, %s19, 1
      %s309 = smul.addr %s308, 2
      %s310 = smul.addr %s309, 4
      %s311 = scalar_lea.vmem %s0, %s310
      %p312 = scmp.lt.s32.totalorder %s19, 1
      %s313 = scalar_select %p312, %s19, 1
      %s314 = smul.addr %s313, 2
      %s315 = smul.addr %s314, 8
      %s316 = scalar_lea.vmem %s1, %s315
      %p317 = scmp.lt.s32.totalorder %s19, 1
      %s318 = scalar_select %p317, %s19, 1
      %s319 = smul.addr %s318, 2
      %s320 = smul.addr %s319, 8
      %s321 = scalar_lea.vmem %s2, %s320
      %p322 = scmp.lt.s32.totalorder %s19, 1
      %s323 = scalar_select %p322, %s19, 1
      %s324 = smul.addr %s323, 2
      %s325 = smul.addr %s324, 8
      %s326 = scalar_lea.vmem %s6, %s325
      %p327 = scmp.lt.s32.totalorder %s19, 1
      %s328 = scalar_select %p327, %s19, 1
      %s329 = smul.addr %s328, 2
      %s330 = smul.addr %s329, 8
      %s331 = scalar_lea.vmem %s7, %s330
      %v333 = vld [vmem:[%s311] sm:$0xf]
      %v334 = vld [vmem:[%s311 + $0x4] sm:$0xf]
      %v335 = vld [vmem:[%s316] sm:$0xff]
      %v336 = vld [vmem:[%s316 + $0x8] sm:$0xff]
      %v337 = vpack.c.bf16 %v336, %v335
      %v340 = vunpack.c.l.b16 %v333
      %v341 = vunpack.c.l.b16 %v334
      %v342 = vpack.c.b16 %v341, %v340
      %vm343 = vcmask 130048
      %v345 = vsel %vm343, %v342, 0
      %347 = vmatpush.bf16.msra.mxu0 0
      %348 = vmatpush.bf16.msra.mxu0 0
      %349 = vmatpush.bf16.msra.mxu0 0
      %350 = vmatpush.bf16.msra.mxu0 0
      %351 = vmatpush.bf16.msra.mxu0 0
      %352 = vmatpush.bf16.msra.mxu0 0
      %353 = vmatpush.bf16.msra.mxu0 0
      %354 = vmatpush.bf16.msra.mxu0 %v337
      %355 = vmatmul.bf16.gmra.mxu0 %v345
      %v356 = vpop.f32.mrf.mxu0
      %v357 = vadd.f32 0.0, %v356
      %v358 = vpop.f32.mrf.mxu0
      %v359 = vadd.f32 0.0, %v358
      %360 = vdwg.mxu0
      %v361 = vpack.c.bf16 %v359, %v357
      %v362 = vld [vmem:[%s3] sm:$0xf]
      %v363 = vld [vmem:[%s3 + $0x4] sm:$0xf]
      %v364 = vld [vmem:[%s3 + $0x8] sm:$0xf]
      %v365 = vld [vmem:[%s3 + $0xc] sm:$0xf]
      %v366 = vld [vmem:[%s4] sm:$0x1]
      %v368 = vperm.slane %v366, 0
      %v374 = vunpack.c.l.b16 %v362
      %v375 = vunpack.c.l.b16 %v363
      %v376 = vunpack.c.l.b16 %v364
      %v377 = vunpack.c.l.b16 %v365
      %v378 = vpack.c.b16 %v375, %v374
      %v379 = vpack.c.b16 %v377, %v376
      %vm382 = vcmask 261120
      %v384 = vsel %vm382, %v361, 0
      %386 = vmatpush.bf16.msra.mxu0 0
      %387 = vmatpush.bf16.msra.mxu0 0
      %388 = vmatpush.bf16.msra.mxu0 0
      %389 = vmatpush.bf16.msra.mxu0 0
      %390 = vmatpush.bf16.msra.mxu0 0
      %391 = vmatpush.bf16.msra.mxu0 0
      %392 = vmatpush.bf16.msra.mxu0 %v379
      %393 = vmatpush.bf16.msra.mxu0 %v378
      %394 = vmatmul.bf16.gmra.mxu0 %v384
      %v395 = vpop.f32.mrf.mxu0
      %v396 = vadd.f32 %v368, %v395
      %v397 = vpop.f32.mrf.mxu0
      %v398 = vadd.f32 %v368, %v397
      %399 = vdwg.mxu0
      %v400 = vld [vmem:[%s321] sm:$0xff]
      %v401 = vld [vmem:[%s321 + $0x8] sm:$0xff]
      %v402 = vadd.f32 %v400, %v396
      %v403 = vadd.f32 %v401, %v398
      %v404 = vld [vmem:[%s5] sm:$0xff]
      %v405 = vld [vmem:[%s5 + $0x8] sm:$0xff]
      %v406 = vpack.c.bf16 %v405, %v404
      %v407 = vpack.c.bf16 %v403, %v402
      %v409 = vsel %vm343, %v406, 0
      %411 = vmatpush.bf16.msra.mxu0 0
      %412 = vmatpush.bf16.msra.mxu0 0
      %413 = vmatpush.bf16.msra.mxu0 0
      %414 = vmatpush.bf16.msra.mxu0 0
      %415 = vmatpush.bf16.msra.mxu0 0
      %416 = vmatpush.bf16.msra.mxu0 0
      %417 = vmatpush.bf16.msra.mxu0 0
      %418 = vmatpush.bf16.msra.mxu0 %v407
      %419 = vmatmul.bf16.gmra.mxu0 %v409
      %v420 = vpop.f32.mrf.mxu0
      %v421 = vadd.f32 0.0, %v420
      %v422 = vpop.f32.mrf.mxu0
      %v423 = vadd.f32 0.0, %v422
      %424 = vdwg.mxu0
      %425 = vst.msk [vmem:[%s331] sm:$0xff] %vm382, %v421
      %426 = vst.msk [vmem:[%s331 + $0x8] sm:$0xff] %vm382, %v423
      %v427 = vsub.f32 %v402, %v421
      %v428 = vsub.f32 %v403, %v423
      %429 = vst.msk [vmem:[%s326] sm:$0xff] %vm382, %v427
      %430 = vst.msk [vmem:[%s326 + $0x8] sm:$0xff] %vm382, %v428
      %p431 = scmp.lt.s32.totalorder %s19, 1
      %s432 = scalar_select %p431, %s19, 1
      %s433 = smul.addr %s432, 2
      %s434 = smul.addr %s433, 8
      %s435 = scalar_lea.vmem %s6, %s434
      %p436 = scmp.lt.s32.totalorder %s19, 1
      %s437 = scalar_select %p436, %s19, 1
      %s438 = smul.addr %s437, 2
      %s439 = smul.addr %s438, 8
      %s440 = scalar_lea.vmem %s7, %s439
      // Predicated region
      $region45: #{_lambda_.26} parent=43 // pred_check
        %p441 = pneg %p178
      $region46: #{_lambda_.26} parent=43 // pred_check_branch
        %443 = sbr.rel (%p441) target = $region48
      $region47: #{_lambda_.26} parent=43 // pred_region
        _
      $region48: #{_lambda_.26} parent=43 // pred_fallthru
        _
      // Predicated region
      $region49: #{_lambda_.26} parent=43 // pred_check
        %p444 = pneg %p204
      $region50: #{_lambda_.26} parent=43 // pred_check_branch
        %446 = sbr.rel (%p444) target = $region52
      $region51: #{_lambda_.26} parent=43 // pred_region
        _
      $region52: #{_lambda_.26} parent=43 // pred_fallthru
        _
    $region44: #{_lambda_.26} parent=5 // pred_fallthru
      _
    %p447 = scmp.le.s32.totalorder 2, %s14
    // Predicated region
    $region53: #{_lambda_.26} parent=5 // pred_check
      %p448 = pneg %p447
    $region54: #{_lambda_.26} parent=5 // pred_check_branch
      %450 = sbr.rel (%p448) target = $region56
    $region55: #{_lambda_.26} parent=5 // pred_region
      %s451 = ssub.s32 %s14, 2
      // Predicated region
      $region57: #{_lambda_.26} parent=55 // pred_check
        %p452 = pneg %p184
      $region58: #{_lambda_.26} parent=55 // pred_check_branch
        %454 = sbr.rel (%p452) target = $region60
      $region59: #{_lambda_.26} parent=55 // pred_region
        %p455 = scmp.lt.s32.totalorder %s20, 1
        %s456 = scalar_select %p455, %s20, 1
        %s457 = smul.addr %s456, 2
        %s458 = smul.addr %s457, 8
        %s459 = scalar_lea.vmem %s6, %s458
      $region60: #{_lambda_.26} parent=55 // pred_fallthru
        _
      // Predicated region
      $region61: #{_lambda_.26} parent=55 // pred_check
        %p460 = pneg %p210
      $region62: #{_lambda_.26} parent=55 // pred_check_branch
        %462 = sbr.rel (%p460) target = $region64
      $region63: #{_lambda_.26} parent=55 // pred_region
        %p463 = scmp.lt.s32.totalorder %s20, 1
        %s464 = scalar_select %p463, %s20, 1
        %s465 = smul.addr %s464, 2
        %s466 = smul.addr %s465, 8
        %s467 = scalar_lea.vmem %s7, %s466
      $region64: #{_lambda_.26} parent=55 // pred_fallthru
        _
    $region56: #{_lambda_.26} parent=5 // pred_fallthru
      _
  $region6: #{_lambda_.26} parent=0 // loop_footer
    %s18 = sadd.s32 1, %s14
  $region7: #{_lambda_.26} parent=0 // loop_footer_branch
    %13 = sbr.rel target = $region3
  $region8: #{_lambda_.26} parent=0 // loop_exit
    _

// kernel: _lambda_.27
$region0: #{_lambda_.27}
  #allocation0 [shape = 'u32[]', space=smem, size = 0x4, offset = 0x4, fixed_abs, tag = 'smem constant byte address 0x4 - core index']
  #allocation1 [shape = 'u32[72,128]{1,0:T(1,128)}', space=vmem, size = 0x9000, scoped, tag = 'internal scratch']
  %s0 = inlined_call_operand.vmem [shape: f32[32,32], index: 0, kind: input, shape index: {}]
  %s1 = inlined_call_operand.vmem [shape: bf16[32,32], index: 1, kind: input, shape index: {}]
  %s2 = inlined_call_operand.vmem [shape: f32[1,32], index: 2, kind: input, shape index: {}]
  %s3 = inlined_call_operand.vmem [shape: f32[32,32], index: 3, kind: output, shape index: {}]
  %s4 = sld [smem:[#allocation0]]
  $region22: #{_lambda_.27} parent=0
    _
  %s6 = ssub.s32 1, %s4
  %s7 = scalar_select 0, %s6, %s4
  // Predicated region
  $region2: #{_lambda_.27} parent=0 // pred_check
    _
  $region3: #{_lambda_.27} parent=0 // pred_check_branch
    %9 = sbr.rel (0) target = $region5
  $region4: #{_lambda_.27} parent=0 // pred_region
    _
  $region5: #{_lambda_.27} parent=0 // pred_fallthru
    _
  // Predicated region
  $region6: #{_lambda_.27} parent=0 // pred_check
    _
  $region7: #{_lambda_.27} parent=0 // pred_check_branch
    %11 = sbr.rel (0) target = $region9
  $region8: #{_lambda_.27} parent=0 // pred_region
    _
  $region9: #{_lambda_.27} parent=0 // pred_fallthru
    _
  // Predicated region
  $region10: #{_lambda_.27} parent=0 // pred_check
    _
  $region11: #{_lambda_.27} parent=0 // pred_check_branch
    %13 = sbr.rel (0) target = $region13
  $region12: #{_lambda_.27} parent=0 // pred_region
    _
  $region13: #{_lambda_.27} parent=0 // pred_fallthru
    _
  %v15 = vld [vmem:[%s0] sm:$0xff]
  %v16 = vld [vmem:[%s0 + $0x8] sm:$0xff]
  %v17 = vld [vmem:[%s0 + $0x10] sm:$0xff]
  %v18 = vld [vmem:[%s0 + $0x18] sm:$0xff]
  %v19 = vpack.c.bf16 %v16, %v15
  %v20 = vpack.c.bf16 %v18, %v17
  %v21 = vld [vmem:[%s1] sm:$0xf]
  %v22 = vld [vmem:[%s1 + $0x4] sm:$0xf]
  %v23 = vld [vmem:[%s1 + $0x8] sm:$0xf]
  %v24 = vld [vmem:[%s1 + $0xc] sm:$0xf]
  %v25 = vld [vmem:[%s2] sm:$0x1]
  %v27 = vperm.slane %v25, 0
  %v33 = vunpack.c.l.b16 %v21
  %v34 = vunpack.c.l.b16 %v22
  %v35 = vunpack.c.l.b16 %v23
  %v36 = vunpack.c.l.b16 %v24
  %v37 = vpack.c.b16 %v34, %v33
  %v38 = vpack.c.b16 %v36, %v35
  %vm41 = vcmask 261120
  %v43 = vsel %vm41, %v19, 0
  %v46 = vsel %vm41, %v20, 0
  %48 = vmatpush.bf16.msra.mxu0 0
  %49 = vmatpush.bf16.msra.mxu0 0
  %50 = vmatpush.bf16.msra.mxu0 0
  %51 = vmatpush.bf16.msra.mxu0 0
  %52 = vmatpush.bf16.msra.mxu0 0
  %53 = vmatpush.bf16.msra.mxu0 0
  %54 = vmatpush.bf16.msra.mxu0 %v38
  %55 = vmatpush.bf16.msra.mxu0 %v37
  %56 = vmatmul.bf16.gmra.mxu0 %v43
  %v57 = vpop.f32.mrf.mxu0
  %v58 = vadd.f32 %v27, %v57
  %v59 = vpop.f32.mrf.mxu0
  %v60 = vadd.f32 %v27, %v59
  %61 = vmatmul.bf16.gmra.mxu0 %v46
  %v62 = vpop.f32.mrf.mxu0
  %v63 = vadd.f32 %v27, %v62
  %v64 = vpop.f32.mrf.mxu0
  %v65 = vadd.f32 %v27, %v64
  %66 = vdwg.mxu0
  %67 = vst.msk [vmem:[%s3] sm:$0xff] %vm41, %v58
  %68 = vst.msk [vmem:[%s3 + $0x8] sm:$0xff] %vm41, %v60
  %69 = vst.msk [vmem:[%s3 + $0x10] sm:$0xff] %vm41, %v63
  %70 = vst.msk [vmem:[%s3 + $0x18] sm:$0xff] %vm41, %v65
  // Predicated region
  $region14: #{_lambda_.27} parent=0 // pred_check
    _
  $region15: #{_lambda_.27} parent=0 // pred_check_branch
    %72 = sbr.rel (0) target = $region17
  $region16: #{_lambda_.27} parent=0 // pred_region
    _
  $region17: #{_lambda_.27} parent=0 // pred_fallthru
    _
  // Predicated region
  $region18: #{_lambda_.27} parent=0 // pred_check
    _
  $region19: #{_lambda_.27} parent=0 // pred_check_branch
    %74 = sbr.rel (0) target = $region21
  $region20: #{_lambda_.27} parent=0 // pred_region
    _
  $region21: #{_lambda_.27} parent=0 // pred_fallthru
    _

// kernel: _lambda_.18
$region0: #{_lambda_.18}
  #allocation0 [shape = 'u32[]', space=smem, size = 0x4, offset = 0x4, fixed_abs, tag = 'smem constant byte address 0x4 - core index']
  #allocation1 [shape = 'u32[72,128]{1,0:T(1,128)}', space=vmem, size = 0x9000, scoped, tag = 'internal scratch']
  %s0 = inlined_call_operand.vmem [shape: f32[2,16,4], index: 0, kind: input, shape index: {}]
  %s1 = inlined_call_operand.vmem [shape: bf16[3,4,32], index: 1, kind: input, shape index: {}]
  %s2 = inlined_call_operand.vmem [shape: f32[1,32], index: 2, kind: input, shape index: {}]
  %s3 = inlined_call_operand.vmem [shape: f32[1,16,32], index: 3, kind: input, shape index: {}]
  %s4 = inlined_call_operand.vmem [shape: f32[2,16,32], index: 4, kind: output, shape index: {}]
  %s5 = sld [smem:[#allocation0]]
  $region49: #{_lambda_.18} parent=0
    _
  %s7 = ssub.s32 1, %s5
  %s8 = scalar_select 0, %s7, %s5
  loop: start=0, step=1, limit=4
  $region2: #{_lambda_.18} parent=0 // loop_pre_header
    _
  $region3: #{_lambda_.18} parent=0 // loop_header
    %s10 = sphi 0, %s14
    %p11 = scmp.ge.s32.totalorder %s10, 4
    %s20 = sphi 0, %s22
    %s23 = sphi 0, %s20
    %s24 = sphi 0, %s23
    %s40 = sphi 0, %s24
    %s44 = sphi 0, %s44
    %s46 = sphi 0, %s44
    %s47 = sphi 0, %s46
    %s61 = sphi 0, %s47
    %s65 = sphi 0, %s65
    %s67 = sphi 0, %s65
    %s68 = sphi 0, %s67
    %s82 = sphi 0, %s68
    %s86 = sphi 0, %s86
    %s88 = sphi 0, %s86
    %s89 = sphi 0, %s88
    %s103 = sphi 0, %s89
    %s109 = sphi 0, %s111
    %s112 = sphi 0, %s109
    %s113 = sphi 0, %s112
    %s129 = sphi 0, %s113
  $region4: #{_lambda_.18} parent=0 // loop_header_branch
    %13 = sbr.rel (%p11) target = $region8
  $region5: #{_lambda_.18} parent=0 // loop_body
    %s15 = ssub.s32 %s10, 1
    %s16 = ssub.s32 %s10, 2
    %s17 = sadd.s32 %s10, 1
    %s18 = ssub.s32 %s10, %s17
    %p19 = scmp.eq.s32.totalorder %s18, 0
    %s21 = sadd.s32 %s20, 1
    %s22 = scalar_select %p19, %s20, %s21
    %p25 = pneg %p19
    %p26 = scmp.eq.s32.totalorder %s10, 1
    %p27 = por %p25, %p26
    %p28 = scmp.ne.s32.totalorder %s20, %s23
    %p29 = scmp.eq.s32.totalorder %s10, 0
    %p30 = por %p28, %p29
    %p31 = scmp.ne.s32.totalorder %s20, %s23
    %p32 = scmp.eq.s32.totalorder %s15, 1
    %p33 = por %p31, %p32
    %p34 = scmp.ne.s32.totalorder %s23, %s24
    %p35 = scmp.eq.s32.totalorder %s15, 0
    %p36 = por %p34, %p35
    %p37 = scmp.ne.s32.totalorder %s23, %s24
    %p38 = scmp.eq.s32.totalorder %s16, 1
    %p39 = por %p37, %p38
    %p41 = scmp.ne.s32.totalorder %s24, %s40
    %p42 = scmp.eq.s32.totalorder %s16, 0
    %p43 = por %p41, %p42
    %s45 = sadd.s32 %s44, 1
    %p48 = scmp.eq.s32.totalorder %s10, 1
    %p49 = scmp.ne.s32.totalorder %s44, %s46
    %p50 = scmp.eq.s32.totalorder %s10, 0
    %p51 = por %p49, %p50
    %p52 = scmp.ne.s32.totalorder %s44, %s46
    %p53 = scmp.eq.s32.totalorder %s15, 1
    %p54 = por %p52, %p53
    %p55 = scmp.ne.s32.totalorder %s46, %s47
    %p56 = scmp.eq.s32.totalorder %s15, 0
    %p57 = por %p55, %p56
    %p58 = scmp.ne.s32.totalorder %s46, %s47
    %p59 = scmp.eq.s32.totalorder %s16, 1
    %p60 = por %p58, %p59
    %p62 = scmp.ne.s32.totalorder %s47, %s61
    %p63 = scmp.eq.s32.totalorder %s16, 0
    %p64 = por %p62, %p63
    %s66 = sadd.s32 %s65, 1
    %p69 = scmp.eq.s32.totalorder %s10, 1
    %p70 = scmp.ne.s32.totalorder %s65, %s67
    %p71 = scmp.eq.s32.totalorder %s10, 0
    %p72 = por %p70, %p71
    %p73 = scmp.ne.s32.totalorder %s65, %s67
    %p74 = scmp.eq.s32.totalorder %s15, 1
    %p75 = por %p73, %p74
    %p76 = scmp.ne.s32.totalorder %s67, %s68
    %p77 = scmp.eq.s32.totalorder %s15, 0
    %p78 = por %p76, %p77
    %p79 = scmp.ne.s32.totalorder %s67, %s68
    %p80 = scmp.eq.s32.totalorder %s16, 1
    %p81 = por %p79, %p80
    %p83 = scmp.ne.s32.totalorder %s68, %s82
    %p84 = scmp.eq.s32.totalorder %s16, 0
    %p85 = por %p83, %p84
    %s87 = sadd.s32 %s86, 1
    %p90 = scmp.eq.s32.totalorder %s10, 1
    %p91 = scmp.ne.s32.totalorder %s86, %s88
    %p92 = scmp.eq.s32.totalorder %s10, 0
    %p93 = por %p91, %p92
    %p94 = scmp.ne.s32.totalorder %s86, %s88
    %p95 = scmp.eq.s32.totalorder %s15, 1
    %p96 = por %p94, %p95
    %p97 = scmp.ne.s32.totalorder %s88, %s89
    %p98 = scmp.eq.s32.totalorder %s15, 0
    %p99 = por %p97, %p98
    %p100 = scmp.ne.s32.totalorder %s88, %s89
    %p101 = scmp.eq.s32.totalorder %s16, 1
    %p102 = por %p100, %p101
    %p104 = scmp.ne.s32.totalorder %s89, %s103
    %p105 = scmp.eq.s32.totalorder %s16, 0
    %p106 = por %p104, %p105
    %s107 = ssub.s32 %s10, %s17
    %p108 = scmp.eq.s32.totalorder %s107, 0
    %s110 = sadd.s32 %s109, 1
    %s111 = scalar_select %p108, %s109, %s110
    %p114 = pneg %p108
    %p115 = scmp.eq.s32.totalorder %s10, 1
    %p116 = por %p114, %p115
    %p117 = scmp.ne.s32.totalorder %s109, %s112
    %p118 = scmp.eq.s32.totalorder %s10, 0
    %p119 = por %p117, %p118
    %p120 = scmp.ne.s32.totalorder %s109, %s112
    %p121 = scmp.eq.s32.totalorder %s15, 1
    %p122 = por %p120, %p121
    %p123 = scmp.ne.s32.totalorder %s112, %s113
    %p124 = scmp.eq.s32.totalorder %s15, 0
    %p125 = por %p123, %p124
    %p126 = scmp.ne.s32.totalorder %s112, %s113
    %p127 = scmp.eq.s32.totalorder %s16, 1
    %p128 = por %p126, %p127
    %p130 = scmp.ne.s32.totalorder %s113, %s129
    %p131 = scmp.eq.s32.totalorder %s16, 0
    %p132 = por %p130, %p131
    %p133 = scmp.le.s32.totalorder 1, %s10
    %p134 = scmp.lt.s32.totalorder %s10, 3
    %p135 = pnand %p133, %p134
    %p136 = pneg %p135
    // Predicated region
    $region9: #{_lambda_.18} parent=5 // pred_check
      _
    $region10: #{_lambda_.18} parent=5 // pred_check_branch
      %138 = sbr.rel (%p135) target = $region12
    $region11: #{_lambda_.18} parent=5 // pred_region
      %s139 = ssub.s32 %s10, 1
      // Predicated region
      $region13: #{_lambda_.18} parent=11 // pred_check
        %p140 = pneg %p57
      $region14: #{_lambda_.18} parent=11 // pred_check_branch
        %142 = sbr.rel (%p140) target = $region16
      $region15: #{_lambda_.18} parent=11 // pred_region
        _
      $region16: #{_lambda_.18} parent=11 // pred_fallthru
        _
      // Predicated region
      $region17: #{_lambda_.18} parent=11 // pred_check
        %p143 = pneg %p78
      $region18: #{_lambda_.18} parent=11 // pred_check_branch
        %145 = sbr.rel (%p143) target = $region20
      $region19: #{_lambda_.18} parent=11 // pred_region
        _
      $region20: #{_lambda_.18} parent=11 // pred_fallthru
        _
      // Predicated region
      $region21: #{_lambda_.18} parent=11 // pred_check
        %p146 = pneg %p99
      $region22: #{_lambda_.18} parent=11 // pred_check_branch
        %148 = sbr.rel (%p146) target = $region24
      $region23: #{_lambda_.18} parent=11 // pred_region
        _
      $region24: #{_lambda_.18} parent=11 // pred_fallthru
        _
    $region12: #{_lambda_.18} parent=5 // pred_fallthru
      _
    %p149 = scmp.lt.s32.totalorder %s10, 2
    // Predicated region
    $region25: #{_lambda_.18} parent=5 // pred_check
      %p150 = pneg %p149
    $region26: #{_lambda_.18} parent=5 // pred_check_branch
      %152 = sbr.rel (%p150) target = $region28
    $region27: #{_lambda_.18} parent=5 // pred_region
      // Predicated region
      $region29: #{_lambda_.18} parent=27 // pred_check
        %p153 = pneg %p30
      $region30: #{_lambda_.18} parent=27 // pred_check_branch
        %155 = sbr.rel (%p153) target = $region32
      $region31: #{_lambda_.18} parent=27 // pred_region
        %p156 = scmp.lt.s32.totalorder %s10, 1
        %s157 = scalar_select %p156, %s10, 1
        %s158 = smul.addr %s157, 2
        %s159 = smul.addr %s158, 8
        %s160 = scalar_lea.vmem %s0, %s159
      $region32: #{_lambda_.18} parent=27 // pred_fallthru
        _
    $region28: #{_lambda_.18} parent=5 // pred_fallthru
      _
    %p161 = scmp.le.s32.totalorder 1, %s10
    %p162 = scmp.lt.s32.totalorder %s10, 3
    %p163 = pnand %p161, %p162
    %p164 = pneg %p163
    // Predicated region
    $region33: #{_lambda_.18} parent=5 // pred_check
      _
    $region34: #{_lambda_.18} parent=5 // pred_check_branch
      %166 = sbr.rel (%p163) target = $region36
    $region35: #{_lambda_.18} parent=5 // pred_region
      %s167 = ssub.s32 %s10, 1
      %p168 = scmp.lt.s32.totalorder %s15, 1
      %s169 = scalar_select %p168, %s15, 1
      %s170 = smul.addr %s169, 2
      %s171 = smul.addr %s170, 8
      %s172 = scalar_lea.vmem %s0, %s171
      %p173 = pneg %p36
      %p174 = pneg %p33
      %p175 = pneg %p57
      %p176 = pneg %p54
      %p177 = pneg %p78
      %p178 = pneg %p75
      %p179 = pneg %p99
      %p180 = pneg %p96
      %p181 = pneg %p125
      %p182 = pneg %p122
      %p183 = scmp.lt.s32.totalorder %s15, 1
      %s184 = scalar_select %p183, %s15, 1
      %s185 = smul.addr %s184, 2
      %s186 = smul.addr %s185, 8
      %s187 = scalar_lea.vmem %s4, %s186
      %p188 = scmp.lt.s32.totalorder %s15, 1
      %s189 = scalar_select %p188, %s15, 1
      %s190 = smul.addr %s189, 2
      %s191 = smul.addr %s190, 8
      %s192 = scalar_lea.vmem %s0, %s191
      %p193 = scmp.lt.s32.totalorder %s15, 1
      %s194 = scalar_select %p193, %s15, 1
      %s195 = smul.addr %s194, 2
      %s196 = smul.addr %s195, 8
      %s197 = scalar_lea.vmem %s4, %s196
      %v199 = vld [vmem:[%s3] sm:$0xff]
      %v200 = vld [vmem:[%s3 + $0x8] sm:$0xff]
      %v201 = vld [vmem:[%s192] sm:$0xff]
      %v202 = vld [vmem:[%s192 + $0x8] sm:$0xff]
      %v204 = vrot.slane %v202, 7
      %vm207 = vcmask 1040384
      %v208 = vrot.slane %v201, 7
      %v209 = vsel %vm207, %v208, %v204
      %v212 = vsel %vm207, %v204, %v208
      %v213 = vld [vmem:[%s1] sm:$0x3]
      %v214 = vld [vmem:[%s1 + $0x2] sm:$0x3]
      %v215 = vld [vmem:[%s1 + $0x4] sm:$0x3]
      %v216 = vpack.c.bf16 %v209, %v212
      %v217 = vpack.c.bf16 %v212, %v212
      %vm218 = vsmask.f32 7424
      %v220 = vshrl.u32 %v216, 16
      %v222 = vshll.u32 %v216, 16
      %v224 = vrot.slane %v222, 1
      %v225 = vor.u32 %v220, %v224
      %v227 = vshll.u32 %v217, 16
      %v229 = vrot.slane %v227, 1
      %v230 = vsel %vm218, %v225, %v229
      %vm231 = vcmask 31744
      %v233 = vsel %vm231, %v230, 0
      %vm235 = vcmask 1041408
      %v237 = vsel %vm235, %v214, 0
      %239 = vmatpush.bf16.msra.mxu0 0
      %240 = vmatpush.bf16.msra.mxu0 0
      %241 = vmatpush.bf16.msra.mxu0 0
      %242 = vmatpush.bf16.msra.mxu0 0
      %243 = vmatpush.bf16.msra.mxu0 0
      %244 = vmatpush.bf16.msra.mxu0 0
      %245 = vmatpush.bf16.msra.mxu0 0
      %246 = vmatpush.bf16.msra.mxu0 %v237
      %247 = vmatmul.bf16.gmra.mxu0 %v233
      %v248 = vpop.f32.mrf.mxu0
      %v249 = vadd.f32 0.0, %v248
      %v250 = vpop.f32.mrf.mxu0
      %v251 = vadd.f32 0.0, %v250
      %252 = vdwg.mxu0
      %v253 = vsel %vm231, %v216, 0
      %v256 = vsel %vm235, %v213, 0
      %258 = vmatpush.bf16.msra.mxu0 0
      %259 = vmatpush.bf16.msra.mxu0 0
      %260 = vmatpush.bf16.msra.mxu0 0
      %261 = vmatpush.bf16.msra.mxu0 0
      %262 = vmatpush.bf16.msra.mxu0 0
      %263 = vmatpush.bf16.msra.mxu0 0
      %264 = vmatpush.bf16.msra.mxu0 0
      %265 = vmatpush.bf16.msra.mxu0 %v256
      %266 = vmatmul.bf16.gmra.mxu0 %v253
      %v267 = vpop.f32.mrf.mxu0
      %v268 = vadd.f32 %v249, %v267
      %v269 = vpop.f32.mrf.mxu0
      %v270 = vadd.f32 %v251, %v269
      %271 = vdwg.mxu0
      %vm274 = vcmask 1046528
      %v275 = vrot.slane %v216, 1
      %v276 = vrot.slane %v217, 1
      %v277 = vsel %vm274, %v275, %v276
      %v279 = vsel %vm231, %v277, 0
      %v282 = vsel %vm235, %v215, 0
      %284 = vmatpush.bf16.msra.mxu0 0
      %285 = vmatpush.bf16.msra.mxu0 0
      %286 = vmatpush.bf16.msra.mxu0 0
      %287 = vmatpush.bf16.msra.mxu0 0
      %288 = vmatpush.bf16.msra.mxu0 0
      %289 = vmatpush.bf16.msra.mxu0 0
      %290 = vmatpush.bf16.msra.mxu0 0
      %291 = vmatpush.bf16.msra.mxu0 %v282
      %292 = vmatmul.bf16.gmra.mxu0 %v279
      %v293 = vpop.f32.mrf.mxu0
      %v294 = vadd.f32 0.0, %v293
      %v295 = vpop.f32.mrf.mxu0
      %v296 = vadd.f32 0.0, %v295
      %297 = vdwg.mxu0
      %v298 = vadd.f32 %v268, %v294
      %v299 = vadd.f32 %v270, %v296
      %v300 = vld [vmem:[%s2] sm:$0x1]
      %v302 = vperm.slane %v300, 0
      %v304 = vadd.f32 %v298, %v302
      %v305 = vadd.f32 %v299, %v302
      %v306 = vadd.f32 %v304, %v199
      %v307 = vadd.f32 %v305, %v200
      %vm308 = vcmask 261120
      %309 = vst.msk [vmem:[%s197] sm:$0xff] %vm308, %v306
      %310 = vst.msk [vmem:[%s197 + $0x8] sm:$0xff] %vm308, %v307
      %p311 = scmp.lt.s32.totalorder %s15, 1
      %s312 = scalar_select %p311, %s15, 1
      %s313 = smul.addr %s312, 2
      %s314 = smul.addr %s313, 8
      %s315 = scalar_lea.vmem %s4, %s314
      // Predicated region
      $region37: #{_lambda_.18} parent=35 // pred_check
        %p316 = pneg %p122
      $region38: #{_lambda_.18} parent=35 // pred_check_branch
        %318 = sbr.rel (%p316) target = $region40
      $region39: #{_lambda_.18} parent=35 // pred_region
        _
      $region40: #{_lambda_.18} parent=35 // pred_fallthru
        _
    $region36: #{_lambda_.18} parent=5 // pred_fallthru
      _
    %p319 = scmp.le.s32.totalorder 2, %s10
    // Predicated region
    $region41: #{_lambda_.18} parent=5 // pred_check
      %p320 = pneg %p319
    $region42: #{_lambda_.18} parent=5 // pred_check_branch
      %322 = sbr.rel (%p320) target = $region44
    $region43: #{_lambda_.18} parent=5 // pred_region
      %s323 = ssub.s32 %s10, 2
      // Predicated region
      $region45: #{_lambda_.18} parent=43 // pred_check
        %p324 = pneg %p128
      $region46: #{_lambda_.18} parent=43 // pred_check_branch
        %326 = sbr.rel (%p324) target = $region48
      $region47: #{_lambda_.18} parent=43 // pred_region
        %p327 = scmp.lt.s32.totalorder %s16, 1
        %s328 = scalar_select %p327, %s16, 1
        %s329 = smul.addr %s328, 2
        %s330 = smul.addr %s329, 8
        %s331 = scalar_lea.vmem %s4, %s330
      $region48: #{_lambda_.18} parent=43 // pred_fallthru
        _
    $region44: #{_lambda_.18} parent=5 // pred_fallthru
      _
  $region6: #{_lambda_.18} parent=0 // loop_footer
    %s14 = sadd.s32 1, %s10
  $region7: #{_lambda_.18} parent=0 // loop_footer_branch
    %9 = sbr.rel target = $region3
  $region8: #{_lambda_.18} parent=0 // loop_exit
    _

// kernel: _lambda_.21
$region0: #{_lambda_.21}
  #allocation0 [shape = 'u32[]', space=smem, size = 0x4, offset = 0x4, fixed_abs, tag = 'smem constant byte address 0x4 - core index']
  #allocation1 [shape = 'u32[72,128]{1,0:T(1,128)}', space=vmem, size = 0x9000, scoped, tag = 'internal scratch']
  %s0 = inlined_call_operand.vmem [shape: bf16[2,16,16], index: 0, kind: input, shape index: {}]
  %s1 = inlined_call_operand.vmem [shape: f32[2,16,32], index: 1, kind: input, shape index: {}]
  %s2 = inlined_call_operand.vmem [shape: f32[2,16,32], index: 2, kind: input, shape index: {}]
  %s3 = inlined_call_operand.vmem [shape: bf16[32,32], index: 3, kind: input, shape index: {}]
  %s4 = inlined_call_operand.vmem [shape: f32[1,32], index: 4, kind: input, shape index: {}]
  %s5 = inlined_call_operand.vmem [shape: f32[16,16], index: 5, kind: input, shape index: {}]
  %s6 = inlined_call_operand.vmem [shape: f32[2,16,32], index: 6, kind: output, shape index: {0}]
  %s7 = inlined_call_operand.hbm [shape: f32[2,16,32], index: 7, kind: output, shape index: {1}]
  %8 = xla_tuple %s6, %s7
  %s9 = sld [smem:[#allocation0]]
  $region65: #{_lambda_.21} parent=0
    _
  %s11 = ssub.s32 1, %s9
  %s12 = scalar_select 0, %s11, %s9
  $region1: #{_lambda_.21} parent=0
    #allocation2 [shape = 'u8[16384]{0}', space=vmem, size = 0x4000, scoped, tag = 'output window, operand 1']
    #allocation3 [shape = 's32[2]{0}', space=sflag, size = 0x8, scoped, tag = 'scoped memory for _lambda_.21']
    %13 = vsyncpa [#allocation3], 0
    %s14 = scalar_lea.sflag [#allocation3], 1
    %15 = vsyncpa %s14, 0
    loop: start=0, step=1, limit=4
    $region2: #{_lambda_.21} parent=1 // loop_pre_header
      _
    $region3: #{_lambda_.21} parent=1 // loop_header
      %s17 = sphi 0, %s21
      %p18 = scmp.ge.s32.totalorder %s17, 4
      %s27 = sphi 0, %s29
      %s30 = sphi 0, %s27
      %s31 = sphi 0, %s30
      %s47 = sphi 0, %s31
      %s53 = sphi 0, %s55
      %s56 = sphi 0, %s53
      %s57 = sphi 0, %s56
      %s73 = sphi 0, %s57
      %s79 = sphi 0, %s81
      %s82 = sphi 0, %s79
      %s83 = sphi 0, %s82
      %s99 = sphi 0, %s83
      %s103 = sphi 0, %s103
      %s105 = sphi 0, %s103
      %s106 = sphi 0, %s105
      %s120 = sphi 0, %s106
      %s124 = sphi 0, %s124
      %s126 = sphi 0, %s124
      %s127 = sphi 0, %s126
      %s141 = sphi 0, %s127
      %s145 = sphi 0, %s145
      %s147 = sphi 0, %s145
      %s148 = sphi 0, %s147
      %s162 = sphi 0, %s148
      %s168 = sphi 0, %s170
      %s171 = sphi 0, %s168
      %s172 = sphi 0, %s171
      %s188 = sphi 0, %s172
      %s194 = sphi 0, %s196
      %s197 = sphi 0, %s194
      %s198 = sphi 0, %s197
      %s214 = sphi 0, %s198
    $region4: #{_lambda_.21} parent=1 // loop_header_branch
      %20 = sbr.rel (%p18) target = $region8
    $region5: #{_lambda_.21} parent=1 // loop_body
      %s22 = ssub.s32 %s17, 1
      %s23 = ssub.s32 %s17, 2
      %s24 = sadd.s32 %s17, 1
      %s25 = ssub.s32 %s17, %s24
      %p26 = scmp.eq.s32.totalorder %s25, 0
      %s28 = sadd.s32 %s27, 1
      %s29 = scalar_select %p26, %s27, %s28
      %p32 = pneg %p26
      %p33 = scmp.eq.s32.totalorder %s17, 1
      %p34 = por %p32, %p33
      %p35 = scmp.ne.s32.totalorder %s27, %s30
      %p36 = scmp.eq.s32.totalorder %s17, 0
      %p37 = por %p35, %p36
      %p38 = scmp.ne.s32.totalorder %s27, %s30
      %p39 = scmp.eq.s32.totalorder %s22, 1
      %p40 = por %p38, %p39
      %p41 = scmp.ne.s32.totalorder %s30, %s31
      %p42 = scmp.eq.s32.totalorder %s22, 0
      %p43 = por %p41, %p42
      %p44 = scmp.ne.s32.totalorder %s30, %s31
      %p45 = scmp.eq.s32.totalorder %s23, 1
      %p46 = por %p44, %p45
      %p48 = scmp.ne.s32.totalorder %s31, %s47
      %p49 = scmp.eq.s32.totalorder %s23, 0
      %p50 = por %p48, %p49
      %s51 = ssub.s32 %s17, %s24
      %p52 = scmp.eq.s32.totalorder %s51, 0
      %s54 = sadd.s32 %s53, 1
      %s55 = scalar_select %p52, %s53, %s54
      %p58 = pneg %p52
      %p59 = scmp.eq.s32.totalorder %s17, 1
      %p60 = por %p58, %p59
      %p61 = scmp.ne.s32.totalorder %s53, %s56
      %p62 = scmp.eq.s32.totalorder %s17, 0
      %p63 = por %p61, %p62
      %p64 = scmp.ne.s32.totalorder %s53, %s56
      %p65 = scmp.eq.s32.totalorder %s22, 1
      %p66 = por %p64, %p65
      %p67 = scmp.ne.s32.totalorder %s56, %s57
      %p68 = scmp.eq.s32.totalorder %s22, 0
      %p69 = por %p67, %p68
      %p70 = scmp.ne.s32.totalorder %s56, %s57
      %p71 = scmp.eq.s32.totalorder %s23, 1
      %p72 = por %p70, %p71
      %p74 = scmp.ne.s32.totalorder %s57, %s73
      %p75 = scmp.eq.s32.totalorder %s23, 0
      %p76 = por %p74, %p75
      %s77 = ssub.s32 %s17, %s24
      %p78 = scmp.eq.s32.totalorder %s77, 0
      %s80 = sadd.s32 %s79, 1
      %s81 = scalar_select %p78, %s79, %s80
      %p84 = pneg %p78
      %p85 = scmp.eq.s32.totalorder %s17, 1
      %p86 = por %p84, %p85
      %p87 = scmp.ne.s32.totalorder %s79, %s82
      %p88 = scmp.eq.s32.totalorder %s17, 0
      %p89 = por %p87, %p88
      %p90 = scmp.ne.s32.totalorder %s79, %s82
      %p91 = scmp.eq.s32.totalorder %s22, 1
      %p92 = por %p90, %p91
      %p93 = scmp.ne.s32.totalorder %s82, %s83
      %p94 = scmp.eq.s32.totalorder %s22, 0
      %p95 = por %p93, %p94
      %p96 = scmp.ne.s32.totalorder %s82, %s83
      %p97 = scmp.eq.s32.totalorder %s23, 1
      %p98 = por %p96, %p97
      %p100 = scmp.ne.s32.totalorder %s83, %s99
      %p101 = scmp.eq.s32.totalorder %s23, 0
      %p102 = por %p100, %p101
      %s104 = sadd.s32 %s103, 1
      %p107 = scmp.eq.s32.totalorder %s17, 1
      %p108 = scmp.ne.s32.totalorder %s103, %s105
      %p109 = scmp.eq.s32.totalorder %s17, 0
      %p110 = por %p108, %p109
      %p111 = scmp.ne.s32.totalorder %s103, %s105
      %p112 = scmp.eq.s32.totalorder %s22, 1
      %p113 = por %p111, %p112
      %p114 = scmp.ne.s32.totalorder %s105, %s106
      %p115 = scmp.eq.s32.totalorder %s22, 0
      %p116 = por %p114, %p115
      %p117 = scmp.ne.s32.totalorder %s105, %s106
      %p118 = scmp.eq.s32.totalorder %s23, 1
      %p119 = por %p117, %p118
      %p121 = scmp.ne.s32.totalorder %s106, %s120
      %p122 = scmp.eq.s32.totalorder %s23, 0
      %p123 = por %p121, %p122
      %s125 = sadd.s32 %s124, 1
      %p128 = scmp.eq.s32.totalorder %s17, 1
      %p129 = scmp.ne.s32.totalorder %s124, %s126
      %p130 = scmp.eq.s32.totalorder %s17, 0
      %p131 = por %p129, %p130
      %p132 = scmp.ne.s32.totalorder %s124, %s126
      %p133 = scmp.eq.s32.totalorder %s22, 1
      %p134 = por %p132, %p133
      %p135 = scmp.ne.s32.totalorder %s126, %s127
      %p136 = scmp.eq.s32.totalorder %s22, 0
      %p137 = por %p135, %p136
      %p138 = scmp.ne.s32.totalorder %s126, %s127
      %p139 = scmp.eq.s32.totalorder %s23, 1
      %p140 = por %p138, %p139
      %p142 = scmp.ne.s32.totalorder %s127, %s141
      %p143 = scmp.eq.s32.totalorder %s23, 0
      %p144 = por %p142, %p143
      %s146 = sadd.s32 %s145, 1
      %p149 = scmp.eq.s32.totalorder %s17, 1
      %p150 = scmp.ne.s32.totalorder %s145, %s147
      %p151 = scmp.eq.s32.totalorder %s17, 0
      %p152 = por %p150, %p151
      %p153 = scmp.ne.s32.totalorder %s145, %s147
      %p154 = scmp.eq.s32.totalorder %s22, 1
      %p155 = por %p153, %p154
      %p156 = scmp.ne.s32.totalorder %s147, %s148
      %p157 = scmp.eq.s32.totalorder %s22, 0
      %p158 = por %p156, %p157
      %p159 = scmp.ne.s32.totalorder %s147, %s148
      %p160 = scmp.eq.s32.totalorder %s23, 1
      %p161 = por %p159, %p160
      %p163 = scmp.ne.s32.totalorder %s148, %s162
      %p164 = scmp.eq.s32.totalorder %s23, 0
      %p165 = por %p163, %p164
      %s166 = ssub.s32 %s17, %s24
      %p167 = scmp.eq.s32.totalorder %s166, 0
      %s169 = sadd.s32 %s168, 1
      %s170 = scalar_select %p167, %s168, %s169
      %p173 = pneg %p167
      %p174 = scmp.eq.s32.totalorder %s17, 1
      %p175 = por %p173, %p174
      %p176 = scmp.ne.s32.totalorder %s168, %s171
      %p177 = scmp.eq.s32.totalorder %s17, 0
      %p178 = por %p176, %p177
      %p179 = scmp.ne.s32.totalorder %s168, %s171
      %p180 = scmp.eq.s32.totalorder %s22, 1
      %p181 = por %p179, %p180
      %p182 = scmp.ne.s32.totalorder %s171, %s172
      %p183 = scmp.eq.s32.totalorder %s22, 0
      %p184 = por %p182, %p183
      %p185 = scmp.ne.s32.totalorder %s171, %s172
      %p186 = scmp.eq.s32.totalorder %s23, 1
      %p187 = por %p185, %p186
      %p189 = scmp.ne.s32.totalorder %s172, %s188
      %p190 = scmp.eq.s32.totalorder %s23, 0
      %p191 = por %p189, %p190
      %s192 = ssub.s32 %s17, %s24
      %p193 = scmp.eq.s32.totalorder %s192, 0
      %s195 = sadd.s32 %s194, 1
      %s196 = scalar_select %p193, %s194, %s195
      %p199 = pneg %p193
      %p200 = scmp.eq.s32.totalorder %s17, 1
      %p201 = por %p199, %p200
      %p202 = scmp.ne.s32.totalorder %s194, %s197
      %p203 = scmp.eq.s32.totalorder %s17, 0
      %p204 = por %p202, %p203
      %p205 = scmp.ne.s32.totalorder %s194, %s197
      %p206 = scmp.eq.s32.totalorder %s22, 1
      %p207 = por %p205, %p206
      %p208 = scmp.ne.s32.totalorder %s197, %s198
      %p209 = scmp.eq.s32.totalorder %s22, 0
      %p210 = por %p208, %p209
      %p211 = scmp.ne.s32.totalorder %s197, %s198
      %p212 = scmp.eq.s32.totalorder %s23, 1
      %p213 = por %p211, %p212
      %p215 = scmp.ne.s32.totalorder %s198, %s214
      %p216 = scmp.eq.s32.totalorder %s23, 0
      %p217 = por %p215, %p216
      %p218 = scmp.le.s32.totalorder 1, %s17
      %p219 = scmp.lt.s32.totalorder %s17, 3
      %p220 = pnand %p218, %p219
      %p221 = pneg %p220
      // Predicated region
      $region9: #{_lambda_.21} parent=5 // pred_check
        _
      $region10: #{_lambda_.21} parent=5 // pred_check_branch
        %223 = sbr.rel (%p220) target = $region12
      $region11: #{_lambda_.21} parent=5 // pred_region
        %s224 = ssub.s32 %s17, 1
        // Predicated region
        $region13: #{_lambda_.21} parent=11 // pred_check
          %p225 = pneg %p116
        $region14: #{_lambda_.21} parent=11 // pred_check_branch
          %227 = sbr.rel (%p225) target = $region16
        $region15: #{_lambda_.21} parent=11 // pred_region
          _
        $region16: #{_lambda_.21} parent=11 // pred_fallthru
          _
        // Predicated region
        $region17: #{_lambda_.21} parent=11 // pred_check
          %p228 = pneg %p137
        $region18: #{_lambda_.21} parent=11 // pred_check_branch
          %230 = sbr.rel (%p228) target = $region20
        $region19: #{_lambda_.21} parent=11 // pred_region
          _
        $region20: #{_lambda_.21} parent=11 // pred_fallthru
          _
        // Predicated region
        $region21: #{_lambda_.21} parent=11 // pred_check
          %p231 = pneg %p158
        $region22: #{_lambda_.21} parent=11 // pred_check_branch
          %233 = sbr.rel (%p231) target = $region24
        $region23: #{_lambda_.21} parent=11 // pred_region
          _
        $region24: #{_lambda_.21} parent=11 // pred_fallthru
          _
      $region12: #{_lambda_.21} parent=5 // pred_fallthru
        _
      %p234 = scmp.lt.s32.totalorder %s17, 2
      // Predicated region
      $region25: #{_lambda_.21} parent=5 // pred_check
        %p235 = pneg %p234
      $region26: #{_lambda_.21} parent=5 // pred_check_branch
        %237 = sbr.rel (%p235) target = $region28
      $region27: #{_lambda_.21} parent=5 // pred_region
        // Predicated region
        $region29: #{_lambda_.21} parent=27 // pred_check
          %p238 = pneg %p37
        $region30: #{_lambda_.21} parent=27 // pred_check_branch
          %240 = sbr.rel (%p238) target = $region32
        $region31: #{_lambda_.21} parent=27 // pred_region
          %p241 = scmp.lt.s32.totalorder %s17, 1
          %s242 = scalar_select %p241, %s17, 1
          %s243 = smul.addr %s242, 2
          %s244 = smul.addr %s243, 4
          %s245 = scalar_lea.vmem %s0, %s244
        $region32: #{_lambda_.21} parent=27 // pred_fallthru
          _
        // Predicated region
        $region33: #{_lambda_.21} parent=27 // pred_check
          %p246 = pneg %p63
        $region34: #{_lambda_.21} parent=27 // pred_check_branch
          %248 = sbr.rel (%p246) target = $region36
        $region35: #{_lambda_.21} parent=27 // pred_region
          %p249 = scmp.lt.s32.totalorder %s17, 1
          %s250 = scalar_select %p249, %s17, 1
          %s251 = smul.addr %s250, 2
          %s252 = smul.addr %s251, 8
          %s253 = scalar_lea.vmem %s1, %s252
        $region36: #{_lambda_.21} parent=27 // pred_fallthru
          _
        // Predicated region
        $region37: #{_lambda_.21} parent=27 // pred_check
          %p254 = pneg %p89
        $region38: #{_lambda_.21} parent=27 // pred_check_branch
          %256 = sbr.rel (%p254) target = $region40
        $region39: #{_lambda_.21} parent=27 // pred_region
          %p257 = scmp.lt.s32.totalorder %s17, 1
          %s258 = scalar_select %p257, %s17, 1
          %s259 = smul.addr %s258, 2
          %s260 = smul.addr %s259, 8
          %s261 = scalar_lea.vmem %s2, %s260
        $region40: #{_lambda_.21} parent=27 // pred_fallthru
          _
      $region28: #{_lambda_.21} parent=5 // pred_fallthru
        _
      %p262 = scmp.le.s32.totalorder 1, %s17
      %p263 = scmp.lt.s32.totalorder %s17, 3
      %p264 = pnand %p262, %p263
      %p265 = pneg %p264
      // Predicated region
      $region41: #{_lambda_.21} parent=5 // pred_check
        _
      $region42: #{_lambda_.21} parent=5 // pred_check_branch
        %267 = sbr.rel (%p264) target = $region44
      $region43: #{_lambda_.21} parent=5 // pred_region
        %s268 = ssub.s32 %s17, 1
        %p269 = scmp.lt.s32.totalorder %s22, 1
        %s270 = scalar_select %p269, %s22, 1
        %s271 = smul.addr %s270, 2
        %s272 = smul.addr %s271, 4
        %s273 = scalar_lea.vmem %s0, %s272
        %p274 = pneg %p43
        %p275 = pneg %p40
        %p276 = scmp.lt.s32.totalorder %s22, 1
        %s277 = scalar_select %p276, %s22, 1
        %s278 = smul.addr %s277, 2
        %s279 = smul.addr %s278, 8
        %s280 = scalar_lea.vmem %s1, %s279
        %p281 = pneg %p69
        %p282 = pneg %p66
        %p283 = scmp.lt.s32.totalorder %s22, 1
        %s284 = scalar_select %p283, %s22, 1
        %s285 = smul.addr %s284, 2
        %s286 = smul.addr %s285, 8
        %s287 = scalar_lea.vmem %s2, %s286
        %p288 = pneg %p95
        %p289 = pneg %p92
        %p290 = pneg %p116
        %p291 = pneg %p113
        %p292 = pneg %p137
        %p293 = pneg %p134
        %p294 = pneg %p158
        %p295 = pneg %p155
        %p296 = pneg %p184
        %p297 = pneg %p181
        %p298 = scmp.lt.s32.totalorder %s22, 1
        %s299 = scalar_select %p298, %s22, 1
        %s300 = smul.addr %s299, 2
        %s301 = smul.addr %s300, 8
        %s302 = scalar_lea.vmem %s6, %s301
        %p303 = pneg %p210
        %p304 = pneg %p207
        %s305 = sand.u32 %s197, 1
        %s306 = scalar_lea.sflag [#allocation3], %s305
        %s307 = sand.u32 %s197, 1
        %s308 = smul.addr %s307, 16
        %s309 = scalar_lea.vmem [#allocation2], %s308
        %p310 = scmp.lt.s32.totalorder %s22, 1
        %s311 = scalar_select %p310, %s22, 1
        %s312 = smul.addr %s311, 2
        %s313 = smul.addr %s312, 4
        %s314 = scalar_lea.vmem %s0, %s313
        %p315 = scmp.lt.s32.totalorder %s22, 1
        %s316 = scalar_select %p315, %s22, 1
        %s317 = smul.addr %s316, 2
        %s318 = smul.addr %s317, 8
        %s319 = scalar_lea.vmem %s1, %s318
        %p320 = scmp.lt.s32.totalorder %s22, 1
        %s321 = scalar_select %p320, %s22, 1
        %s322 = smul.addr %s321, 2
        %s323 = smul.addr %s322, 8
        %s324 = scalar_lea.vmem %s2, %s323
        %p325 = scmp.lt.s32.totalorder %s22, 1
        %s326 = scalar_select %p325, %s22, 1
        %s327 = smul.addr %s326, 2
        %s328 = smul.addr %s327, 8
        %s329 = scalar_lea.vmem %s6, %s328
        %v331 = vld [vmem:[%s314] sm:$0xf]
        %v332 = vld [vmem:[%s314 + $0x4] sm:$0xf]
        %v333 = vld [vmem:[%s319] sm:$0xff]
        %v334 = vld [vmem:[%s319 + $0x8] sm:$0xff]
        %v335 = vpack.c.bf16 %v334, %v333
        %v338 = vunpack.c.l.b16 %v331
        %v339 = vunpack.c.l.b16 %v332
        %v340 = vpack.c.b16 %v339, %v338
        %vm341 = vcmask 130048
        %v343 = vsel %vm341, %v340, 0
        %345 = vmatpush.bf16.msra.mxu0 0
        %346 = vmatpush.bf16.msra.mxu0 0
        %347 = vmatpush.bf16.msra.mxu0 0
        %348 = vmatpush.bf16.msra.mxu0 0
        %349 = vmatpush.bf16.msra.mxu0 0
        %350 = vmatpush.bf16.msra.mxu0 0
        %351 = vmatpush.bf16.msra.mxu0 0
        %352 = vmatpush.bf16.msra.mxu0 %v335
        %353 = vmatmul.bf16.gmra.mxu0 %v343
        %v354 = vpop.f32.mrf.mxu0
        %v355 = vadd.f32 0.0, %v354
        %v356 = vpop.f32.mrf.mxu0
        %v357 = vadd.f32 0.0, %v356
        %358 = vdwg.mxu0
        %v359 = vpack.c.bf16 %v357, %v355
        %v360 = vld [vmem:[%s3] sm:$0xf]
        %v361 = vld [vmem:[%s3 + $0x4] sm:$0xf]
        %v362 = vld [vmem:[%s3 + $0x8] sm:$0xf]
        %v363 = vld [vmem:[%s3 + $0xc] sm:$0xf]
        %v364 = vld [vmem:[%s4] sm:$0x1]
        %v366 = vperm.slane %v364, 0
        %v372 = vunpack.c.l.b16 %v360
        %v373 = vunpack.c.l.b16 %v361
        %v374 = vunpack.c.l.b16 %v362
        %v375 = vunpack.c.l.b16 %v363
        %v376 = vpack.c.b16 %v373, %v372
        %v377 = vpack.c.b16 %v375, %v374
        %vm380 = vcmask 261120
        %v382 = vsel %vm380, %v359, 0
        %384 = vmatpush.bf16.msra.mxu0 0
        %385 = vmatpush.bf16.msra.mxu0 0
        %386 = vmatpush.bf16.msra.mxu0 0
        %387 = vmatpush.bf16.msra.mxu0 0
        %388 = vmatpush.bf16.msra.mxu0 0
        %389 = vmatpush.bf16.msra.mxu0 0
        %390 = vmatpush.bf16.msra.mxu0 %v377
        %391 = vmatpush.bf16.msra.mxu0 %v376
        %392 = vmatmul.bf16.gmra.mxu0 %v382
        %v393 = vpop.f32.mrf.mxu0
        %v394 = vadd.f32 %v366, %v393
        %v395 = vpop.f32.mrf.mxu0
        %v396 = vadd.f32 %v366, %v395
        %397 = vdwg.mxu0
        %v398 = vld [vmem:[%s324] sm:$0xff]
        %v399 = vld [vmem:[%s324 + $0x8] sm:$0xff]
        %v400 = vadd.f32 %v398, %v394
        %v401 = vadd.f32 %v399, %v396
        %v402 = vld [vmem:[%s5] sm:$0xff]
        %v403 = vld [vmem:[%s5 + $0x8] sm:$0xff]
        %v404 = vpack.c.bf16 %v403, %v402
        %v405 = vpack.c.bf16 %v401, %v400
        %v407 = vsel %vm341, %v404, 0
        %409 = vmatpush.bf16.msra.mxu0 0
        %410 = vmatpush.bf16.msra.mxu0 0
        %411 = vmatpush.bf16.msra.mxu0 0
        %412 = vmatpush.bf16.msra.mxu0 0
        %413 = vmatpush.bf16.msra.mxu0 0
        %414 = vmatpush.bf16.msra.mxu0 0
        %415 = vmatpush.bf16.msra.mxu0 0
        %416 = vmatpush.bf16.msra.mxu0 %v405
        %417 = vmatmul.bf16.gmra.mxu0 %v407
        %v418 = vpop.f32.mrf.mxu0
        %v419 = vadd.f32 0.0, %v418
        %v420 = vpop.f32.mrf.mxu0
        %v421 = vadd.f32 0.0, %v420
        %422 = vdwg.mxu0
        %423 = vst.msk [vmem:[%s309] sm:$0xff] %vm380, %v419
        %424 = vst.msk [vmem:[%s309 + $0x8] sm:$0xff] %vm380, %v421
        %v425 = vsub.f32 %v400, %v419
        %v426 = vsub.f32 %v401, %v421
        %427 = vst.msk [vmem:[%s329] sm:$0xff] %vm380, %v425
        %428 = vst.msk [vmem:[%s329 + $0x8] sm:$0xff] %vm380, %v426
        %p429 = scmp.lt.s32.totalorder %s22, 1
        %s430 = scalar_select %p429, %s22, 1
        %s431 = smul.addr %s430, 2
        %s432 = smul.addr %s431, 8
        %s433 = scalar_lea.vmem %s6, %s432
        %s434 = sand.u32 %s197, 1
        %s435 = scalar_lea.sflag [#allocation3], %s434
        %s436 = sand.u32 %s197, 1
        %s437 = smul.addr %s436, 16
        %s438 = scalar_lea.vmem [#allocation2], %s437
        // Predicated region
        $region45: #{_lambda_.21} parent=43 // pred_check
          %p439 = pneg %p181
        $region46: #{_lambda_.21} parent=43 // pred_check_branch
          %441 = sbr.rel (%p439) target = $region48
        $region47: #{_lambda_.21} parent=43 // pred_region
          _
        $region48: #{_lambda_.21} parent=43 // pred_fallthru
          _
        // Predicated region
        $region49: #{_lambda_.21} parent=43 // pred_check
          %p442 = pneg %p207
        $region50: #{_lambda_.21} parent=43 // pred_check_branch
          %444 = sbr.rel (%p442) target = $region52
        $region51: #{_lambda_.21} parent=43 // pred_region
          %446 = vsyncadd %s435, 0
          %s447 = smul.addr %s22, 2
          %s448 = smul.addr %s447, 8
          %s449 = scalar_lea.hbm %s7, %s448
          %s450 = sshll.u32 %s438, 4
          %s451 = int_to_ptr.vmem [resolvable:$true] %s450
          %s452 = sshll.u32 %s449, 4
          %s453 = int_to_ptr.hbm [resolvable:$true] %s452
          %458 = dma.vmem_to_hbm [thread:$0]  %s451, 256, %s453, %s435, 128, 128, 8
        $region52: #{_lambda_.21} parent=43 // pred_fallthru
          _
      $region44: #{_lambda_.21} parent=5 // pred_fallthru
        _
      %p459 = scmp.le.s32.totalorder 2, %s17
      // Predicated region
      $region53: #{_lambda_.21} parent=5 // pred_check
        %p460 = pneg %p459
      $region54: #{_lambda_.21} parent=5 // pred_check_branch
        %462 = sbr.rel (%p460) target = $region56
      $region55: #{_lambda_.21} parent=5 // pred_region
        %s463 = ssub.s32 %s17, 2
        // Predicated region
        $region57: #{_lambda_.21} parent=55 // pred_check
          %p464 = pneg %p187
        $region58: #{_lambda_.21} parent=55 // pred_check_branch
          %466 = sbr.rel (%p464) target = $region60
        $region59: #{_lambda_.21} parent=55 // pred_region
          %p467 = scmp.lt.s32.totalorder %s23, 1
          %s468 = scalar_select %p467, %s23, 1
          %s469 = smul.addr %s468, 2
          %s470 = smul.addr %s469, 8
          %s471 = scalar_lea.vmem %s6, %s470
        $region60: #{_lambda_.21} parent=55 // pred_fallthru
          _
        // Predicated region
        $region61: #{_lambda_.21} parent=55 // pred_check
          %p472 = pneg %p213
        $region62: #{_lambda_.21} parent=55 // pred_check_branch
          %474 = sbr.rel (%p472) target = $region64
        $region63: #{_lambda_.21} parent=55 // pred_region
          %s475 = sand.u32 %s198, 1
          %s476 = scalar_lea.sflag [#allocation3], %s475
          %s477 = sand.u32 %s198, 1
          %s478 = smul.addr %s477, 16
          %s479 = scalar_lea.vmem [#allocation2], %s478
          %481 = dma.done %s476, 256
        $region64: #{_lambda_.21} parent=55 // pred_fallthru
          _
      $region56: #{_lambda_.21} parent=5 // pred_fallthru
        _
    $region6: #{_lambda_.21} parent=1 // loop_footer
      %s21 = sadd.s32 1, %s17
    $region7: #{_lambda_.21} parent=1 // loop_footer_branch
      %16 = sbr.rel target = $region3
    $region8: #{_lambda_.21} parent=1 // loop_exit
      _
    %482 = vsyncpa [#allocation3], 1
    %s483 = scalar_lea.sflag [#allocation3], 1
    %484 = vsyncpa %s483, 1

// kernel: _lambda_.28
$region0: #{_lambda_.28}
  #allocation0 [shape = 'u32[]', space=smem, size = 0x4, offset = 0x4, fixed_abs, tag = 'smem constant byte address 0x4 - core index']
  #allocation1 [shape = 'u32[72,128]{1,0:T(1,128)}', space=vmem, size = 0x9000, scoped, tag = 'internal scratch']
  %s0 = inlined_call_operand.vmem [shape: f32[32,32], index: 0, kind: input, shape index: {}]
  %s1 = inlined_call_operand.vmem [shape: bf16[32,64], index: 1, kind: input, shape index: {}]
  %s2 = inlined_call_operand.vmem [shape: f32[1,64], index: 2, kind: input, shape index: {}]
  %s3 = inlined_call_operand.vmem [shape: f32[32,32], index: 3, kind: output, shape index: {0}]
  %s4 = inlined_call_operand.vmem [shape: f32[32,32], index: 4, kind: output, shape index: {1}]
  %5 = xla_tuple %s3, %s4
  %s6 = sld [smem:[#allocation0]]
  $region30: #{_lambda_.28} parent=0
    _
  %s8 = ssub.s32 1, %s6
  %s9 = scalar_select 0, %s8, %s6
  // Predicated region
  $region2: #{_lambda_.28} parent=0 // pred_check
    _
  $region3: #{_lambda_.28} parent=0 // pred_check_branch
    %11 = sbr.rel (0) target = $region5
  $region4: #{_lambda_.28} parent=0 // pred_region
    _
  $region5: #{_lambda_.28} parent=0 // pred_fallthru
    _
  // Predicated region
  $region6: #{_lambda_.28} parent=0 // pred_check
    _
  $region7: #{_lambda_.28} parent=0 // pred_check_branch
    %13 = sbr.rel (0) target = $region9
  $region8: #{_lambda_.28} parent=0 // pred_region
    _
  $region9: #{_lambda_.28} parent=0 // pred_fallthru
    _
  // Predicated region
  $region10: #{_lambda_.28} parent=0 // pred_check
    _
  $region11: #{_lambda_.28} parent=0 // pred_check_branch
    %15 = sbr.rel (0) target = $region13
  $region12: #{_lambda_.28} parent=0 // pred_region
    _
  $region13: #{_lambda_.28} parent=0 // pred_fallthru
    _
  %v17 = vld [vmem:[%s0] sm:$0xff]
  %v18 = vld [vmem:[%s0 + $0x8] sm:$0xff]
  %v19 = vld [vmem:[%s0 + $0x10] sm:$0xff]
  %v20 = vld [vmem:[%s0 + $0x18] sm:$0xff]
  %v21 = vpack.c.bf16 %v18, %v17
  %v22 = vpack.c.bf16 %v20, %v19
  %v23 = vld [vmem:[%s1] sm:$0xf]
  %v24 = vld [vmem:[%s1 + $0x4] sm:$0xf]
  %v25 = vld [vmem:[%s1 + $0x8] sm:$0xf]
  %v26 = vld [vmem:[%s1 + $0xc] sm:$0xf]
  %v27 = vld [vmem:[%s2] sm:$0x1]
  %v29 = vperm.slane %v27, 0
  %v35 = vunpack.c.l.b16 %v23
  %v36 = vunpack.c.l.b16 %v24
  %v37 = vunpack.c.l.b16 %v25
  %v38 = vunpack.c.l.b16 %v26
  %v39 = vpack.c.b16 %v36, %v35
  %v40 = vpack.c.b16 %v38, %v37
  %vm43 = vcmask 261120
  %v45 = vsel %vm43, %v21, 0
  %v48 = vsel %vm43, %v22, 0
  %50 = vmatpush.bf16.msra.mxu0 0
  %51 = vmatpush.bf16.msra.mxu0 0
  %52 = vmatpush.bf16.msra.mxu0 0
  %53 = vmatpush.bf16.msra.mxu0 0
  %54 = vmatpush.bf16.msra.mxu0 0
  %55 = vmatpush.bf16.msra.mxu0 0
  %56 = vmatpush.bf16.msra.mxu0 %v40
  %57 = vmatpush.bf16.msra.mxu0 %v39
  %58 = vmatmul.bf16.gmra.mxu0 %v45
  %v59 = vpop.f32.mrf.mxu0
  %v60 = vadd.f32 %v29, %v59
  %v61 = vpop.f32.mrf.mxu0
  %v62 = vadd.f32 %v29, %v61
  %63 = vmatmul.bf16.gmra.mxu0 %v48
  %v64 = vpop.f32.mrf.mxu0
  %v65 = vadd.f32 %v29, %v64
  %v66 = vpop.f32.mrf.mxu0
  %v67 = vadd.f32 %v29, %v66
  %68 = vdwg.mxu0
  %69 = vst.msk [vmem:[%s3] sm:$0xff] %vm43, %v60
  %70 = vst.msk [vmem:[%s3 + $0x8] sm:$0xff] %vm43, %v62
  %71 = vst.msk [vmem:[%s3 + $0x10] sm:$0xff] %vm43, %v65
  %72 = vst.msk [vmem:[%s3 + $0x18] sm:$0xff] %vm43, %v67
  %77 = vrot.lane.b32.xlu0 %v60, 96
  %v78 = vpop.permute.xlu0 %77
  %79 = vrot.lane.b32.xlu0 %v62, 96
  %v80 = vpop.permute.xlu0 %79
  %81 = vrot.lane.b32.xlu0 %v65, 96
  %v82 = vpop.permute.xlu0 %81
  %83 = vrot.lane.b32.xlu0 %v67, 96
  %v84 = vpop.permute.xlu0 %83
  %89 = vst.msk [vmem:[%s4] sm:$0xff] %vm43, %v78
  %90 = vst.msk [vmem:[%s4 + $0x8] sm:$0xff] %vm43, %v80
  %91 = vst.msk [vmem:[%s4 + $0x10] sm:$0xff] %vm43, %v82
  %92 = vst.msk [vmem:[%s4 + $0x18] sm:$0xff] %vm43, %v84
  // Predicated region
  $region14: #{_lambda_.28} parent=0 // pred_check
    _
  $region15: #{_lambda_.28} parent=0 // pred_check_branch
    %94 = sbr.rel (0) target = $region17
  $region16: #{_lambda_.28} parent=0 // pred_region
    _
  $region17: #{_lambda_.28} parent=0 // pred_fallthru
    _
  // Predicated region
  $region18: #{_lambda_.28} parent=0 // pred_check
    _
  $region19: #{_lambda_.28} parent=0 // pred_check_branch
    %96 = sbr.rel (0) target = $region21
  $region20: #{_lambda_.28} parent=0 // pred_region
    _
  $region21: #{_lambda_.28} parent=0 // pred_fallthru
    _
  // Predicated region
  $region22: #{_lambda_.28} parent=0 // pred_check
    _
  $region23: #{_lambda_.28} parent=0 // pred_check_branch
    %98 = sbr.rel (0) target = $region25
  $region24: #{_lambda_.28} parent=0 // pred_region
    _
  $region25: #{_lambda_.28} parent=0 // pred_fallthru
    _
  // Predicated region
  $region26: #{_lambda_.28} parent=0 // pred_check
    _
  $region27: #{_lambda_.28} parent=0 // pred_check_branch
    %100 = sbr.rel (0) target = $region29
  $region28: #{_lambda_.28} parent=0 // pred_region
    _
  $region29: #{_lambda_.28} parent=0 // pred_fallthru
    _

// kernel: _lambda_.22
$region0: #{_lambda_.22}
  #allocation0 [shape = 'u32[]', space=smem, size = 0x4, offset = 0x4, fixed_abs, tag = 'smem constant byte address 0x4 - core index']
  #allocation1 [shape = 'u32[72,128]{1,0:T(1,128)}', space=vmem, size = 0x9000, scoped, tag = 'internal scratch']
  %s0 = inlined_call_operand.vmem [shape: f32[2,16,32], index: 0, kind: input, shape index: {}]
  %s1 = inlined_call_operand.vmem [shape: bf16[32,64], index: 1, kind: input, shape index: {}]
  %s2 = inlined_call_operand.vmem [shape: f32[1,64], index: 2, kind: input, shape index: {}]
  %s3 = inlined_call_operand.vmem [shape: bf16[64,32], index: 3, kind: input, shape index: {}]
  %s4 = inlined_call_operand.vmem [shape: f32[1,32], index: 4, kind: input, shape index: {}]
  %s5 = inlined_call_operand.vmem [shape: f32[16,16], index: 5, kind: input, shape index: {}]
  %s6 = inlined_call_operand.vmem [shape: f32[2,16,32], index: 6, kind: output, shape index: {0}]
  %s7 = inlined_call_operand.hbm [shape: f32[2,16,32], index: 7, kind: output, shape index: {1}]
  %8 = xla_tuple %s6, %s7
  %s9 = sld [smem:[#allocation0]]
  $region65: #{_lambda_.22} parent=0
    _
  %s11 = ssub.s32 1, %s9
  %s12 = scalar_select 0, %s11, %s9
  $region1: #{_lambda_.22} parent=0
    #allocation2 [shape = 'u8[16384]{0}', space=vmem, size = 0x4000, scoped, tag = 'output window, operand 1']
    #allocation3 [shape = 's32[2]{0}', space=sflag, size = 0x8, scoped, tag = 'scoped memory for _lambda_.22']
    %13 = vsyncpa [#allocation3], 0
    %s14 = scalar_lea.sflag [#allocation3], 1
    %15 = vsyncpa %s14, 0
    loop: start=0, step=1, limit=4
    $region2: #{_lambda_.22} parent=1 // loop_pre_header
      _
    $region3: #{_lambda_.22} parent=1 // loop_header
      %s17 = sphi 0, %s21
      %p18 = scmp.ge.s32.totalorder %s17, 4
      %s27 = sphi 0, %s29
      %s30 = sphi 0, %s27
      %s31 = sphi 0, %s30
      %s47 = sphi 0, %s31
      %s51 = sphi 0, %s51
      %s53 = sphi 0, %s51
      %s54 = sphi 0, %s53
      %s68 = sphi 0, %s54
      %s72 = sphi 0, %s72
      %s74 = sphi 0, %s72
      %s75 = sphi 0, %s74
      %s89 = sphi 0, %s75
      %s93 = sphi 0, %s93
      %s95 = sphi 0, %s93
      %s96 = sphi 0, %s95
      %s110 = sphi 0, %s96
      %s114 = sphi 0, %s114
      %s116 = sphi 0, %s114
      %s117 = sphi 0, %s116
      %s131 = sphi 0, %s117
      %s135 = sphi 0, %s135
      %s137 = sphi 0, %s135
      %s138 = sphi 0, %s137
      %s152 = sphi 0, %s138
      %s158 = sphi 0, %s160
      %s161 = sphi 0, %s158
      %s162 = sphi 0, %s161
      %s178 = sphi 0, %s162
      %s184 = sphi 0, %s186
      %s187 = sphi 0, %s184
      %s188 = sphi 0, %s187
      %s204 = sphi 0, %s188
    $region4: #{_lambda_.22} parent=1 // loop_header_branch
      %20 = sbr.rel (%p18) target = $region8
    $region5: #{_lambda_.22} parent=1 // loop_body
      %s22 = ssub.s32 %s17, 1
      %s23 = ssub.s32 %s17, 2
      %s24 = sadd.s32 %s17, 1
      %s25 = ssub.s32 %s17, %s24
      %p26 = scmp.eq.s32.totalorder %s25, 0
      %s28 = sadd.s32 %s27, 1
      %s29 = scalar_select %p26, %s27, %s28
      %p32 = pneg %p26
      %p33 = scmp.eq.s32.totalorder %s17, 1
      %p34 = por %p32, %p33
      %p35 = scmp.ne.s32.totalorder %s27, %s30
      %p36 = scmp.eq.s32.totalorder %s17, 0
      %p37 = por %p35, %p36
      %p38 = scmp.ne.s32.totalorder %s27, %s30
      %p39 = scmp.eq.s32.totalorder %s22, 1
      %p40 = por %p38, %p39
      %p41 = scmp.ne.s32.totalorder %s30, %s31
      %p42 = scmp.eq.s32.totalorder %s22, 0
      %p43 = por %p41, %p42
      %p44 = scmp.ne.s32.totalorder %s30, %s31
      %p45 = scmp.eq.s32.totalorder %s23, 1
      %p46 = por %p44, %p45
      %p48 = scmp.ne.s32.totalorder %s31, %s47
      %p49 = scmp.eq.s32.totalorder %s23, 0
      %p50 = por %p48, %p49
      %s52 = sadd.s32 %s51, 1
      %p55 = scmp.eq.s32.totalorder %s17, 1
      %p56 = scmp.ne.s32.totalorder %s51, %s53
      %p57 = scmp.eq.s32.totalorder %s17, 0
      %p58 = por %p56, %p57
      %p59 = scmp.ne.s32.totalorder %s51, %s53
      %p60 = scmp.eq.s32.totalorder %s22, 1
      %p61 = por %p59, %p60
      %p62 = scmp.ne.s32.totalorder %s53, %s54
      %p63 = scmp.eq.s32.totalorder %s22, 0
      %p64 = por %p62, %p63
      %p65 = scmp.ne.s32.totalorder %s53, %s54
      %p66 = scmp.eq.s32.totalorder %s23, 1
      %p67 = por %p65, %p66
      %p69 = scmp.ne.s32.totalorder %s54, %s68
      %p70 = scmp.eq.s32.totalorder %s23, 0
      %p71 = por %p69, %p70
      %s73 = sadd.s32 %s72, 1
      %p76 = scmp.eq.s32.totalorder %s17, 1
      %p77 = scmp.ne.s32.totalorder %s72, %s74
      %p78 = scmp.eq.s32.totalorder %s17, 0
      %p79 = por %p77, %p78
      %p80 = scmp.ne.s32.totalorder %s72, %s74
      %p81 = scmp.eq.s32.totalorder %s22, 1
      %p82 = por %p80, %p81
      %p83 = scmp.ne.s32.totalorder %s74, %s75
      %p84 = scmp.eq.s32.totalorder %s22, 0
      %p85 = por %p83, %p84
      %p86 = scmp.ne.s32.totalorder %s74, %s75
      %p87 = scmp.eq.s32.totalorder %s23, 1
      %p88 = por %p86, %p87
      %p90 = scmp.ne.s32.totalorder %s75, %s89
      %p91 = scmp.eq.s32.totalorder %s23, 0
      %p92 = por %p90, %p91
      %s94 = sadd.s32 %s93, 1
      %p97 = scmp.eq.s32.totalorder %s17, 1
      %p98 = scmp.ne.s32.totalorder %s93, %s95
      %p99 = scmp.eq.s32.totalorder %s17, 0
      %p100 = por %p98, %p99
      %p101 = scmp.ne.s32.totalorder %s93, %s95
      %p102 = scmp.eq.s32.totalorder %s22, 1
      %p103 = por %p101, %p102
      %p104 = scmp.ne.s32.totalorder %s95, %s96
      %p105 = scmp.eq.s32.totalorder %s22, 0
      %p106 = por %p104, %p105
      %p107 = scmp.ne.s32.totalorder %s95, %s96
      %p108 = scmp.eq.s32.totalorder %s23, 1
      %p109 = por %p107, %p108
      %p111 = scmp.ne.s32.totalorder %s96, %s110
      %p112 = scmp.eq.s32.totalorder %s23, 0
      %p113 = por %p111, %p112
      %s115 = sadd.s32 %s114, 1
      %p118 = scmp.eq.s32.totalorder %s17, 1
      %p119 = scmp.ne.s32.totalorder %s114, %s116
      %p120 = scmp.eq.s32.totalorder %s17, 0
      %p121 = por %p119, %p120
      %p122 = scmp.ne.s32.totalorder %s114, %s116
      %p123 = scmp.eq.s32.totalorder %s22, 1
      %p124 = por %p122, %p123
      %p125 = scmp.ne.s32.totalorder %s116, %s117
      %p126 = scmp.eq.s32.totalorder %s22, 0
      %p127 = por %p125, %p126
      %p128 = scmp.ne.s32.totalorder %s116, %s117
      %p129 = scmp.eq.s32.totalorder %s23, 1
      %p130 = por %p128, %p129
      %p132 = scmp.ne.s32.totalorder %s117, %s131
      %p133 = scmp.eq.s32.totalorder %s23, 0
      %p134 = por %p132, %p133
      %s136 = sadd.s32 %s135, 1
      %p139 = scmp.eq.s32.totalorder %s17, 1
      %p140 = scmp.ne.s32.totalorder %s135, %s137
      %p141 = scmp.eq.s32.totalorder %s17, 0
      %p142 = por %p140, %p141
      %p143 = scmp.ne.s32.totalorder %s135, %s137
      %p144 = scmp.eq.s32.totalorder %s22, 1
      %p145 = por %p143, %p144
      %p146 = scmp.ne.s32.totalorder %s137, %s138
      %p147 = scmp.eq.s32.totalorder %s22, 0
      %p148 = por %p146, %p147
      %p149 = scmp.ne.s32.totalorder %s137, %s138
      %p150 = scmp.eq.s32.totalorder %s23, 1
      %p151 = por %p149, %p150
      %p153 = scmp.ne.s32.totalorder %s138, %s152
      %p154 = scmp.eq.s32.totalorder %s23, 0
      %p155 = por %p153, %p154
      %s156 = ssub.s32 %s17, %s24
      %p157 = scmp.eq.s32.totalorder %s156, 0
      %s159 = sadd.s32 %s158, 1
      %s160 = scalar_select %p157, %s158, %s159
      %p163 = pneg %p157
      %p164 = scmp.eq.s32.totalorder %s17, 1
      %p165 = por %p163, %p164
      %p166 = scmp.ne.s32.totalorder %s158, %s161
      %p167 = scmp.eq.s32.totalorder %s17, 0
      %p168 = por %p166, %p167
      %p169 = scmp.ne.s32.totalorder %s158, %s161
      %p170 = scmp.eq.s32.totalorder %s22, 1
      %p171 = por %p169, %p170
      %p172 = scmp.ne.s32.totalorder %s161, %s162
      %p173 = scmp.eq.s32.totalorder %s22, 0
      %p174 = por %p172, %p173
      %p175 = scmp.ne.s32.totalorder %s161, %s162
      %p176 = scmp.eq.s32.totalorder %s23, 1
      %p177 = por %p175, %p176
      %p179 = scmp.ne.s32.totalorder %s162, %s178
      %p180 = scmp.eq.s32.totalorder %s23, 0
      %p181 = por %p179, %p180
      %s182 = ssub.s32 %s17, %s24
      %p183 = scmp.eq.s32.totalorder %s182, 0
      %s185 = sadd.s32 %s184, 1
      %s186 = scalar_select %p183, %s184, %s185
      %p189 = pneg %p183
      %p190 = scmp.eq.s32.totalorder %s17, 1
      %p191 = por %p189, %p190
      %p192 = scmp.ne.s32.totalorder %s184, %s187
      %p193 = scmp.eq.s32.totalorder %s17, 0
      %p194 = por %p192, %p193
      %p195 = scmp.ne.s32.totalorder %s184, %s187
      %p196 = scmp.eq.s32.totalorder %s22, 1
      %p197 = por %p195, %p196
      %p198 = scmp.ne.s32.totalorder %s187, %s188
      %p199 = scmp.eq.s32.totalorder %s22, 0
      %p200 = por %p198, %p199
      %p201 = scmp.ne.s32.totalorder %s187, %s188
      %p202 = scmp.eq.s32.totalorder %s23, 1
      %p203 = por %p201, %p202
      %p205 = scmp.ne.s32.totalorder %s188, %s204
      %p206 = scmp.eq.s32.totalorder %s23, 0
      %p207 = por %p205, %p206
      %p208 = scmp.le.s32.totalorder 1, %s17
      %p209 = scmp.lt.s32.totalorder %s17, 3
      %p210 = pnand %p208, %p209
      %p211 = pneg %p210
      // Predicated region
      $region9: #{_lambda_.22} parent=5 // pred_check
        _
      $region10: #{_lambda_.22} parent=5 // pred_check_branch
        %213 = sbr.rel (%p210) target = $region12
      $region11: #{_lambda_.22} parent=5 // pred_region
        %s214 = ssub.s32 %s17, 1
        // Predicated region
        $region13: #{_lambda_.22} parent=11 // pred_check
          %p215 = pneg %p64
        $region14: #{_lambda_.22} parent=11 // pred_check_branch
          %217 = sbr.rel (%p215) target = $region16
        $region15: #{_lambda_.22} parent=11 // pred_region
          _
        $region16: #{_lambda_.22} parent=11 // pred_fallthru
          _
        // Predicated region
        $region17: #{_lambda_.22} parent=11 // pred_check
          %p218 = pneg %p85
        $region18: #{_lambda_.22} parent=11 // pred_check_branch
          %220 = sbr.rel (%p218) target = $region20
        $region19: #{_lambda_.22} parent=11 // pred_region
          _
        $region20: #{_lambda_.22} parent=11 // pred_fallthru
          _
        // Predicated region
        $region21: #{_lambda_.22} parent=11 // pred_check
          %p221 = pneg %p106
        $region22: #{_lambda_.22} parent=11 // pred_check_branch
          %223 = sbr.rel (%p221) target = $region24
        $region23: #{_lambda_.22} parent=11 // pred_region
          _
        $region24: #{_lambda_.22} parent=11 // pred_fallthru
          _
        // Predicated region
        $region25: #{_lambda_.22} parent=11 // pred_check
          %p224 = pneg %p127
        $region26: #{_lambda_.22} parent=11 // pred_check_branch
          %226 = sbr.rel (%p224) target = $region28
        $region27: #{_lambda_.22} parent=11 // pred_region
          _
        $region28: #{_lambda_.22} parent=11 // pred_fallthru
          _
        // Predicated region
        $region29: #{_lambda_.22} parent=11 // pred_check
          %p227 = pneg %p148
        $region30: #{_lambda_.22} parent=11 // pred_check_branch
          %229 = sbr.rel (%p227) target = $region32
        $region31: #{_lambda_.22} parent=11 // pred_region
          _
        $region32: #{_lambda_.22} parent=11 // pred_fallthru
          _
      $region12: #{_lambda_.22} parent=5 // pred_fallthru
        _
      %p230 = scmp.lt.s32.totalorder %s17, 2
      // Predicated region
      $region33: #{_lambda_.22} parent=5 // pred_check
        %p231 = pneg %p230
      $region34: #{_lambda_.22} parent=5 // pred_check_branch
        %233 = sbr.rel (%p231) target = $region36
      $region35: #{_lambda_.22} parent=5 // pred_region
        // Predicated region
        $region37: #{_lambda_.22} parent=35 // pred_check
          %p234 = pneg %p37
        $region38: #{_lambda_.22} parent=35 // pred_check_branch
          %236 = sbr.rel (%p234) target = $region40
        $region39: #{_lambda_.22} parent=35 // pred_region
          %p237 = scmp.lt.s32.totalorder %s17, 1
          %s238 = scalar_select %p237, %s17, 1
          %s239 = smul.addr %s238, 2
          %s240 = smul.addr %s239, 8
          %s241 = scalar_lea.vmem %s0, %s240
        $region40: #{_lambda_.22} parent=35 // pred_fallthru
          _
      $region36: #{_lambda_.22} parent=5 // pred_fallthru
        _
      %p242 = scmp.le.s32.totalorder 1, %s17
      %p243 = scmp.lt.s32.totalorder %s17, 3
      %p244 = pnand %p242, %p243
      %p245 = pneg %p244
      // Predicated region
      $region41: #{_lambda_.22} parent=5 // pred_check
        _
      $region42: #{_lambda_.22} parent=5 // pred_check_branch
        %247 = sbr.rel (%p244) target = $region44
      $region43: #{_lambda_.22} parent=5 // pred_region
        %s248 = ssub.s32 %s17, 1
        %p249 = scmp.lt.s32.totalorder %s22, 1
        %s250 = scalar_select %p249, %s22, 1
        %s251 = smul.addr %s250, 2
        %s252 = smul.addr %s251, 8
        %s253 = scalar_lea.vmem %s0, %s252
        %p254 = pneg %p43
        %p255 = pneg %p40
        %p256 = pneg %p64
        %p257 = pneg %p61
        %p258 = pneg %p85
        %p259 = pneg %p82
        %p260 = pneg %p106
        %p261 = pneg %p103
        %p262 = pneg %p127
        %p263 = pneg %p124
        %p264 = pneg %p148
        %p265 = pneg %p145
        %p266 = pneg %p174
        %p267 = pneg %p171
        %p268 = scmp.lt.s32.totalorder %s22, 1
        %s269 = scalar_select %p268, %s22, 1
        %s270 = smul.addr %s269, 2
        %s271 = smul.addr %s270, 8
        %s272 = scalar_lea.vmem %s6, %s271
        %p273 = pneg %p200
        %p274 = pneg %p197
        %s275 = sand.u32 %s187, 1
        %s276 = scalar_lea.sflag [#allocation3], %s275
        %s277 = sand.u32 %s187, 1
        %s278 = smul.addr %s277, 16
        %s279 = scalar_lea.vmem [#allocation2], %s278
        %p280 = scmp.lt.s32.totalorder %s22, 1
        %s281 = scalar_select %p280, %s22, 1
        %s282 = smul.addr %s281, 2
        %s283 = smul.addr %s282, 8
        %s284 = scalar_lea.vmem %s0, %s283
        %p285 = scmp.lt.s32.totalorder %s22, 1
        %s286 = scalar_select %p285, %s22, 1
        %s287 = smul.addr %s286, 2
        %s288 = smul.addr %s287, 8
        %s289 = scalar_lea.vmem %s6, %s288
        %v291 = vld [vmem:[%s284] sm:$0xff]
        %v292 = vld [vmem:[%s284 + $0x8] sm:$0xff]
        %v293 = vpack.c.bf16 %v292, %v291
        %v294 = vld [vmem:[%s1] sm:$0xf]
        %v295 = vld [vmem:[%s1 + $0x4] sm:$0xf]
        %v296 = vld [vmem:[%s1 + $0x8] sm:$0xf]
        %v297 = vld [vmem:[%s1 + $0xc] sm:$0xf]
        %v298 = vld [vmem:[%s2] sm:$0x1]
        %v300 = vperm.slane %v298, 0
        %v306 = vunpack.c.l.b16 %v294
        %v307 = vunpack.c.l.b16 %v295
        %v308 = vunpack.c.l.b16 %v296
        %v309 = vunpack.c.l.b16 %v297
        %v310 = vpack.c.b16 %v307, %v306
        %v311 = vpack.c.b16 %v309, %v308
        %vm314 = vcmask 261120
        %v316 = vsel %vm314, %v293, 0
        %318 = vmatpush.bf16.msra.mxu0 0
        %319 = vmatpush.bf16.msra.mxu0 0
        %320 = vmatpush.bf16.msra.mxu0 0
        %321 = vmatpush.bf16.msra.mxu0 0
        %322 = vmatpush.bf16.msra.mxu0 0
        %323 = vmatpush.bf16.msra.mxu0 0
        %324 = vmatpush.bf16.msra.mxu0 %v311
        %325 = vmatpush.bf16.msra.mxu0 %v310
        %326 = vmatmul.bf16.gmra.mxu0 %v316
        %v327 = vpop.f32.mrf.mxu0
        %v328 = vadd.f32 %v300, %v327
        %v329 = vpop.f32.mrf.mxu0
        %v330 = vadd.f32 %v300, %v329
        %331 = vdwg.mxu0
        %v332 = vmax.f32 %v328, 0.0
        %v333 = vmax.f32 %v330, 0.0
        %v334 = vpack.c.bf16 %v333, %v332
        %v335 = vld [vmem:[%s3] sm:$0xf]
        %v336 = vld [vmem:[%s3 + $0x4] sm:$0xf]
        %v337 = vld [vmem:[%s3 + $0x8] sm:$0xf]
        %v338 = vld [vmem:[%s3 + $0xc] sm:$0xf]
        %v339 = vld [vmem:[%s3 + $0x10] sm:$0xf]
        %v340 = vld [vmem:[%s3 + $0x14] sm:$0xf]
        %v341 = vld [vmem:[%s3 + $0x18] sm:$0xf]
        %v342 = vld [vmem:[%s3 + $0x1c] sm:$0xf]
        %v343 = vld [vmem:[%s4] sm:$0x1]
        %v345 = vperm.slane %v343, 0
        %v355 = vunpack.c.l.b16 %v335
        %v356 = vunpack.c.l.b16 %v336
        %v357 = vunpack.c.l.b16 %v337
        %v358 = vunpack.c.l.b16 %v338
        %v359 = vunpack.c.l.b16 %v339
        %v360 = vunpack.c.l.b16 %v340
        %v361 = vunpack.c.l.b16 %v341
        %v362 = vunpack.c.l.b16 %v342
        %v363 = vpack.c.b16 %v356, %v355
        %v364 = vpack.c.b16 %v358, %v357
        %v365 = vpack.c.b16 %v360, %v359
        %v366 = vpack.c.b16 %v362, %v361
        %vm371 = vcmask 523264
        %v373 = vsel %vm371, %v334, 0
        %375 = vmatpush.bf16.msra.mxu0 0
        %376 = vmatpush.bf16.msra.mxu0 0
        %377 = vmatpush.bf16.msra.mxu0 0
        %378 = vmatpush.bf16.msra.mxu0 0
        %379 = vmatpush.bf16.msra.mxu0 %v366
        %380 = vmatpush.bf16.msra.mxu0 %v365
        %381 = vmatpush.bf16.msra.mxu0 %v364
        %382 = vmatpush.bf16.msra.mxu0 %v363
        %383 = vmatmul.bf16.gmra.mxu0 %v373
        %v384 = vpop.f32.mrf.mxu0
        %v385 = vadd.f32 %v345, %v384
        %v386 = vpop.f32.mrf.mxu0
        %v387 = vadd.f32 %v345, %v386
        %388 = vdwg.mxu0
        %v389 = vadd.f32 %v291, %v385
        %v390 = vadd.f32 %v292, %v387
        %v391 = vld [vmem:[%s5] sm:$0xff]
        %v392 = vld [vmem:[%s5 + $0x8] sm:$0xff]
        %v393 = vpack.c.bf16 %v392, %v391
        %v394 = vpack.c.bf16 %v390, %v389
        %vm395 = vcmask 130048
        %v397 = vsel %vm395, %v393, 0
        %399 = vmatpush.bf16.msra.mxu0 0
        %400 = vmatpush.bf16.msra.mxu0 0
        %401 = vmatpush.bf16.msra.mxu0 0
        %402 = vmatpush.bf16.msra.mxu0 0
        %403 = vmatpush.bf16.msra.mxu0 0
        %404 = vmatpush.bf16.msra.mxu0 0
        %405 = vmatpush.bf16.msra.mxu0 0
        %406 = vmatpush.bf16.msra.mxu0 %v394
        %407 = vmatmul.bf16.gmra.mxu0 %v397
        %v408 = vpop.f32.mrf.mxu0
        %v409 = vadd.f32 0.0, %v408
        %v410 = vpop.f32.mrf.mxu0
        %v411 = vadd.f32 0.0, %v410
        %412 = vdwg.mxu0
        %413 = vst.msk [vmem:[%s279] sm:$0xff] %vm314, %v409
        %414 = vst.msk [vmem:[%s279 + $0x8] sm:$0xff] %vm314, %v411
        %v415 = vsub.f32 %v389, %v409
        %v416 = vsub.f32 %v390, %v411
        %417 = vst.msk [vmem:[%s289] sm:$0xff] %vm314, %v415
        %418 = vst.msk [vmem:[%s289 + $0x8] sm:$0xff] %vm314, %v416
        %p419 = scmp.lt.s32.totalorder %s22, 1
        %s420 = scalar_select %p419, %s22, 1
        %s421 = smul.addr %s420, 2
        %s422 = smul.addr %s421, 8
        %s423 = scalar_lea.vmem %s6, %s422
        %s424 = sand.u32 %s187, 1
        %s425 = scalar_lea.sflag [#allocation3], %s424
        %s426 = sand.u32 %s187, 1
        %s427 = smul.addr %s426, 16
        %s428 = scalar_lea.vmem [#allocation2], %s427
        // Predicated region
        $region45: #{_lambda_.22} parent=43 // pred_check
          %p429 = pneg %p171
        $region46: #{_lambda_.22} parent=43 // pred_check_branch
          %431 = sbr.rel (%p429) target = $region48
        $region47: #{_lambda_.22} parent=43 // pred_region
          _
        $region48: #{_lambda_.22} parent=43 // pred_fallthru
          _
        // Predicated region
        $region49: #{_lambda_.22} parent=43 // pred_check
          %p432 = pneg %p197
        $region50: #{_lambda_.22} parent=43 // pred_check_branch
          %434 = sbr.rel (%p432) target = $region52
        $region51: #{_lambda_.22} parent=43 // pred_region
          %436 = vsyncadd %s425, 0
          %s437 = smul.addr %s22, 2
          %s438 = smul.addr %s437, 8
          %s439 = scalar_lea.hbm %s7, %s438
          %s440 = sshll.u32 %s428, 4
          %s441 = int_to_ptr.vmem [resolvable:$true] %s440
          %s442 = sshll.u32 %s439, 4
          %s443 = int_to_ptr.hbm [resolvable:$true] %s442
          %448 = dma.vmem_to_hbm [thread:$0]  %s441, 256, %s443, %s425, 128, 128, 8
        $region52: #{_lambda_.22} parent=43 // pred_fallthru
          _
      $region44: #{_lambda_.22} parent=5 // pred_fallthru
        _
      %p449 = scmp.le.s32.totalorder 2, %s17
      // Predicated region
      $region53: #{_lambda_.22} parent=5 // pred_check
        %p450 = pneg %p449
      $region54: #{_lambda_.22} parent=5 // pred_check_branch
        %452 = sbr.rel (%p450) target = $region56
      $region55: #{_lambda_.22} parent=5 // pred_region
        %s453 = ssub.s32 %s17, 2
        // Predicated region
        $region57: #{_lambda_.22} parent=55 // pred_check
          %p454 = pneg %p177
        $region58: #{_lambda_.22} parent=55 // pred_check_branch
          %456 = sbr.rel (%p454) target = $region60
        $region59: #{_lambda_.22} parent=55 // pred_region
          %p457 = scmp.lt.s32.totalorder %s23, 1
          %s458 = scalar_select %p457, %s23, 1
          %s459 = smul.addr %s458, 2
          %s460 = smul.addr %s459, 8
          %s461 = scalar_lea.vmem %s6, %s460
        $region60: #{_lambda_.22} parent=55 // pred_fallthru
          _
        // Predicated region
        $region61: #{_lambda_.22} parent=55 // pred_check
          %p462 = pneg %p203
        $region62: #{_lambda_.22} parent=55 // pred_check_branch
          %464 = sbr.rel (%p462) target = $region64
        $region63: #{_lambda_.22} parent=55 // pred_region
          %s465 = sand.u32 %s188, 1
          %s466 = scalar_lea.sflag [#allocation3], %s465
          %s467 = sand.u32 %s188, 1
          %s468 = smul.addr %s467, 16
          %s469 = scalar_lea.vmem [#allocation2], %s468
          %471 = dma.done %s466, 256
        $region64: #{_lambda_.22} parent=55 // pred_fallthru
          _
      $region56: #{_lambda_.22} parent=5 // pred_fallthru
        _
    $region6: #{_lambda_.22} parent=1 // loop_footer
      %s21 = sadd.s32 1, %s17
    $region7: #{_lambda_.22} parent=1 // loop_footer_branch
      %16 = sbr.rel target = $region3
    $region8: #{_lambda_.22} parent=1 // loop_exit
      _
    %472 = vsyncpa [#allocation3], 1
    %s473 = scalar_lea.sflag [#allocation3], 1
    %474 = vsyncpa %s473, 1

// kernel: _lambda_.31
$region0: #{_lambda_.31}
  #allocation0 [shape = 'u32[]', space=smem, size = 0x4, offset = 0x4, fixed_abs, tag = 'smem constant byte address 0x4 - core index']
  #allocation1 [shape = 'u32[72,128]{1,0:T(1,128)}', space=vmem, size = 0x9000, scoped, tag = 'internal scratch']
  %s0 = inlined_call_operand.vmem [shape: f32[2,16,32], index: 0, kind: input, shape index: {}]
  %s1 = inlined_call_operand.vmem [shape: bf16[32,64], index: 1, kind: input, shape index: {}]
  %s2 = inlined_call_operand.vmem [shape: f32[1,64], index: 2, kind: input, shape index: {}]
  %s3 = inlined_call_operand.vmem [shape: bf16[64,32], index: 3, kind: input, shape index: {}]
  %s4 = inlined_call_operand.vmem [shape: f32[1,32], index: 4, kind: input, shape index: {}]
  %s5 = inlined_call_operand.vmem [shape: f32[16,16], index: 5, kind: input, shape index: {}]
  %s6 = inlined_call_operand.vmem [shape: f32[2,16,32], index: 6, kind: output, shape index: {0}]
  %s7 = inlined_call_operand.vmem [shape: f32[2,16,32], index: 7, kind: output, shape index: {1}]
  %8 = xla_tuple %s6, %s7
  %s9 = sld [smem:[#allocation0]]
  $region65: #{_lambda_.31} parent=0
    _
  %s11 = ssub.s32 1, %s9
  %s12 = scalar_select 0, %s11, %s9
  loop: start=0, step=1, limit=4
  $region2: #{_lambda_.31} parent=0 // loop_pre_header
    _
  $region3: #{_lambda_.31} parent=0 // loop_header
    %s14 = sphi 0, %s18
    %p15 = scmp.ge.s32.totalorder %s14, 4
    %s24 = sphi 0, %s26
    %s27 = sphi 0, %s24
    %s28 = sphi 0, %s27
    %s44 = sphi 0, %s28
    %s48 = sphi 0, %s48
    %s50 = sphi 0, %s48
    %s51 = sphi 0, %s50
    %s65 = sphi 0, %s51
    %s69 = sphi 0, %s69
    %s71 = sphi 0, %s69
    %s72 = sphi 0, %s71
    %s86 = sphi 0, %s72
    %s90 = sphi 0, %s90
    %s92 = sphi 0, %s90
    %s93 = sphi 0, %s92
    %s107 = sphi 0, %s93
    %s111 = sphi 0, %s111
    %s113 = sphi 0, %s111
    %s114 = sphi 0, %s113
    %s128 = sphi 0, %s114
    %s132 = sphi 0, %s132
    %s134 = sphi 0, %s132
    %s135 = sphi 0, %s134
    %s149 = sphi 0, %s135
    %s155 = sphi 0, %s157
    %s158 = sphi 0, %s155
    %s159 = sphi 0, %s158
    %s175 = sphi 0, %s159
    %s181 = sphi 0, %s183
    %s184 = sphi 0, %s181
    %s185 = sphi 0, %s184
    %s201 = sphi 0, %s185
  $region4: #{_lambda_.31} parent=0 // loop_header_branch
    %17 = sbr.rel (%p15) target = $region8
  $region5: #{_lambda_.31} parent=0 // loop_body
    %s19 = ssub.s32 %s14, 1
    %s20 = ssub.s32 %s14, 2
    %s21 = sadd.s32 %s14, 1
    %s22 = ssub.s32 %s14, %s21
    %p23 = scmp.eq.s32.totalorder %s22, 0
    %s25 = sadd.s32 %s24, 1
    %s26 = scalar_select %p23, %s24, %s25
    %p29 = pneg %p23
    %p30 = scmp.eq.s32.totalorder %s14, 1
    %p31 = por %p29, %p30
    %p32 = scmp.ne.s32.totalorder %s24, %s27
    %p33 = scmp.eq.s32.totalorder %s14, 0
    %p34 = por %p32, %p33
    %p35 = scmp.ne.s32.totalorder %s24, %s27
    %p36 = scmp.eq.s32.totalorder %s19, 1
    %p37 = por %p35, %p36
    %p38 = scmp.ne.s32.totalorder %s27, %s28
    %p39 = scmp.eq.s32.totalorder %s19, 0
    %p40 = por %p38, %p39
    %p41 = scmp.ne.s32.totalorder %s27, %s28
    %p42 = scmp.eq.s32.totalorder %s20, 1
    %p43 = por %p41, %p42
    %p45 = scmp.ne.s32.totalorder %s28, %s44
    %p46 = scmp.eq.s32.totalorder %s20, 0
    %p47 = por %p45, %p46
    %s49 = sadd.s32 %s48, 1
    %p52 = scmp.eq.s32.totalorder %s14, 1
    %p53 = scmp.ne.s32.totalorder %s48, %s50
    %p54 = scmp.eq.s32.totalorder %s14, 0
    %p55 = por %p53, %p54
    %p56 = scmp.ne.s32.totalorder %s48, %s50
    %p57 = scmp.eq.s32.totalorder %s19, 1
    %p58 = por %p56, %p57
    %p59 = scmp.ne.s32.totalorder %s50, %s51
    %p60 = scmp.eq.s32.totalorder %s19, 0
    %p61 = por %p59, %p60
    %p62 = scmp.ne.s32.totalorder %s50, %s51
    %p63 = scmp.eq.s32.totalorder %s20, 1
    %p64 = por %p62, %p63
    %p66 = scmp.ne.s32.totalorder %s51, %s65
    %p67 = scmp.eq.s32.totalorder %s20, 0
    %p68 = por %p66, %p67
    %s70 = sadd.s32 %s69, 1
    %p73 = scmp.eq.s32.totalorder %s14, 1
    %p74 = scmp.ne.s32.totalorder %s69, %s71
    %p75 = scmp.eq.s32.totalorder %s14, 0
    %p76 = por %p74, %p75
    %p77 = scmp.ne.s32.totalorder %s69, %s71
    %p78 = scmp.eq.s32.totalorder %s19, 1
    %p79 = por %p77, %p78
    %p80 = scmp.ne.s32.totalorder %s71, %s72
    %p81 = scmp.eq.s32.totalorder %s19, 0
    %p82 = por %p80, %p81
    %p83 = scmp.ne.s32.totalorder %s71, %s72
    %p84 = scmp.eq.s32.totalorder %s20, 1
    %p85 = por %p83, %p84
    %p87 = scmp.ne.s32.totalorder %s72, %s86
    %p88 = scmp.eq.s32.totalorder %s20, 0
    %p89 = por %p87, %p88
    %s91 = sadd.s32 %s90, 1
    %p94 = scmp.eq.s32.totalorder %s14, 1
    %p95 = scmp.ne.s32.totalorder %s90, %s92
    %p96 = scmp.eq.s32.totalorder %s14, 0
    %p97 = por %p95, %p96
    %p98 = scmp.ne.s32.totalorder %s90, %s92
    %p99 = scmp.eq.s32.totalorder %s19, 1
    %p100 = por %p98, %p99
    %p101 = scmp.ne.s32.totalorder %s92, %s93
    %p102 = scmp.eq.s32.totalorder %s19, 0
    %p103 = por %p101, %p102
    %p104 = scmp.ne.s32.totalorder %s92, %s93
    %p105 = scmp.eq.s32.totalorder %s20, 1
    %p106 = por %p104, %p105
    %p108 = scmp.ne.s32.totalorder %s93, %s107
    %p109 = scmp.eq.s32.totalorder %s20, 0
    %p110 = por %p108, %p109
    %s112 = sadd.s32 %s111, 1
    %p115 = scmp.eq.s32.totalorder %s14, 1
    %p116 = scmp.ne.s32.totalorder %s111, %s113
    %p117 = scmp.eq.s32.totalorder %s14, 0
    %p118 = por %p116, %p117
    %p119 = scmp.ne.s32.totalorder %s111, %s113
    %p120 = scmp.eq.s32.totalorder %s19, 1
    %p121 = por %p119, %p120
    %p122 = scmp.ne.s32.totalorder %s113, %s114
    %p123 = scmp.eq.s32.totalorder %s19, 0
    %p124 = por %p122, %p123
    %p125 = scmp.ne.s32.totalorder %s113, %s114
    %p126 = scmp.eq.s32.totalorder %s20, 1
    %p127 = por %p125, %p126
    %p129 = scmp.ne.s32.totalorder %s114, %s128
    %p130 = scmp.eq.s32.totalorder %s20, 0
    %p131 = por %p129, %p130
    %s133 = sadd.s32 %s132, 1
    %p136 = scmp.eq.s32.totalorder %s14, 1
    %p137 = scmp.ne.s32.totalorder %s132, %s134
    %p138 = scmp.eq.s32.totalorder %s14, 0
    %p139 = por %p137, %p138
    %p140 = scmp.ne.s32.totalorder %s132, %s134
    %p141 = scmp.eq.s32.totalorder %s19, 1
    %p142 = por %p140, %p141
    %p143 = scmp.ne.s32.totalorder %s134, %s135
    %p144 = scmp.eq.s32.totalorder %s19, 0
    %p145 = por %p143, %p144
    %p146 = scmp.ne.s32.totalorder %s134, %s135
    %p147 = scmp.eq.s32.totalorder %s20, 1
    %p148 = por %p146, %p147
    %p150 = scmp.ne.s32.totalorder %s135, %s149
    %p151 = scmp.eq.s32.totalorder %s20, 0
    %p152 = por %p150, %p151
    %s153 = ssub.s32 %s14, %s21
    %p154 = scmp.eq.s32.totalorder %s153, 0
    %s156 = sadd.s32 %s155, 1
    %s157 = scalar_select %p154, %s155, %s156
    %p160 = pneg %p154
    %p161 = scmp.eq.s32.totalorder %s14, 1
    %p162 = por %p160, %p161
    %p163 = scmp.ne.s32.totalorder %s155, %s158
    %p164 = scmp.eq.s32.totalorder %s14, 0
    %p165 = por %p163, %p164
    %p166 = scmp.ne.s32.totalorder %s155, %s158
    %p167 = scmp.eq.s32.totalorder %s19, 1
    %p168 = por %p166, %p167
    %p169 = scmp.ne.s32.totalorder %s158, %s159
    %p170 = scmp.eq.s32.totalorder %s19, 0
    %p171 = por %p169, %p170
    %p172 = scmp.ne.s32.totalorder %s158, %s159
    %p173 = scmp.eq.s32.totalorder %s20, 1
    %p174 = por %p172, %p173
    %p176 = scmp.ne.s32.totalorder %s159, %s175
    %p177 = scmp.eq.s32.totalorder %s20, 0
    %p178 = por %p176, %p177
    %s179 = ssub.s32 %s14, %s21
    %p180 = scmp.eq.s32.totalorder %s179, 0
    %s182 = sadd.s32 %s181, 1
    %s183 = scalar_select %p180, %s181, %s182
    %p186 = pneg %p180
    %p187 = scmp.eq.s32.totalorder %s14, 1
    %p188 = por %p186, %p187
    %p189 = scmp.ne.s32.totalorder %s181, %s184
    %p190 = scmp.eq.s32.totalorder %s14, 0
    %p191 = por %p189, %p190
    %p192 = scmp.ne.s32.totalorder %s181, %s184
    %p193 = scmp.eq.s32.totalorder %s19, 1
    %p194 = por %p192, %p193
    %p195 = scmp.ne.s32.totalorder %s184, %s185
    %p196 = scmp.eq.s32.totalorder %s19, 0
    %p197 = por %p195, %p196
    %p198 = scmp.ne.s32.totalorder %s184, %s185
    %p199 = scmp.eq.s32.totalorder %s20, 1
    %p200 = por %p198, %p199
    %p202 = scmp.ne.s32.totalorder %s185, %s201
    %p203 = scmp.eq.s32.totalorder %s20, 0
    %p204 = por %p202, %p203
    %p205 = scmp.le.s32.totalorder 1, %s14
    %p206 = scmp.lt.s32.totalorder %s14, 3
    %p207 = pnand %p205, %p206
    %p208 = pneg %p207
    // Predicated region
    $region9: #{_lambda_.31} parent=5 // pred_check
      _
    $region10: #{_lambda_.31} parent=5 // pred_check_branch
      %210 = sbr.rel (%p207) target = $region12
    $region11: #{_lambda_.31} parent=5 // pred_region
      %s211 = ssub.s32 %s14, 1
      // Predicated region
      $region13: #{_lambda_.31} parent=11 // pred_check
        %p212 = pneg %p61
      $region14: #{_lambda_.31} parent=11 // pred_check_branch
        %214 = sbr.rel (%p212) target = $region16
      $region15: #{_lambda_.31} parent=11 // pred_region
        _
      $region16: #{_lambda_.31} parent=11 // pred_fallthru
        _
      // Predicated region
      $region17: #{_lambda_.31} parent=11 // pred_check
        %p215 = pneg %p82
      $region18: #{_lambda_.31} parent=11 // pred_check_branch
        %217 = sbr.rel (%p215) target = $region20
      $region19: #{_lambda_.31} parent=11 // pred_region
        _
      $region20: #{_lambda_.31} parent=11 // pred_fallthru
        _
      // Predicated region
      $region21: #{_lambda_.31} parent=11 // pred_check
        %p218 = pneg %p103
      $region22: #{_lambda_.31} parent=11 // pred_check_branch
        %220 = sbr.rel (%p218) target = $region24
      $region23: #{_lambda_.31} parent=11 // pred_region
        _
      $region24: #{_lambda_.31} parent=11 // pred_fallthru
        _
      // Predicated region
      $region25: #{_lambda_.31} parent=11 // pred_check
        %p221 = pneg %p124
      $region26: #{_lambda_.31} parent=11 // pred_check_branch
        %223 = sbr.rel (%p221) target = $region28
      $region27: #{_lambda_.31} parent=11 // pred_region
        _
      $region28: #{_lambda_.31} parent=11 // pred_fallthru
        _
      // Predicated region
      $region29: #{_lambda_.31} parent=11 // pred_check
        %p224 = pneg %p145
      $region30: #{_lambda_.31} parent=11 // pred_check_branch
        %226 = sbr.rel (%p224) target = $region32
      $region31: #{_lambda_.31} parent=11 // pred_region
        _
      $region32: #{_lambda_.31} parent=11 // pred_fallthru
        _
    $region12: #{_lambda_.31} parent=5 // pred_fallthru
      _
    %p227 = scmp.lt.s32.totalorder %s14, 2
    // Predicated region
    $region33: #{_lambda_.31} parent=5 // pred_check
      %p228 = pneg %p227
    $region34: #{_lambda_.31} parent=5 // pred_check_branch
      %230 = sbr.rel (%p228) target = $region36
    $region35: #{_lambda_.31} parent=5 // pred_region
      // Predicated region
      $region37: #{_lambda_.31} parent=35 // pred_check
        %p231 = pneg %p34
      $region38: #{_lambda_.31} parent=35 // pred_check_branch
        %233 = sbr.rel (%p231) target = $region40
      $region39: #{_lambda_.31} parent=35 // pred_region
        %p234 = scmp.lt.s32.totalorder %s14, 1
        %s235 = scalar_select %p234, %s14, 1
        %s236 = smul.addr %s235, 2
        %s237 = smul.addr %s236, 8
        %s238 = scalar_lea.vmem %s0, %s237
      $region40: #{_lambda_.31} parent=35 // pred_fallthru
        _
    $region36: #{_lambda_.31} parent=5 // pred_fallthru
      _
    %p239 = scmp.le.s32.totalorder 1, %s14
    %p240 = scmp.lt.s32.totalorder %s14, 3
    %p241 = pnand %p239, %p240
    %p242 = pneg %p241
    // Predicated region
    $region41: #{_lambda_.31} parent=5 // pred_check
      _
    $region42: #{_lambda_.31} parent=5 // pred_check_branch
      %244 = sbr.rel (%p241) target = $region44
    $region43: #{_lambda_.31} parent=5 // pred_region
      %s245 = ssub.s32 %s14, 1
      %p246 = scmp.lt.s32.totalorder %s19, 1
      %s247 = scalar_select %p246, %s19, 1
      %s248 = smul.addr %s247, 2
      %s249 = smul.addr %s248, 8
      %s250 = scalar_lea.vmem %s0, %s249
      %p251 = pneg %p40
      %p252 = pneg %p37
      %p253 = pneg %p61
      %p254 = pneg %p58
      %p255 = pneg %p82
      %p256 = pneg %p79
      %p257 = pneg %p103
      %p258 = pneg %p100
      %p259 = pneg %p124
      %p260 = pneg %p121
      %p261 = pneg %p145
      %p262 = pneg %p142
      %p263 = pneg %p171
      %p264 = pneg %p168
      %p265 = scmp.lt.s32.totalorder %s19, 1
      %s266 = scalar_select %p265, %s19, 1
      %s267 = smul.addr %s266, 2
      %s268 = smul.addr %s267, 8
      %s269 = scalar_lea.vmem %s6, %s268
      %p270 = pneg %p197
      %p271 = pneg %p194
      %p272 = scmp.lt.s32.totalorder %s19, 1
      %s273 = scalar_select %p272, %s19, 1
      %s274 = smul.addr %s273, 2
      %s275 = smul.addr %s274, 8
      %s276 = scalar_lea.vmem %s7, %s275
      %p277 = scmp.lt.s32.totalorder %s19, 1
      %s278 = scalar_select %p277, %s19, 1
      %s279 = smul.addr %s278, 2
      %s280 = smul.addr %s279, 8
      %s281 = scalar_lea.vmem %s0, %s280
      %p282 = scmp.lt.s32.totalorder %s19, 1
      %s283 = scalar_select %p282, %s19, 1
      %s284 = smul.addr %s283, 2
      %s285 = smul.addr %s284, 8
      %s286 = scalar_lea.vmem %s6, %s285
      %p287 = scmp.lt.s32.totalorder %s19, 1
      %s288 = scalar_select %p287, %s19, 1
      %s289 = smul.addr %s288, 2
      %s290 = smul.addr %s289, 8
      %s291 = scalar_lea.vmem %s7, %s290
      %v293 = vld [vmem:[%s281] sm:$0xff]
      %v294 = vld [vmem:[%s281 + $0x8] sm:$0xff]
      %v295 = vpack.c.bf16 %v294, %v293
      %v296 = vld [vmem:[%s1] sm:$0xf]
      %v297 = vld [vmem:[%s1 + $0x4] sm:$0xf]
      %v298 = vld [vmem:[%s1 + $0x8] sm:$0xf]
      %v299 = vld [vmem:[%s1 + $0xc] sm:$0xf]
      %v300 = vld [vmem:[%s2] sm:$0x1]
      %v302 = vperm.slane %v300, 0
      %v308 = vunpack.c.l.b16 %v296
      %v309 = vunpack.c.l.b16 %v297
      %v310 = vunpack.c.l.b16 %v298
      %v311 = vunpack.c.l.b16 %v299
      %v312 = vpack.c.b16 %v309, %v308
      %v313 = vpack.c.b16 %v311, %v310
      %vm316 = vcmask 261120
      %v318 = vsel %vm316, %v295, 0
      %320 = vmatpush.bf16.msra.mxu0 0
      %321 = vmatpush.bf16.msra.mxu0 0
      %322 = vmatpush.bf16.msra.mxu0 0
      %323 = vmatpush.bf16.msra.mxu0 0
      %324 = vmatpush.bf16.msra.mxu0 0
      %325 = vmatpush.bf16.msra.mxu0 0
      %326 = vmatpush.bf16.msra.mxu0 %v313
      %327 = vmatpush.bf16.msra.mxu0 %v312
      %328 = vmatmul.bf16.gmra.mxu0 %v318
      %v329 = vpop.f32.mrf.mxu0
      %v330 = vadd.f32 %v302, %v329
      %v331 = vpop.f32.mrf.mxu0
      %v332 = vadd.f32 %v302, %v331
      %333 = vdwg.mxu0
      %v334 = vmax.f32 %v330, 0.0
      %v335 = vmax.f32 %v332, 0.0
      %v336 = vpack.c.bf16 %v335, %v334
      %v337 = vld [vmem:[%s3] sm:$0xf]
      %v338 = vld [vmem:[%s3 + $0x4] sm:$0xf]
      %v339 = vld [vmem:[%s3 + $0x8] sm:$0xf]
      %v340 = vld [vmem:[%s3 + $0xc] sm:$0xf]
      %v341 = vld [vmem:[%s3 + $0x10] sm:$0xf]
      %v342 = vld [vmem:[%s3 + $0x14] sm:$0xf]
      %v343 = vld [vmem:[%s3 + $0x18] sm:$0xf]
      %v344 = vld [vmem:[%s3 + $0x1c] sm:$0xf]
      %v345 = vld [vmem:[%s4] sm:$0x1]
      %v347 = vperm.slane %v345, 0
      %v357 = vunpack.c.l.b16 %v337
      %v358 = vunpack.c.l.b16 %v338
      %v359 = vunpack.c.l.b16 %v339
      %v360 = vunpack.c.l.b16 %v340
      %v361 = vunpack.c.l.b16 %v341
      %v362 = vunpack.c.l.b16 %v342
      %v363 = vunpack.c.l.b16 %v343
      %v364 = vunpack.c.l.b16 %v344
      %v365 = vpack.c.b16 %v358, %v357
      %v366 = vpack.c.b16 %v360, %v359
      %v367 = vpack.c.b16 %v362, %v361
      %v368 = vpack.c.b16 %v364, %v363
      %vm373 = vcmask 523264
      %v375 = vsel %vm373, %v336, 0
      %377 = vmatpush.bf16.msra.mxu0 0
      %378 = vmatpush.bf16.msra.mxu0 0
      %379 = vmatpush.bf16.msra.mxu0 0
      %380 = vmatpush.bf16.msra.mxu0 0
      %381 = vmatpush.bf16.msra.mxu0 %v368
      %382 = vmatpush.bf16.msra.mxu0 %v367
      %383 = vmatpush.bf16.msra.mxu0 %v366
      %384 = vmatpush.bf16.msra.mxu0 %v365
      %385 = vmatmul.bf16.gmra.mxu0 %v375
      %v386 = vpop.f32.mrf.mxu0
      %v387 = vadd.f32 %v347, %v386
      %v388 = vpop.f32.mrf.mxu0
      %v389 = vadd.f32 %v347, %v388
      %390 = vdwg.mxu0
      %v391 = vadd.f32 %v293, %v387
      %v392 = vadd.f32 %v294, %v389
      %v393 = vld [vmem:[%s5] sm:$0xff]
      %v394 = vld [vmem:[%s5 + $0x8] sm:$0xff]
      %v395 = vpack.c.bf16 %v394, %v393
      %v396 = vpack.c.bf16 %v392, %v391
      %vm397 = vcmask 130048
      %v399 = vsel %vm397, %v395, 0
      %401 = vmatpush.bf16.msra.mxu0 0
      %402 = vmatpush.bf16.msra.mxu0 0
      %403 = vmatpush.bf16.msra.mxu0 0
      %404 = vmatpush.bf16.msra.mxu0 0
      %405 = vmatpush.bf16.msra.mxu0 0
      %406 = vmatpush.bf16.msra.mxu0 0
      %407 = vmatpush.bf16.msra.mxu0 0
      %408 = vmatpush.bf16.msra.mxu0 %v396
      %409 = vmatmul.bf16.gmra.mxu0 %v399
      %v410 = vpop.f32.mrf.mxu0
      %v411 = vadd.f32 0.0, %v410
      %v412 = vpop.f32.mrf.mxu0
      %v413 = vadd.f32 0.0, %v412
      %414 = vdwg.mxu0
      %415 = vst.msk [vmem:[%s291] sm:$0xff] %vm316, %v411
      %416 = vst.msk [vmem:[%s291 + $0x8] sm:$0xff] %vm316, %v413
      %v417 = vsub.f32 %v391, %v411
      %v418 = vsub.f32 %v392, %v413
      %419 = vst.msk [vmem:[%s286] sm:$0xff] %vm316, %v417
      %420 = vst.msk [vmem:[%s286 + $0x8] sm:$0xff] %vm316, %v418
      %p421 = scmp.lt.s32.totalorder %s19, 1
      %s422 = scalar_select %p421, %s19, 1
      %s423 = smul.addr %s422, 2
      %s424 = smul.addr %s423, 8
      %s425 = scalar_lea.vmem %s6, %s424
      %p426 = scmp.lt.s32.totalorder %s19, 1
      %s427 = scalar_select %p426, %s19, 1
      %s428 = smul.addr %s427, 2
      %s429 = smul.addr %s428, 8
      %s430 = scalar_lea.vmem %s7, %s429
      // Predicated region
      $region45: #{_lambda_.31} parent=43 // pred_check
        %p431 = pneg %p168
      $region46: #{_lambda_.31} parent=43 // pred_check_branch
        %433 = sbr.rel (%p431) target = $region48
      $region47: #{_lambda_.31} parent=43 // pred_region
        _
      $region48: #{_lambda_.31} parent=43 // pred_fallthru
        _
      // Predicated region
      $region49: #{_lambda_.31} parent=43 // pred_check
        %p434 = pneg %p194
      $region50: #{_lambda_.31} parent=43 // pred_check_branch
        %436 = sbr.rel (%p434) target = $region52
      $region51: #{_lambda_.31} parent=43 // pred_region
        _
      $region52: #{_lambda_.31} parent=43 // pred_fallthru
        _
    $region44: #{_lambda_.31} parent=5 // pred_fallthru
      _
    %p437 = scmp.le.s32.totalorder 2, %s14
    // Predicated region
    $region53: #{_lambda_.31} parent=5 // pred_check
      %p438 = pneg %p437
    $region54: #{_lambda_.31} parent=5 // pred_check_branch
      %440 = sbr.rel (%p438) target = $region56
    $region55: #{_lambda_.31} parent=5 // pred_region
      %s441 = ssub.s32 %s14, 2
      // Predicated region
      $region57: #{_lambda_.31} parent=55 // pred_check
        %p442 = pneg %p174
      $region58: #{_lambda_.31} parent=55 // pred_check_branch
        %444 = sbr.rel (%p442) target = $region60
      $region59: #{_lambda_.31} parent=55 // pred_region
        %p445 = scmp.lt.s32.totalorder %s20, 1
        %s446 = scalar_select %p445, %s20, 1
        %s447 = smul.addr %s446, 2
        %s448 = smul.addr %s447, 8
        %s449 = scalar_lea.vmem %s6, %s448
      $region60: #{_lambda_.31} parent=55 // pred_fallthru
        _
      // Predicated region
      $region61: #{_lambda_.31} parent=55 // pred_check
        %p450 = pneg %p200
      $region62: #{_lambda_.31} parent=55 // pred_check_branch
        %452 = sbr.rel (%p450) target = $region64
      $region63: #{_lambda_.31} parent=55 // pred_region
        %p453 = scmp.lt.s32.totalorder %s20, 1
        %s454 = scalar_select %p453, %s20, 1
        %s455 = smul.addr %s454, 2
        %s456 = smul.addr %s455, 8
        %s457 = scalar_lea.vmem %s7, %s456
      $region64: #{_lambda_.31} parent=55 // pred_fallthru
        _
    $region56: #{_lambda_.31} parent=5 // pred_fallthru
      _
  $region6: #{_lambda_.31} parent=0 // loop_footer
    %s18 = sadd.s32 1, %s14
  $region7: #{_lambda_.31} parent=0 // loop_footer_branch
    %13 = sbr.rel target = $region3
  $region8: #{_lambda_.31} parent=0 // loop_exit
    _

// kernel: _lambda_.32
$region0: #{_lambda_.32}
  #allocation0 [shape = 'u32[]', space=smem, size = 0x4, offset = 0x4, fixed_abs, tag = 'smem constant byte address 0x4 - core index']
  #allocation1 [shape = 'u32[72,128]{1,0:T(1,128)}', space=vmem, size = 0x9000, scoped, tag = 'internal scratch']
  %s0 = inlined_call_operand.vmem [shape: f32[2,16,32], index: 0, kind: input, shape index: {}]
  %s1 = inlined_call_operand.vmem [shape: bf16[3,32,32], index: 1, kind: input, shape index: {}]
  %s2 = inlined_call_operand.vmem [shape: f32[1,32], index: 2, kind: input, shape index: {}]
  %s3 = inlined_call_operand.vmem [shape: f32[2,16,32], index: 3, kind: output, shape index: {}]
  %s4 = sld [smem:[#allocation0]]
  $region45: #{_lambda_.32} parent=0
    _
  %s6 = ssub.s32 1, %s4
  %s7 = scalar_select 0, %s6, %s4
  loop: start=0, step=1, limit=4
  $region2: #{_lambda_.32} parent=0 // loop_pre_header
    _
  $region3: #{_lambda_.32} parent=0 // loop_header
    %s9 = sphi 0, %s13
    %p10 = scmp.ge.s32.totalorder %s9, 4
    %s19 = sphi 0, %s21
    %s22 = sphi 0, %s19
    %s23 = sphi 0, %s22
    %s39 = sphi 0, %s23
    %s43 = sphi 0, %s43
    %s45 = sphi 0, %s43
    %s46 = sphi 0, %s45
    %s60 = sphi 0, %s46
    %s64 = sphi 0, %s64
    %s66 = sphi 0, %s64
    %s67 = sphi 0, %s66
    %s81 = sphi 0, %s67
    %s87 = sphi 0, %s89
    %s90 = sphi 0, %s87
    %s91 = sphi 0, %s90
    %s107 = sphi 0, %s91
  $region4: #{_lambda_.32} parent=0 // loop_header_branch
    %12 = sbr.rel (%p10) target = $region8
  $region5: #{_lambda_.32} parent=0 // loop_body
    %s14 = ssub.s32 %s9, 1
    %s15 = ssub.s32 %s9, 2
    %s16 = sadd.s32 %s9, 1
    %s17 = ssub.s32 %s9, %s16
    %p18 = scmp.eq.s32.totalorder %s17, 0
    %s20 = sadd.s32 %s19, 1
    %s21 = scalar_select %p18, %s19, %s20
    %p24 = pneg %p18
    %p25 = scmp.eq.s32.totalorder %s9, 1
    %p26 = por %p24, %p25
    %p27 = scmp.ne.s32.totalorder %s19, %s22
    %p28 = scmp.eq.s32.totalorder %s9, 0
    %p29 = por %p27, %p28
    %p30 = scmp.ne.s32.totalorder %s19, %s22
    %p31 = scmp.eq.s32.totalorder %s14, 1
    %p32 = por %p30, %p31
    %p33 = scmp.ne.s32.totalorder %s22, %s23
    %p34 = scmp.eq.s32.totalorder %s14, 0
    %p35 = por %p33, %p34
    %p36 = scmp.ne.s32.totalorder %s22, %s23
    %p37 = scmp.eq.s32.totalorder %s15, 1
    %p38 = por %p36, %p37
    %p40 = scmp.ne.s32.totalorder %s23, %s39
    %p41 = scmp.eq.s32.totalorder %s15, 0
    %p42 = por %p40, %p41
    %s44 = sadd.s32 %s43, 1
    %p47 = scmp.eq.s32.totalorder %s9, 1
    %p48 = scmp.ne.s32.totalorder %s43, %s45
    %p49 = scmp.eq.s32.totalorder %s9, 0
    %p50 = por %p48, %p49
    %p51 = scmp.ne.s32.totalorder %s43, %s45
    %p52 = scmp.eq.s32.totalorder %s14, 1
    %p53 = por %p51, %p52
    %p54 = scmp.ne.s32.totalorder %s45, %s46
    %p55 = scmp.eq.s32.totalorder %s14, 0
    %p56 = por %p54, %p55
    %p57 = scmp.ne.s32.totalorder %s45, %s46
    %p58 = scmp.eq.s32.totalorder %s15, 1
    %p59 = por %p57, %p58
    %p61 = scmp.ne.s32.totalorder %s46, %s60
    %p62 = scmp.eq.s32.totalorder %s15, 0
    %p63 = por %p61, %p62
    %s65 = sadd.s32 %s64, 1
    %p68 = scmp.eq.s32.totalorder %s9, 1
    %p69 = scmp.ne.s32.totalorder %s64, %s66
    %p70 = scmp.eq.s32.totalorder %s9, 0
    %p71 = por %p69, %p70
    %p72 = scmp.ne.s32.totalorder %s64, %s66
    %p73 = scmp.eq.s32.totalorder %s14, 1
    %p74 = por %p72, %p73
    %p75 = scmp.ne.s32.totalorder %s66, %s67
    %p76 = scmp.eq.s32.totalorder %s14, 0
    %p77 = por %p75, %p76
    %p78 = scmp.ne.s32.totalorder %s66, %s67
    %p79 = scmp.eq.s32.totalorder %s15, 1
    %p80 = por %p78, %p79
    %p82 = scmp.ne.s32.totalorder %s67, %s81
    %p83 = scmp.eq.s32.totalorder %s15, 0
    %p84 = por %p82, %p83
    %s85 = ssub.s32 %s9, %s16
    %p86 = scmp.eq.s32.totalorder %s85, 0
    %s88 = sadd.s32 %s87, 1
    %s89 = scalar_select %p86, %s87, %s88
    %p92 = pneg %p86
    %p93 = scmp.eq.s32.totalorder %s9, 1
    %p94 = por %p92, %p93
    %p95 = scmp.ne.s32.totalorder %s87, %s90
    %p96 = scmp.eq.s32.totalorder %s9, 0
    %p97 = por %p95, %p96
    %p98 = scmp.ne.s32.totalorder %s87, %s90
    %p99 = scmp.eq.s32.totalorder %s14, 1
    %p100 = por %p98, %p99
    %p101 = scmp.ne.s32.totalorder %s90, %s91
    %p102 = scmp.eq.s32.totalorder %s14, 0
    %p103 = por %p101, %p102
    %p104 = scmp.ne.s32.totalorder %s90, %s91
    %p105 = scmp.eq.s32.totalorder %s15, 1
    %p106 = por %p104, %p105
    %p108 = scmp.ne.s32.totalorder %s91, %s107
    %p109 = scmp.eq.s32.totalorder %s15, 0
    %p110 = por %p108, %p109
    %p111 = scmp.le.s32.totalorder 1, %s9
    %p112 = scmp.lt.s32.totalorder %s9, 3
    %p113 = pnand %p111, %p112
    %p114 = pneg %p113
    // Predicated region
    $region9: #{_lambda_.32} parent=5 // pred_check
      _
    $region10: #{_lambda_.32} parent=5 // pred_check_branch
      %116 = sbr.rel (%p113) target = $region12
    $region11: #{_lambda_.32} parent=5 // pred_region
      %s117 = ssub.s32 %s9, 1
      // Predicated region
      $region13: #{_lambda_.32} parent=11 // pred_check
        %p118 = pneg %p56
      $region14: #{_lambda_.32} parent=11 // pred_check_branch
        %120 = sbr.rel (%p118) target = $region16
      $region15: #{_lambda_.32} parent=11 // pred_region
        _
      $region16: #{_lambda_.32} parent=11 // pred_fallthru
        _
      // Predicated region
      $region17: #{_lambda_.32} parent=11 // pred_check
        %p121 = pneg %p77
      $region18: #{_lambda_.32} parent=11 // pred_check_branch
        %123 = sbr.rel (%p121) target = $region20
      $region19: #{_lambda_.32} parent=11 // pred_region
        _
      $region20: #{_lambda_.32} parent=11 // pred_fallthru
        _
    $region12: #{_lambda_.32} parent=5 // pred_fallthru
      _
    %p124 = scmp.lt.s32.totalorder %s9, 2
    // Predicated region
    $region21: #{_lambda_.32} parent=5 // pred_check
      %p125 = pneg %p124
    $region22: #{_lambda_.32} parent=5 // pred_check_branch
      %127 = sbr.rel (%p125) target = $region24
    $region23: #{_lambda_.32} parent=5 // pred_region
      // Predicated region
      $region25: #{_lambda_.32} parent=23 // pred_check
        %p128 = pneg %p29
      $region26: #{_lambda_.32} parent=23 // pred_check_branch
        %130 = sbr.rel (%p128) target = $region28
      $region27: #{_lambda_.32} parent=23 // pred_region
        %p131 = scmp.lt.s32.totalorder %s9, 1
        %s132 = scalar_select %p131, %s9, 1
        %s133 = smul.addr %s132, 2
        %s134 = smul.addr %s133, 8
        %s135 = scalar_lea.vmem %s0, %s134
      $region28: #{_lambda_.32} parent=23 // pred_fallthru
        _
    $region24: #{_lambda_.32} parent=5 // pred_fallthru
      _
    %p136 = scmp.le.s32.totalorder 1, %s9
    %p137 = scmp.lt.s32.totalorder %s9, 3
    %p138 = pnand %p136, %p137
    %p139 = pneg %p138
    // Predicated region
    $region29: #{_lambda_.32} parent=5 // pred_check
      _
    $region30: #{_lambda_.32} parent=5 // pred_check_branch
      %141 = sbr.rel (%p138) target = $region32
    $region31: #{_lambda_.32} parent=5 // pred_region
      %s142 = ssub.s32 %s9, 1
      %p143 = scmp.lt.s32.totalorder %s14, 1
      %s144 = scalar_select %p143, %s14, 1
      %s145 = smul.addr %s144, 2
      %s146 = smul.addr %s145, 8
      %s147 = scalar_lea.vmem %s0, %s146
      %p148 = pneg %p35
      %p149 = pneg %p32
      %p150 = pneg %p56
      %p151 = pneg %p53
      %p152 = pneg %p77
      %p153 = pneg %p74
      %p154 = pneg %p103
      %p155 = pneg %p100
      %p156 = scmp.lt.s32.totalorder %s14, 1
      %s157 = scalar_select %p156, %s14, 1
      %s158 = smul.addr %s157, 2
      %s159 = smul.addr %s158, 8
      %s160 = scalar_lea.vmem %s3, %s159
      %p161 = scmp.lt.s32.totalorder %s14, 1
      %s162 = scalar_select %p161, %s14, 1
      %s163 = smul.addr %s162, 2
      %s164 = smul.addr %s163, 8
      %s165 = scalar_lea.vmem %s0, %s164
      %p166 = scmp.lt.s32.totalorder %s14, 1
      %s167 = scalar_select %p166, %s14, 1
      %s168 = smul.addr %s167, 2
      %s169 = smul.addr %s168, 8
      %s170 = scalar_lea.vmem %s3, %s169
      %v172 = vld [vmem:[%s165] sm:$0xff]
      %v173 = vld [vmem:[%s165 + $0x8] sm:$0xff]
      %v175 = vrot.slane %v173, 7
      %vm178 = vcmask 1040384
      %v179 = vrot.slane %v172, 7
      %v180 = vsel %vm178, %v179, %v175
      %v183 = vsel %vm178, %v175, %v179
      %v184 = vld [vmem:[%s1] sm:$0xf]
      %v185 = vld [vmem:[%s1 + $0x4] sm:$0xf]
      %v186 = vld [vmem:[%s1 + $0x8] sm:$0xf]
      %v187 = vld [vmem:[%s1 + $0xc] sm:$0xf]
      %v188 = vld [vmem:[%s1 + $0x10] sm:$0xf]
      %v189 = vld [vmem:[%s1 + $0x14] sm:$0xf]
      %v190 = vld [vmem:[%s1 + $0x18] sm:$0xf]
      %v191 = vld [vmem:[%s1 + $0x1c] sm:$0xf]
      %v192 = vld [vmem:[%s1 + $0x20] sm:$0xf]
      %v193 = vld [vmem:[%s1 + $0x24] sm:$0xf]
      %v194 = vld [vmem:[%s1 + $0x28] sm:$0xf]
      %v195 = vld [vmem:[%s1 + $0x2c] sm:$0xf]
      %v196 = vpack.c.bf16 %v180, %v183
      %v197 = vpack.c.bf16 %v183, %v183
      %vm198 = vsmask.f32 7424
      %v200 = vshrl.u32 %v196, 16
      %v202 = vshll.u32 %v196, 16
      %v204 = vrot.slane %v202, 1
      %v205 = vor.u32 %v200, %v204
      %v207 = vshll.u32 %v197, 16
      %v209 = vrot.slane %v207, 1
      %v210 = vsel %vm198, %v205, %v209
      %v215 = vunpack.c.l.b16 %v188
      %v216 = vunpack.c.l.b16 %v189
      %v217 = vunpack.c.l.b16 %v190
      %v218 = vunpack.c.l.b16 %v191
      %v219 = vpack.c.b16 %v216, %v215
      %v220 = vpack.c.b16 %v218, %v217
      %vm223 = vcmask 261120
      %v225 = vsel %vm223, %v210, 0
      %227 = vmatpush.bf16.msra.mxu0 0
      %228 = vmatpush.bf16.msra.mxu0 0
      %229 = vmatpush.bf16.msra.mxu0 0
      %230 = vmatpush.bf16.msra.mxu0 0
      %231 = vmatpush.bf16.msra.mxu0 0
      %232 = vmatpush.bf16.msra.mxu0 0
      %233 = vmatpush.bf16.msra.mxu0 %v220
      %234 = vmatpush.bf16.msra.mxu0 %v219
      %235 = vmatmul.bf16.gmra.mxu0 %v225
      %v236 = vpop.f32.mrf.mxu0
      %v237 = vadd.f32 0.0, %v236
      %v238 = vpop.f32.mrf.mxu0
      %v239 = vadd.f32 0.0, %v238
      %240 = vdwg.mxu0
      %v245 = vunpack.c.l.b16 %v184
      %v246 = vunpack.c.l.b16 %v185
      %v247 = vunpack.c.l.b16 %v186
      %v248 = vunpack.c.l.b16 %v187
      %v249 = vpack.c.b16 %v246, %v245
      %v250 = vpack.c.b16 %v248, %v247
      %v253 = vsel %vm223, %v196, 0
      %255 = vmatpush.bf16.msra.mxu0 0
      %256 = vmatpush.bf16.msra.mxu0 0
      %257 = vmatpush.bf16.msra.mxu0 0
      %258 = vmatpush.bf16.msra.mxu0 0
      %259 = vmatpush.bf16.msra.mxu0 0
      %260 = vmatpush.bf16.msra.mxu0 0
      %261 = vmatpush.bf16.msra.mxu0 %v250
      %262 = vmatpush.bf16.msra.mxu0 %v249
      %263 = vmatmul.bf16.gmra.mxu0 %v253
      %v264 = vpop.f32.mrf.mxu0
      %v265 = vadd.f32 %v237, %v264
      %v266 = vpop.f32.mrf.mxu0
      %v267 = vadd.f32 %v239, %v266
      %268 = vdwg.mxu0
      %vm271 = vcmask 1046528
      %v272 = vrot.slane %v196, 1
      %v273 = vrot.slane %v197, 1
      %v274 = vsel %vm271, %v272, %v273
      %v279 = vunpack.c.l.b16 %v192
      %v280 = vunpack.c.l.b16 %v193
      %v281 = vunpack.c.l.b16 %v194
      %v282 = vunpack.c.l.b16 %v195
      %v283 = vpack.c.b16 %v280, %v279
      %v284 = vpack.c.b16 %v282, %v281
      %v288 = vsel %vm223, %v274, 0
      %290 = vmatpush.bf16.msra.mxu0 0
      %291 = vmatpush.bf16.msra.mxu0 0
      %292 = vmatpush.bf16.msra.mxu0 0
      %293 = vmatpush.bf16.msra.mxu0 0
      %294 = vmatpush.bf16.msra.mxu0 0
      %295 = vmatpush.bf16.msra.mxu0 0
      %296 = vmatpush.bf16.msra.mxu0 %v284
      %297 = vmatpush.bf16.msra.mxu0 %v283
      %298 = vmatmul.bf16.gmra.mxu0 %v288
      %v299 = vpop.f32.mrf.mxu0
      %v300 = vadd.f32 0.0, %v299
      %v301 = vpop.f32.mrf.mxu0
      %v302 = vadd.f32 0.0, %v301
      %303 = vdwg.mxu0
      %v304 = vadd.f32 %v265, %v300
      %v305 = vadd.f32 %v267, %v302
      %v306 = vld [vmem:[%s2] sm:$0x1]
      %v308 = vperm.slane %v306, 0
      %v310 = vadd.f32 %v304, %v308
      %v311 = vadd.f32 %v305, %v308
      %312 = vst.msk [vmem:[%s170] sm:$0xff] %vm223, %v310
      %313 = vst.msk [vmem:[%s170 + $0x8] sm:$0xff] %vm223, %v311
      %p314 = scmp.lt.s32.totalorder %s14, 1
      %s315 = scalar_select %p314, %s14, 1
      %s316 = smul.addr %s315, 2
      %s317 = smul.addr %s316, 8
      %s318 = scalar_lea.vmem %s3, %s317
      // Predicated region
      $region33: #{_lambda_.32} parent=31 // pred_check
        %p319 = pneg %p100
      $region34: #{_lambda_.32} parent=31 // pred_check_branch
        %321 = sbr.rel (%p319) target = $region36
      $region35: #{_lambda_.32} parent=31 // pred_region
        _
      $region36: #{_lambda_.32} parent=31 // pred_fallthru
        _
    $region32: #{_lambda_.32} parent=5 // pred_fallthru
      _
    %p322 = scmp.le.s32.totalorder 2, %s9
    // Predicated region
    $region37: #{_lambda_.32} parent=5 // pred_check
      %p323 = pneg %p322
    $region38: #{_lambda_.32} parent=5 // pred_check_branch
      %325 = sbr.rel (%p323) target = $region40
    $region39: #{_lambda_.32} parent=5 // pred_region
      %s326 = ssub.s32 %s9, 2
      // Predicated region
      $region41: #{_lambda_.32} parent=39 // pred_check
        %p327 = pneg %p106
      $region42: #{_lambda_.32} parent=39 // pred_check_branch
        %329 = sbr.rel (%p327) target = $region44
      $region43: #{_lambda_.32} parent=39 // pred_region
        %p330 = scmp.lt.s32.totalorder %s15, 1
        %s331 = scalar_select %p330, %s15, 1
        %s332 = smul.addr %s331, 2
        %s333 = smul.addr %s332, 8
        %s334 = scalar_lea.vmem %s3, %s333
      $region44: #{_lambda_.32} parent=39 // pred_fallthru
        _
    $region40: #{_lambda_.32} parent=5 // pred_fallthru
      _
  $region6: #{_lambda_.32} parent=0 // loop_footer
    %s13 = sadd.s32 1, %s9
  $region7: #{_lambda_.32} parent=0 // loop_footer_branch
    %8 = sbr.rel target = $region3
  $region8: #{_lambda_.32} parent=0 // loop_exit
    _

</llo_original>
